<compile_context>
chip_gen: v7x
topology: tpu7x:2x2x1
jax: 0.10.0
libtpu: 0.0.40
codegen_flags: <defaults>
</compile_context>

<pallas_src>
import functools

import jax
import jax.numpy as jnp
from jax.experimental import pallas as pl
from jax.experimental.pallas import tpu as pltpu


def _round_up(v, m):
    return ((v + m - 1) // m) * m


# --------------------------------------------------------------------------
# Kernel
# --------------------------------------------------------------------------
def _autoencoder_kernel(starts_ref, ends_ref,            # scalar prefetch (SMEM)
                        x_ref,                           # (TB, D) f32
                        w1, b1, w2, b2, w3, b3,          # encoder params (bf16 / f32)
                        w4, b4, w5, b5, w6, b6,          # decoder params
                        y_ref):                          # (TB, D) f32 output
    def dense(h, w_ref, b_ref, activate):
        w = w_ref[...]                                   # bf16 weights
        out = jnp.dot(h.astype(w.dtype), w,
                      preferred_element_type=jnp.float32) + b_ref[...]
        return jnp.tanh(out) if activate else out

    h = x_ref[...].astype(jnp.float32)

    # encoder: Linear -> Tanh -> Linear -> Tanh -> Linear
    h = dense(h, w1, b1, True)
    h = dense(h, w2, b2, True)
    h = dense(h, w3, b3, False)          # bottleneck (zero-padded to 128 lanes)

    # decoder: Linear -> Tanh -> Linear -> Tanh -> Linear
    h = dense(h, w4, b4, True)
    h = dense(h, w5, b5, True)
    y = dense(h, w6, b6, False)          # (TB, D) f32 logits

    # Per-category softmax over column slices [start, end) of each row
    # (PyTorch dim=0 on a 1-D tensor == softmax over the slice elements).
    d = y.shape[1]
    col = jax.lax.broadcasted_iota(jnp.int32, (1, d), 1)
    n_seg = starts_ref.shape[0]          # static -> loop fully unrolled

    for i in range(n_seg):
        s = starts_ref[i]
        e = ends_ref[i]
        mask = (col >= s) & (col < e)                                  # (1, d)
        m = jnp.max(jnp.where(mask, y, -jnp.inf), axis=1, keepdims=True)
        m = jnp.maximum(m, jnp.float32(-1e30))                         # empty-segment guard
        ex = jnp.where(mask, jnp.exp(y - m), 0.0)                      # (TB, d)
        denom = jnp.sum(ex, axis=1, keepdims=True)                     # (TB, 1)
        denom = jnp.maximum(denom, jnp.float32(1e-30))                 # empty-segment guard
        y = jnp.where(mask, ex * pl.reciprocal(denom, approx=True), y)

    y_ref[...] = y.astype(y_ref.dtype)


# --------------------------------------------------------------------------
# Parameters (Xavier-uniform weights as torch.nn.init.xavier_uniform_, zero
# biases).  Weights are stored transposed relative to torch.nn.Linear, i.e.
# (in, out), in bfloat16, with hidden widths zero-padded to multiples of 128.
# --------------------------------------------------------------------------
def make_autoencoder_params(key, data_size, *, lane=128, weight_dtype=jnp.bfloat16):
    logical = [data_size, data_size // 2, data_size // 4, data_size // 32,
               data_size // 4, data_size // 2, data_size]
    padded = [logical[0]] + [_round_up(d, lane) for d in logical[1:6]] + [logical[6]]
    params = []
    for i in range(6):
        fi_l, fo_l = logical[i], logical[i + 1]
        fi_p, fo_p = padded[i], padded[i + 1]
        key, sub = jax.random.split(key)
        bound = (6.0 / (fi_l + fo_l)) ** 0.5
        w = jax.random.uniform(sub, (fi_l, fo_l), jnp.float32, -bound, bound)
        w = jnp.zeros((fi_p, fo_p), jnp.float32).at[:fi_l, :fo_l].set(w)
        b = jnp.zeros((1, fo_p), jnp.float32)
        params.append((w.astype(weight_dtype), b))
    return params


# --------------------------------------------------------------------------
# pallas_call wrapper
# --------------------------------------------------------------------------
@functools.partial(jax.jit, static_argnames=("batch_tile",))
def _forward_padded(x2, seg_starts, seg_ends, *flat_params, batch_tile):
    B, D = x2.shape
    assert B % batch_tile == 0
    grid = (B // batch_tile,)

    x_spec = pl.BlockSpec((batch_tile, D), lambda i, s, e: (i, 0))
    # Weights / biases: one full-shape block, same block every grid step ->
    # resident across the batch loop; only x / y tiles are pipelined.
    param_specs = [pl.BlockSpec(p.shape, lambda i, s, e: (0, 0)) for p in flat_params]
    out_spec = pl.BlockSpec((batch_tile, D), lambda i, s, e: (i, 0))

    return pl.pallas_call(
        _autoencoder_kernel,
        out_shape=jax.ShapeDtypeStruct((B, D), jnp.float32),
        grid_spec=pltpu.PrefetchScalarGridSpec(
            num_scalar_prefetch=2,
            grid=grid,
            in_specs=[x_spec] + param_specs,
            out_specs=out_spec,
        ),
        compiler_params=pltpu.CompilerParams(
            dimension_semantics=("parallel",),      # batch tiles are independent
            vmem_limit_bytes=48 * 1024 * 1024,
        ),
    )(seg_starts, seg_ends, x2, *flat_params)


def autoencoder_forward(x, seg_starts, seg_ends, flat_params, *, batch_tile=128):
    """x: (B, D) or (D,) float32.  seg_starts/seg_ends: (n_seg,) int32.

    Returns the same leading shape as x.  Rows are processed independently,
    matching the original module applied per row (B == 1 is the original)."""
    squeeze = (x.ndim == 1)
    x2 = x[None, :] if squeeze else x
    x2 = x2.astype(jnp.float32)
    B = x2.shape[0]
    pad = (-B) % batch_tile
    if pad:
        x2 = jnp.pad(x2, ((0, pad), (0, 0)))
    y = _forward_padded(x2, seg_starts, seg_ends, *flat_params,
                        batch_tile=batch_tile)
    y = y[:B]
    return y[0] if squeeze else y


# --------------------------------------------------------------------------
# Pure-JAX reference mirroring the PyTorch module (same bf16 weights,
# f32 accumulation, exact softmax).
# --------------------------------------------------------------------------
def _reference_forward(x, params, seg_starts, seg_ends):
    h = (x[None, :] if x.ndim == 1 else x).astype(jnp.float32)
    for i, (w, b) in enumerate(params):
        h = jnp.dot(h.astype(jnp.bfloat16), w,
                    preferred_element_type=jnp.float32) + b
        if i not in (2, 5):                # tanh after layers 0,1,3,4 only
            h = jnp.tanh(h)
    y = h
    for s, e in zip(list(seg_starts), list(seg_ends)):
        s, e = int(s), int(e)
        y = y.at[:, s:e].set(jax.nn.softmax(y[:, s:e], axis=1))
    return y[0] if x.ndim == 1 else y


if __name__ == "__main__":
    data_size = 256       # divisible by 32 (module uses data_size/32 bottleneck)
    batch = 256           # two 128-row tiles -> exercises the batched grid

    key = jax.random.PRNGKey(0)
    kx, kp = jax.random.split(key)
    x = jax.random.normal(kx, (batch, data_size), jnp.float32)
    params = make_autoencoder_params(kp, data_size)
    flat_params = [a for wb in params for a in wb]

    # Categorical ranges (start/end pairs) — analogue of
    # `input_vector_category_indices` in the PyTorch forward.
    seg_starts = jnp.array([0, 64, 128, 200], dtype=jnp.int32)
    seg_ends = jnp.array([64, 128, 200, 256], dtype=jnp.int32)

    # Batched path
    y = autoencoder_forward(x, seg_starts, seg_ends, flat_params)
    y = jax.block_until_ready(y)
    y_ref = _reference_forward(x, params, seg_starts, seg_ends)
    assert y.shape == (batch, data_size)
    assert jnp.allclose(y, y_ref, atol=5e-3, rtol=5e-3), "batched mismatch vs reference"

    # Original single-vector (1-D) call path
    y1 = autoencoder_forward(x[0], seg_starts, seg_ends, flat_params)
    y1 = jax.block_until_ready(y1)
    assert y1.shape == (data_size,)
    assert jnp.allclose(y1, y_ref[0], atol=5e-3, rtol=5e-3), "1-D mismatch vs reference"

    print("KERNEL_OK")
</pallas_src>

<mosaic_0001>
module attributes {stable_mosaic.version = 11 : i64} {
  func.func @_autoencoder_kernel(%arg0: i32, %arg1: memref<4xi32, #tpu.memory_space<smem>>, %arg2: memref<4xi32, #tpu.memory_space<smem>>, %arg3: memref<128x256xf32, #tpu.memory_space<vmem>>, %arg4: memref<256x128xbf16, #tpu.memory_space<vmem>>, %arg5: memref<1x128xf32, #tpu.memory_space<vmem>>, %arg6: memref<128x128xbf16, #tpu.memory_space<vmem>>, %arg7: memref<1x128xf32, #tpu.memory_space<vmem>>, %arg8: memref<128x128xbf16, #tpu.memory_space<vmem>>, %arg9: memref<1x128xf32, #tpu.memory_space<vmem>>, %arg10: memref<128x128xbf16, #tpu.memory_space<vmem>>, %arg11: memref<1x128xf32, #tpu.memory_space<vmem>>, %arg12: memref<128x128xbf16, #tpu.memory_space<vmem>>, %arg13: memref<1x128xf32, #tpu.memory_space<vmem>>, %arg14: memref<128x256xbf16, #tpu.memory_space<vmem>>, %arg15: memref<1x256xf32, #tpu.memory_space<vmem>>, %arg16: memref<128x256xf32, #tpu.memory_space<vmem>>) attributes {dimension_semantics = [#tpu.dimension_semantics<parallel>], iteration_bounds = array<i64: 2>, scalar_prefetch = 2 : i64, scratch_operands = 0 : i64, tpu.core_type = #tpu.core_type<tc>, window_params = [{transform_indices = @transform_0, window_bounds = array<i64: 128, 256>}, {pipeline_mode = #tpu.pipeline_mode<synchronous>, transform_indices = @transform_1, window_bounds = array<i64: 256, 128>}, {pipeline_mode = #tpu.pipeline_mode<synchronous>, transform_indices = @transform_2, window_bounds = array<i64: 1, 128>}, {pipeline_mode = #tpu.pipeline_mode<synchronous>, transform_indices = @transform_3, window_bounds = array<i64: 128, 128>}, {pipeline_mode = #tpu.pipeline_mode<synchronous>, transform_indices = @transform_4, window_bounds = array<i64: 1, 128>}, {pipeline_mode = #tpu.pipeline_mode<synchronous>, transform_indices = @transform_5, window_bounds = array<i64: 128, 128>}, {pipeline_mode = #tpu.pipeline_mode<synchronous>, transform_indices = @transform_6, window_bounds = array<i64: 1, 128>}, {pipeline_mode = #tpu.pipeline_mode<synchronous>, transform_indices = @transform_7, window_bounds = array<i64: 128, 128>}, {pipeline_mode = #tpu.pipeline_mode<synchronous>, transform_indices = @transform_8, window_bounds = array<i64: 1, 128>}, {pipeline_mode = #tpu.pipeline_mode<synchronous>, transform_indices = @transform_9, window_bounds = array<i64: 128, 128>}, {pipeline_mode = #tpu.pipeline_mode<synchronous>, transform_indices = @transform_10, window_bounds = array<i64: 1, 128>}, {pipeline_mode = #tpu.pipeline_mode<synchronous>, transform_indices = @transform_11, window_bounds = array<i64: 128, 256>}, {pipeline_mode = #tpu.pipeline_mode<synchronous>, transform_indices = @transform_12, window_bounds = array<i64: 1, 256>}, {transform_indices = @transform_13, window_bounds = array<i64: 128, 256>}]} {
    %c0 = arith.constant 0 : index
    %c0_0 = arith.constant 0 : index
    %0 = vector.load %arg3[%c0, %c0_0] : memref<128x256xf32, #tpu.memory_space<vmem>>, vector<128x256xf32>
    %c0_1 = arith.constant 0 : index
    %c0_2 = arith.constant 0 : index
    %1 = vector.load %arg4[%c0_1, %c0_2] : memref<256x128xbf16, #tpu.memory_space<vmem>>, vector<256x128xbf16>
    %2 = arith.truncf %0 : vector<128x256xf32> to vector<128x256xbf16>
    %cst = arith.constant dense<0.000000e+00> : vector<128x128xf32>
    %3 = tpu.matmul %2, %1, %cst {dimension_numbers = #tpu.dot_dimension_numbers<[1], [0], [0], [1], [0, 0, 1, 1], [], []>} : vector<128x256xbf16>, vector<256x128xbf16>, vector<128x128xf32> -> vector<128x128xf32>
    %c0_3 = arith.constant 0 : index
    %c0_4 = arith.constant 0 : index
    %4 = vector.load %arg5[%c0_3, %c0_4] : memref<1x128xf32, #tpu.memory_space<vmem>>, vector<1x128xf32>
    %5 = vector.broadcast %4 : vector<1x128xf32> to vector<128x128xf32>
    %6 = arith.addf %3, %5 : vector<128x128xf32>
    %7 = math.tanh %6 : vector<128x128xf32>
    %c0_5 = arith.constant 0 : index
    %c0_6 = arith.constant 0 : index
    %8 = vector.load %arg6[%c0_5, %c0_6] : memref<128x128xbf16, #tpu.memory_space<vmem>>, vector<128x128xbf16>
    %9 = arith.truncf %7 : vector<128x128xf32> to vector<128x128xbf16>
    %cst_7 = arith.constant dense<0.000000e+00> : vector<128x128xf32>
    %10 = tpu.matmul %9, %8, %cst_7 {dimension_numbers = #tpu.dot_dimension_numbers<[1], [0], [0], [1], [0, 0, 1, 1], [], []>} : vector<128x128xbf16>, vector<128x128xbf16>, vector<128x128xf32> -> vector<128x128xf32>
    %c0_8 = arith.constant 0 : index
    %c0_9 = arith.constant 0 : index
    %11 = vector.load %arg7[%c0_8, %c0_9] : memref<1x128xf32, #tpu.memory_space<vmem>>, vector<1x128xf32>
    %12 = vector.broadcast %11 : vector<1x128xf32> to vector<128x128xf32>
    %13 = arith.addf %10, %12 : vector<128x128xf32>
    %14 = math.tanh %13 : vector<128x128xf32>
    %c0_10 = arith.constant 0 : index
    %c0_11 = arith.constant 0 : index
    %15 = vector.load %arg8[%c0_10, %c0_11] : memref<128x128xbf16, #tpu.memory_space<vmem>>, vector<128x128xbf16>
    %16 = arith.truncf %14 : vector<128x128xf32> to vector<128x128xbf16>
    %cst_12 = arith.constant dense<0.000000e+00> : vector<128x128xf32>
    %17 = tpu.matmul %16, %15, %cst_12 {dimension_numbers = #tpu.dot_dimension_numbers<[1], [0], [0], [1], [0, 0, 1, 1], [], []>} : vector<128x128xbf16>, vector<128x128xbf16>, vector<128x128xf32> -> vector<128x128xf32>
    %c0_13 = arith.constant 0 : index
    %c0_14 = arith.constant 0 : index
    %18 = vector.load %arg9[%c0_13, %c0_14] : memref<1x128xf32, #tpu.memory_space<vmem>>, vector<1x128xf32>
    %19 = vector.broadcast %18 : vector<1x128xf32> to vector<128x128xf32>
    %20 = arith.addf %17, %19 : vector<128x128xf32>
    %c0_15 = arith.constant 0 : index
    %c0_16 = arith.constant 0 : index
    %21 = vector.load %arg10[%c0_15, %c0_16] : memref<128x128xbf16, #tpu.memory_space<vmem>>, vector<128x128xbf16>
    %22 = arith.truncf %20 : vector<128x128xf32> to vector<128x128xbf16>
    %cst_17 = arith.constant dense<0.000000e+00> : vector<128x128xf32>
    %23 = tpu.matmul %22, %21, %cst_17 {dimension_numbers = #tpu.dot_dimension_numbers<[1], [0], [0], [1], [0, 0, 1, 1], [], []>} : vector<128x128xbf16>, vector<128x128xbf16>, vector<128x128xf32> -> vector<128x128xf32>
    %c0_18 = arith.constant 0 : index
    %c0_19 = arith.constant 0 : index
    %24 = vector.load %arg11[%c0_18, %c0_19] : memref<1x128xf32, #tpu.memory_space<vmem>>, vector<1x128xf32>
    %25 = vector.broadcast %24 : vector<1x128xf32> to vector<128x128xf32>
    %26 = arith.addf %23, %25 : vector<128x128xf32>
    %27 = math.tanh %26 : vector<128x128xf32>
    %c0_20 = arith.constant 0 : index
    %c0_21 = arith.constant 0 : index
    %28 = vector.load %arg12[%c0_20, %c0_21] : memref<128x128xbf16, #tpu.memory_space<vmem>>, vector<128x128xbf16>
    %29 = arith.truncf %27 : vector<128x128xf32> to vector<128x128xbf16>
    %cst_22 = arith.constant dense<0.000000e+00> : vector<128x128xf32>
    %30 = tpu.matmul %29, %28, %cst_22 {dimension_numbers = #tpu.dot_dimension_numbers<[1], [0], [0], [1], [0, 0, 1, 1], [], []>} : vector<128x128xbf16>, vector<128x128xbf16>, vector<128x128xf32> -> vector<128x128xf32>
    %c0_23 = arith.constant 0 : index
    %c0_24 = arith.constant 0 : index
    %31 = vector.load %arg13[%c0_23, %c0_24] : memref<1x128xf32, #tpu.memory_space<vmem>>, vector<1x128xf32>
    %32 = vector.broadcast %31 : vector<1x128xf32> to vector<128x128xf32>
    %33 = arith.addf %30, %32 : vector<128x128xf32>
    %34 = math.tanh %33 : vector<128x128xf32>
    %c0_25 = arith.constant 0 : index
    %c0_26 = arith.constant 0 : index
    %35 = vector.load %arg14[%c0_25, %c0_26] : memref<128x256xbf16, #tpu.memory_space<vmem>>, vector<128x256xbf16>
    %36 = arith.truncf %34 : vector<128x128xf32> to vector<128x128xbf16>
    %cst_27 = arith.constant dense<0.000000e+00> : vector<128x256xf32>
    %37 = tpu.matmul %36, %35, %cst_27 {dimension_numbers = #tpu.dot_dimension_numbers<[1], [0], [0], [1], [0, 0, 1, 1], [], []>} : vector<128x128xbf16>, vector<128x256xbf16>, vector<128x256xf32> -> vector<128x256xf32>
    %c0_28 = arith.constant 0 : index
    %c0_29 = arith.constant 0 : index
    %38 = vector.load %arg15[%c0_28, %c0_29] : memref<1x256xf32, #tpu.memory_space<vmem>>, vector<1x256xf32>
    %39 = vector.broadcast %38 : vector<1x256xf32> to vector<128x256xf32>
    %40 = arith.addf %37, %39 : vector<128x256xf32>
    %41 = tpu.iota {dimensions = array<i32: 1>} : vector<1x256xi32>
    %c0_30 = arith.constant 0 : index
    %42 = memref.load %arg1[%c0_30] : memref<4xi32, #tpu.memory_space<smem>>
    %c0_31 = arith.constant 0 : index
    %43 = memref.load %arg2[%c0_31] : memref<4xi32, #tpu.memory_space<smem>>
    %44 = vector.broadcast %42 : i32 to vector<1x256xi32>
    %45 = arith.cmpi sge, %41, %44 : vector<1x256xi32>
    %46 = vector.broadcast %43 : i32 to vector<1x256xi32>
    %47 = arith.cmpi slt, %41, %46 : vector<1x256xi32>
    %48 = arith.andi %45, %47 : vector<1x256xi1>
    %cst_32 = arith.constant 0xFF800000 : f32
    %49 = vector.shape_cast %48 : vector<1x256xi1> to vector<1x256xi1>
    %50 = vector.broadcast %49 : vector<1x256xi1> to vector<128x256xi1>
    %51 = vector.broadcast %cst_32 : f32 to vector<128x256xf32>
    %52 = arith.select %50, %40, %51 : vector<128x256xi1>, vector<128x256xf32>
    %cst_33 = arith.constant dense<0xFF800000> : vector<128xf32>
    %53 = vector.multi_reduction <maximumf>, %52, %cst_33 [1] : vector<128x256xf32> to vector<128xf32>
    %54 = vector.shape_cast %53 : vector<128xf32> to vector<128x1xf32>
    %cst_34 = arith.constant -1.000000e+30 : f32
    %55 = vector.broadcast %cst_34 : f32 to vector<128x1xf32>
    %56 = arith.maximumf %54, %55 : vector<128x1xf32>
    %57 = vector.broadcast %56 : vector<128x1xf32> to vector<128x256xf32>
    %58 = arith.subf %40, %57 : vector<128x256xf32>
    %59 = math.exp %58 : vector<128x256xf32>
    %cst_35 = arith.constant 0.000000e+00 : f32
    %60 = vector.shape_cast %48 : vector<1x256xi1> to vector<1x256xi1>
    %61 = vector.broadcast %60 : vector<1x256xi1> to vector<128x256xi1>
    %62 = vector.broadcast %cst_35 : f32 to vector<128x256xf32>
    %63 = arith.select %61, %59, %62 : vector<128x256xi1>, vector<128x256xf32>
    %cst_36 = arith.constant dense<0.000000e+00> : vector<128xf32>
    %64 = vector.multi_reduction <add>, %63, %cst_36 [1] : vector<128x256xf32> to vector<128xf32>
    %65 = vector.shape_cast %64 : vector<128xf32> to vector<128x1xf32>
    %cst_37 = arith.constant 1.000000e-30 : f32
    %66 = vector.broadcast %cst_37 : f32 to vector<128x1xf32>
    %67 = arith.maximumf %65, %66 : vector<128x1xf32>
    %68 = tpu.reciprocal %67 {approx = true} : vector<128x1xf32> -> vector<128x1xf32>
    %69 = vector.broadcast %68 : vector<128x1xf32> to vector<128x256xf32>
    %70 = arith.mulf %63, %69 : vector<128x256xf32>
    %71 = vector.shape_cast %48 : vector<1x256xi1> to vector<1x256xi1>
    %72 = vector.broadcast %71 : vector<1x256xi1> to vector<128x256xi1>
    %73 = arith.select %72, %70, %40 : vector<128x256xi1>, vector<128x256xf32>
    %c1 = arith.constant 1 : index
    %74 = memref.load %arg1[%c1] : memref<4xi32, #tpu.memory_space<smem>>
    %c1_38 = arith.constant 1 : index
    %75 = memref.load %arg2[%c1_38] : memref<4xi32, #tpu.memory_space<smem>>
    %76 = vector.broadcast %74 : i32 to vector<1x256xi32>
    %77 = arith.cmpi sge, %41, %76 : vector<1x256xi32>
    %78 = vector.broadcast %75 : i32 to vector<1x256xi32>
    %79 = arith.cmpi slt, %41, %78 : vector<1x256xi32>
    %80 = arith.andi %77, %79 : vector<1x256xi1>
    %cst_39 = arith.constant 0xFF800000 : f32
    %81 = vector.shape_cast %80 : vector<1x256xi1> to vector<1x256xi1>
    %82 = vector.broadcast %81 : vector<1x256xi1> to vector<128x256xi1>
    %83 = vector.broadcast %cst_39 : f32 to vector<128x256xf32>
    %84 = arith.select %82, %73, %83 : vector<128x256xi1>, vector<128x256xf32>
    %cst_40 = arith.constant dense<0xFF800000> : vector<128xf32>
    %85 = vector.multi_reduction <maximumf>, %84, %cst_40 [1] : vector<128x256xf32> to vector<128xf32>
    %86 = vector.shape_cast %85 : vector<128xf32> to vector<128x1xf32>
    %cst_41 = arith.constant -1.000000e+30 : f32
    %87 = vector.broadcast %cst_41 : f32 to vector<128x1xf32>
    %88 = arith.maximumf %86, %87 : vector<128x1xf32>
    %89 = vector.broadcast %88 : vector<128x1xf32> to vector<128x256xf32>
    %90 = arith.subf %73, %89 : vector<128x256xf32>
    %91 = math.exp %90 : vector<128x256xf32>
    %cst_42 = arith.constant 0.000000e+00 : f32
    %92 = vector.shape_cast %80 : vector<1x256xi1> to vector<1x256xi1>
    %93 = vector.broadcast %92 : vector<1x256xi1> to vector<128x256xi1>
    %94 = vector.broadcast %cst_42 : f32 to vector<128x256xf32>
    %95 = arith.select %93, %91, %94 : vector<128x256xi1>, vector<128x256xf32>
    %cst_43 = arith.constant dense<0.000000e+00> : vector<128xf32>
    %96 = vector.multi_reduction <add>, %95, %cst_43 [1] : vector<128x256xf32> to vector<128xf32>
    %97 = vector.shape_cast %96 : vector<128xf32> to vector<128x1xf32>
    %cst_44 = arith.constant 1.000000e-30 : f32
    %98 = vector.broadcast %cst_44 : f32 to vector<128x1xf32>
    %99 = arith.maximumf %97, %98 : vector<128x1xf32>
    %100 = tpu.reciprocal %99 {approx = true} : vector<128x1xf32> -> vector<128x1xf32>
    %101 = vector.broadcast %100 : vector<128x1xf32> to vector<128x256xf32>
    %102 = arith.mulf %95, %101 : vector<128x256xf32>
    %103 = vector.shape_cast %80 : vector<1x256xi1> to vector<1x256xi1>
    %104 = vector.broadcast %103 : vector<1x256xi1> to vector<128x256xi1>
    %105 = arith.select %104, %102, %73 : vector<128x256xi1>, vector<128x256xf32>
    %c2 = arith.constant 2 : index
    %106 = memref.load %arg1[%c2] : memref<4xi32, #tpu.memory_space<smem>>
    %c2_45 = arith.constant 2 : index
    %107 = memref.load %arg2[%c2_45] : memref<4xi32, #tpu.memory_space<smem>>
    %108 = vector.broadcast %106 : i32 to vector<1x256xi32>
    %109 = arith.cmpi sge, %41, %108 : vector<1x256xi32>
    %110 = vector.broadcast %107 : i32 to vector<1x256xi32>
    %111 = arith.cmpi slt, %41, %110 : vector<1x256xi32>
    %112 = arith.andi %109, %111 : vector<1x256xi1>
    %cst_46 = arith.constant 0xFF800000 : f32
    %113 = vector.shape_cast %112 : vector<1x256xi1> to vector<1x256xi1>
    %114 = vector.broadcast %113 : vector<1x256xi1> to vector<128x256xi1>
    %115 = vector.broadcast %cst_46 : f32 to vector<128x256xf32>
    %116 = arith.select %114, %105, %115 : vector<128x256xi1>, vector<128x256xf32>
    %cst_47 = arith.constant dense<0xFF800000> : vector<128xf32>
    %117 = vector.multi_reduction <maximumf>, %116, %cst_47 [1] : vector<128x256xf32> to vector<128xf32>
    %118 = vector.shape_cast %117 : vector<128xf32> to vector<128x1xf32>
    %cst_48 = arith.constant -1.000000e+30 : f32
    %119 = vector.broadcast %cst_48 : f32 to vector<128x1xf32>
    %120 = arith.maximumf %118, %119 : vector<128x1xf32>
    %121 = vector.broadcast %120 : vector<128x1xf32> to vector<128x256xf32>
    %122 = arith.subf %105, %121 : vector<128x256xf32>
    %123 = math.exp %122 : vector<128x256xf32>
    %cst_49 = arith.constant 0.000000e+00 : f32
    %124 = vector.shape_cast %112 : vector<1x256xi1> to vector<1x256xi1>
    %125 = vector.broadcast %124 : vector<1x256xi1> to vector<128x256xi1>
    %126 = vector.broadcast %cst_49 : f32 to vector<128x256xf32>
    %127 = arith.select %125, %123, %126 : vector<128x256xi1>, vector<128x256xf32>
    %cst_50 = arith.constant dense<0.000000e+00> : vector<128xf32>
    %128 = vector.multi_reduction <add>, %127, %cst_50 [1] : vector<128x256xf32> to vector<128xf32>
    %129 = vector.shape_cast %128 : vector<128xf32> to vector<128x1xf32>
    %cst_51 = arith.constant 1.000000e-30 : f32
    %130 = vector.broadcast %cst_51 : f32 to vector<128x1xf32>
    %131 = arith.maximumf %129, %130 : vector<128x1xf32>
    %132 = tpu.reciprocal %131 {approx = true} : vector<128x1xf32> -> vector<128x1xf32>
    %133 = vector.broadcast %132 : vector<128x1xf32> to vector<128x256xf32>
    %134 = arith.mulf %127, %133 : vector<128x256xf32>
    %135 = vector.shape_cast %112 : vector<1x256xi1> to vector<1x256xi1>
    %136 = vector.broadcast %135 : vector<1x256xi1> to vector<128x256xi1>
    %137 = arith.select %136, %134, %105 : vector<128x256xi1>, vector<128x256xf32>
    %c3 = arith.constant 3 : index
    %138 = memref.load %arg1[%c3] : memref<4xi32, #tpu.memory_space<smem>>
    %c3_52 = arith.constant 3 : index
    %139 = memref.load %arg2[%c3_52] : memref<4xi32, #tpu.memory_space<smem>>
    %140 = vector.broadcast %138 : i32 to vector<1x256xi32>
    %141 = arith.cmpi sge, %41, %140 : vector<1x256xi32>
    %142 = vector.broadcast %139 : i32 to vector<1x256xi32>
    %143 = arith.cmpi slt, %41, %142 : vector<1x256xi32>
    %144 = arith.andi %141, %143 : vector<1x256xi1>
    %cst_53 = arith.constant 0xFF800000 : f32
    %145 = vector.shape_cast %144 : vector<1x256xi1> to vector<1x256xi1>
    %146 = vector.broadcast %145 : vector<1x256xi1> to vector<128x256xi1>
    %147 = vector.broadcast %cst_53 : f32 to vector<128x256xf32>
    %148 = arith.select %146, %137, %147 : vector<128x256xi1>, vector<128x256xf32>
    %cst_54 = arith.constant dense<0xFF800000> : vector<128xf32>
    %149 = vector.multi_reduction <maximumf>, %148, %cst_54 [1] : vector<128x256xf32> to vector<128xf32>
    %150 = vector.shape_cast %149 : vector<128xf32> to vector<128x1xf32>
    %cst_55 = arith.constant -1.000000e+30 : f32
    %151 = vector.broadcast %cst_55 : f32 to vector<128x1xf32>
    %152 = arith.maximumf %150, %151 : vector<128x1xf32>
    %153 = vector.broadcast %152 : vector<128x1xf32> to vector<128x256xf32>
    %154 = arith.subf %137, %153 : vector<128x256xf32>
    %155 = math.exp %154 : vector<128x256xf32>
    %cst_56 = arith.constant 0.000000e+00 : f32
    %156 = vector.shape_cast %144 : vector<1x256xi1> to vector<1x256xi1>
    %157 = vector.broadcast %156 : vector<1x256xi1> to vector<128x256xi1>
    %158 = vector.broadcast %cst_56 : f32 to vector<128x256xf32>
    %159 = arith.select %157, %155, %158 : vector<128x256xi1>, vector<128x256xf32>
    %cst_57 = arith.constant dense<0.000000e+00> : vector<128xf32>
    %160 = vector.multi_reduction <add>, %159, %cst_57 [1] : vector<128x256xf32> to vector<128xf32>
    %161 = vector.shape_cast %160 : vector<128xf32> to vector<128x1xf32>
    %cst_58 = arith.constant 1.000000e-30 : f32
    %162 = vector.broadcast %cst_58 : f32 to vector<128x1xf32>
    %163 = arith.maximumf %161, %162 : vector<128x1xf32>
    %164 = tpu.reciprocal %163 {approx = true} : vector<128x1xf32> -> vector<128x1xf32>
    %165 = vector.broadcast %164 : vector<128x1xf32> to vector<128x256xf32>
    %166 = arith.mulf %159, %165 : vector<128x256xf32>
    %167 = vector.shape_cast %144 : vector<1x256xi1> to vector<1x256xi1>
    %168 = vector.broadcast %167 : vector<1x256xi1> to vector<128x256xi1>
    %169 = arith.select %168, %166, %137 : vector<128x256xi1>, vector<128x256xf32>
    %c0_59 = arith.constant 0 : index
    %c0_60 = arith.constant 0 : index
    %170 = vector.load %arg16[%c0_59, %c0_60] : memref<128x256xf32, #tpu.memory_space<vmem>>, vector<128x256xf32>
    tpu.vector_store %arg16[%c0_59, %c0_60], %169 {strides = array<i32>} : memref<128x256xf32, #tpu.memory_space<vmem>>, vector<128x256xf32>,
    return
  }
  func.func @transform_0(%arg0: i32, %arg1: memref<4xi32, #tpu.memory_space<smem>>, %arg2: memref<4xi32, #tpu.memory_space<smem>>) -> (i32, i32) {
    %c0_i32 = arith.constant 0 : i32
    %c0_i32_0 = arith.constant 0 : i32
    return %arg0, %c0_i32 : i32, i32
  }
  func.func @transform_1(%arg0: i32, %arg1: memref<4xi32, #tpu.memory_space<smem>>, %arg2: memref<4xi32, #tpu.memory_space<smem>>) -> (i32, i32) {
    %c0_i32 = arith.constant 0 : i32
    %c0_i32_0 = arith.constant 0 : i32
    %c0_i32_1 = arith.constant 0 : i32
    return %c0_i32, %c0_i32_0 : i32, i32
  }
  func.func @transform_2(%arg0: i32, %arg1: memref<4xi32, #tpu.memory_space<smem>>, %arg2: memref<4xi32, #tpu.memory_space<smem>>) -> (i32, i32) {
    %c0_i32 = arith.constant 0 : i32
    %c0_i32_0 = arith.constant 0 : i32
    %c0_i32_1 = arith.constant 0 : i32
    return %c0_i32, %c0_i32_0 : i32, i32
  }
  func.func @transform_3(%arg0: i32, %arg1: memref<4xi32, #tpu.memory_space<smem>>, %arg2: memref<4xi32, #tpu.memory_space<smem>>) -> (i32, i32) {
    %c0_i32 = arith.constant 0 : i32
    %c0_i32_0 = arith.constant 0 : i32
    %c0_i32_1 = arith.constant 0 : i32
    return %c0_i32, %c0_i32_0 : i32, i32
  }
  func.func @transform_4(%arg0: i32, %arg1: memref<4xi32, #tpu.memory_space<smem>>, %arg2: memref<4xi32, #tpu.memory_space<smem>>) -> (i32, i32) {
    %c0_i32 = arith.constant 0 : i32
    %c0_i32_0 = arith.constant 0 : i32
    %c0_i32_1 = arith.constant 0 : i32
    return %c0_i32, %c0_i32_0 : i32, i32
  }
  func.func @transform_5(%arg0: i32, %arg1: memref<4xi32, #tpu.memory_space<smem>>, %arg2: memref<4xi32, #tpu.memory_space<smem>>) -> (i32, i32) {
    %c0_i32 = arith.constant 0 : i32
    %c0_i32_0 = arith.constant 0 : i32
    %c0_i32_1 = arith.constant 0 : i32
    return %c0_i32, %c0_i32_0 : i32, i32
  }
  func.func @transform_6(%arg0: i32, %arg1: memref<4xi32, #tpu.memory_space<smem>>, %arg2: memref<4xi32, #tpu.memory_space<smem>>) -> (i32, i32) {
    %c0_i32 = arith.constant 0 : i32
    %c0_i32_0 = arith.constant 0 : i32
    %c0_i32_1 = arith.constant 0 : i32
    return %c0_i32, %c0_i32_0 : i32, i32
  }
  func.func @transform_7(%arg0: i32, %arg1: memref<4xi32, #tpu.memory_space<smem>>, %arg2: memref<4xi32, #tpu.memory_space<smem>>) -> (i32, i32) {
    %c0_i32 = arith.constant 0 : i32
    %c0_i32_0 = arith.constant 0 : i32
    %c0_i32_1 = arith.constant 0 : i32
    return %c0_i32, %c0_i32_0 : i32, i32
  }
  func.func @transform_8(%arg0: i32, %arg1: memref<4xi32, #tpu.memory_space<smem>>, %arg2: memref<4xi32, #tpu.memory_space<smem>>) -> (i32, i32) {
    %c0_i32 = arith.constant 0 : i32
    %c0_i32_0 = arith.constant 0 : i32
    %c0_i32_1 = arith.constant 0 : i32
    return %c0_i32, %c0_i32_0 : i32, i32
  }
  func.func @transform_9(%arg0: i32, %arg1: memref<4xi32, #tpu.memory_space<smem>>, %arg2: memref<4xi32, #tpu.memory_space<smem>>) -> (i32, i32) {
    %c0_i32 = arith.constant 0 : i32
    %c0_i32_0 = arith.constant 0 : i32
    %c0_i32_1 = arith.constant 0 : i32
    return %c0_i32, %c0_i32_0 : i32, i32
  }
  func.func @transform_10(%arg0: i32, %arg1: memref<4xi32, #tpu.memory_space<smem>>, %arg2: memref<4xi32, #tpu.memory_space<smem>>) -> (i32, i32) {
    %c0_i32 = arith.constant 0 : i32
    %c0_i32_0 = arith.constant 0 : i32
    %c0_i32_1 = arith.constant 0 : i32
    return %c0_i32, %c0_i32_0 : i32, i32
  }
  func.func @transform_11(%arg0: i32, %arg1: memref<4xi32, #tpu.memory_space<smem>>, %arg2: memref<4xi32, #tpu.memory_space<smem>>) -> (i32, i32) {
    %c0_i32 = arith.constant 0 : i32
    %c0_i32_0 = arith.constant 0 : i32
    %c0_i32_1 = arith.constant 0 : i32
    return %c0_i32, %c0_i32_0 : i32, i32
  }
  func.func @transform_12(%arg0: i32, %arg1: memref<4xi32, #tpu.memory_space<smem>>, %arg2: memref<4xi32, #tpu.memory_space<smem>>) -> (i32, i32) {
    %c0_i32 = arith.constant 0 : i32
    %c0_i32_0 = arith.constant 0 : i32
    %c0_i32_1 = arith.constant 0 : i32
    return %c0_i32, %c0_i32_0 : i32, i32
  }
  func.func @transform_13(%arg0: i32, %arg1: memref<4xi32, #tpu.memory_space<smem>>, %arg2: memref<4xi32, #tpu.memory_space<smem>>) -> (i32, i32) {
    %c0_i32 = arith.constant 0 : i32
    %c0_i32_0 = arith.constant 0 : i32
    return %arg0, %c0_i32 : i32, i32
  }
}

</mosaic_0001>

<llo_original>
// kernel: _forward_padded.1
$region0: #{_forward_padded.1}
  #allocation0 [shape = 'u32[]', space=smem, size = 0x4, offset = 0x4, fixed_abs, tag = 'smem constant byte address 0x4 - core index']
  #allocation1 [shape = 'u32[144,128]{1,0:T(1,128)}', space=vmem, size = 0x12000, scoped, tag = 'internal scratch']
  #allocation2 [shape = 's32[1]{0}', space=sflag, size = 0x4, scoped, tag = 'scoped memory for _forward_padded.1']
  #allocation3 [shape = 'u8[512]{0}', space=smem, size = 0x200, scoped, tag = 'prefetched SMEM operand 0']
  #allocation4 [shape = 'u8[512]{0}', space=smem, size = 0x200, scoped, tag = 'prefetched SMEM operand 1']
  %s0 = inlined_call_operand.vmem [shape: s32[4], index: 0, kind: input, shape index: {}]
  %s1 = inlined_call_operand.vmem [shape: s32[4], index: 1, kind: input, shape index: {}]
  %s2 = inlined_call_operand.hbm [shape: f32[256,256], index: 2, kind: input, shape index: {}]
  %s3 = inlined_call_operand.hbm [shape: bf16[256,128], index: 3, kind: input, shape index: {}]
  %s4 = inlined_call_operand.vmem [shape: f32[1,128], index: 4, kind: input, shape index: {}]
  %s5 = inlined_call_operand.hbm [shape: bf16[128,128], index: 5, kind: input, shape index: {}]
  %s6 = inlined_call_operand.vmem [shape: f32[1,128], index: 6, kind: input, shape index: {}]
  %s7 = inlined_call_operand.hbm [shape: bf16[128,128], index: 7, kind: input, shape index: {}]
  %s8 = inlined_call_operand.vmem [shape: f32[1,128], index: 8, kind: input, shape index: {}]
  %s9 = inlined_call_operand.hbm [shape: bf16[128,128], index: 9, kind: input, shape index: {}]
  %s10 = inlined_call_operand.vmem [shape: f32[1,128], index: 10, kind: input, shape index: {}]
  %s11 = inlined_call_operand.hbm [shape: bf16[128,128], index: 11, kind: input, shape index: {}]
  %s12 = inlined_call_operand.vmem [shape: f32[1,128], index: 12, kind: input, shape index: {}]
  %s13 = inlined_call_operand.hbm [shape: bf16[128,256], index: 13, kind: input, shape index: {}]
  %s14 = inlined_call_operand.vmem [shape: f32[1,256], index: 14, kind: input, shape index: {}]
  %s15 = inlined_call_operand.hbm [shape: f32[256,256], index: 15, kind: output, shape index: {}]
  %s16 = sld [smem:[#allocation0]]
  $region113: #{_forward_padded.1} parent=0
    _
  %s18 = ssub.s32 1, %s16
  %s19 = scalar_select 0, %s18, %s16
  %s20 = sshll.u32 %s0, 4
  %s21 = int_to_ptr.vmem [resolvable:$true] %s20
  %23 = dma.vmem_to_smem %s21, 16, [#allocation3], [#allocation2]
  %s24 = sshll.u32 %s1, 4
  %s25 = int_to_ptr.vmem [resolvable:$true] %s24
  %27 = dma.vmem_to_smem %s25, 16, [#allocation4], [#allocation2]
  %28 = dma.done [#allocation2], 32
  %29 = sfence
  $region1: #{_forward_padded.1} parent=0
    #allocation5 [shape = 'u8[262144]{0}', space=vmem, size = 0x40000, scoped, tag = 'input window, operand 2']
    #allocation6 [shape = 's32[2]{0}', space=sflag, size = 0x8, scoped, tag = 'scoped memory for _forward_padded.1']
    #allocation7 [shape = 's32[2]{0}', space=sflag, size = 0x8, scoped, tag = 'scoped memory for _forward_padded.1']
    #allocation8 [shape = 'u8[65536]{0}', space=vmem, size = 0x10000, scoped, tag = 'input window, operand 3, single buffered']
    #allocation9 [shape = 's32[1]{0}', space=sflag, size = 0x4, scoped, tag = 'scoped memory for _forward_padded.1']
    #allocation10 [shape = 'u8[32768]{0}', space=vmem, size = 0x8000, scoped, tag = 'input window, operand 5, single buffered']
    #allocation11 [shape = 'u8[32768]{0}', space=vmem, size = 0x8000, scoped, tag = 'input window, operand 7, single buffered']
    #allocation12 [shape = 's32[1]{0}', space=sflag, size = 0x4, scoped, tag = 'scoped memory for _forward_padded.1']
    #allocation13 [shape = 'u8[32768]{0}', space=vmem, size = 0x8000, scoped, tag = 'input window, operand 9, single buffered']
    #allocation14 [shape = 'u8[32768]{0}', space=vmem, size = 0x8000, scoped, tag = 'input window, operand 11, single buffered']
    #allocation15 [shape = 's32[1]{0}', space=sflag, size = 0x4, scoped, tag = 'scoped memory for _forward_padded.1']
    #allocation16 [shape = 'u8[65536]{0}', space=vmem, size = 0x10000, scoped, tag = 'input window, operand 13, single buffered']
    #allocation17 [shape = 'u8[262144]{0}', space=vmem, size = 0x40000, scoped, tag = 'output window, operand 0']
    %30 = vsyncpa [#allocation6], 0
    %s31 = scalar_lea.sflag [#allocation6], 1
    %32 = vsyncpa %s31, 0
    %33 = vsyncpa [#allocation9], 0
    %34 = vsyncpa [#allocation12], 0
    %35 = vsyncpa [#allocation15], 0
    %36 = vsyncpa [#allocation7], 0
    %s37 = scalar_lea.sflag [#allocation7], 1
    %38 = vsyncpa %s37, 0
    loop: start=0, step=1, limit=4
    $region2: #{_forward_padded.1} parent=1 // loop_pre_header
      _
    $region3: #{_forward_padded.1} parent=1 // loop_header
      %s40 = sphi 0, %s44
      %p41 = scmp.ge.s32.totalorder %s40, 4
      %s50 = sphi 0, %s52
      %s53 = sphi 0, %s50
      %s54 = sphi 0, %s53
      %s70 = sphi 0, %s54
      %s74 = sphi 0, %s74
      %s76 = sphi 0, %s74
      %s77 = sphi 0, %s76
      %s91 = sphi 0, %s77
      %s95 = sphi 0, %s95
      %s97 = sphi 0, %s95
      %s98 = sphi 0, %s97
      %s112 = sphi 0, %s98
      %s116 = sphi 0, %s116
      %s118 = sphi 0, %s116
      %s119 = sphi 0, %s118
      %s133 = sphi 0, %s119
      %s137 = sphi 0, %s137
      %s139 = sphi 0, %s137
      %s140 = sphi 0, %s139
      %s154 = sphi 0, %s140
      %s158 = sphi 0, %s158
      %s160 = sphi 0, %s158
      %s161 = sphi 0, %s160
      %s175 = sphi 0, %s161
      %s179 = sphi 0, %s179
      %s181 = sphi 0, %s179
      %s182 = sphi 0, %s181
      %s196 = sphi 0, %s182
      %s200 = sphi 0, %s200
      %s202 = sphi 0, %s200
      %s203 = sphi 0, %s202
      %s217 = sphi 0, %s203
      %s221 = sphi 0, %s221
      %s223 = sphi 0, %s221
      %s224 = sphi 0, %s223
      %s238 = sphi 0, %s224
      %s242 = sphi 0, %s242
      %s244 = sphi 0, %s242
      %s245 = sphi 0, %s244
      %s259 = sphi 0, %s245
      %s263 = sphi 0, %s263
      %s265 = sphi 0, %s263
      %s266 = sphi 0, %s265
      %s280 = sphi 0, %s266
      %s284 = sphi 0, %s284
      %s286 = sphi 0, %s284
      %s287 = sphi 0, %s286
      %s301 = sphi 0, %s287
      %s305 = sphi 0, %s305
      %s307 = sphi 0, %s305
      %s308 = sphi 0, %s307
      %s322 = sphi 0, %s308
      %s328 = sphi 0, %s330
      %s331 = sphi 0, %s328
      %s332 = sphi 0, %s331
      %s348 = sphi 0, %s332
    $region4: #{_forward_padded.1} parent=1 // loop_header_branch
      %43 = sbr.rel (%p41) target = $region8
    $region5: #{_forward_padded.1} parent=1 // loop_body
      %s45 = ssub.s32 %s40, 1
      %s46 = ssub.s32 %s40, 2
      %s47 = sadd.s32 %s40, 1
      %s48 = ssub.s32 %s40, %s47
      %p49 = scmp.eq.s32.totalorder %s48, 0
      %s51 = sadd.s32 %s50, 1
      %s52 = scalar_select %p49, %s50, %s51
      %p55 = pneg %p49
      %p56 = scmp.eq.s32.totalorder %s40, 1
      %p57 = por %p55, %p56
      %p58 = scmp.ne.s32.totalorder %s50, %s53
      %p59 = scmp.eq.s32.totalorder %s40, 0
      %p60 = por %p58, %p59
      %p61 = scmp.ne.s32.totalorder %s50, %s53
      %p62 = scmp.eq.s32.totalorder %s45, 1
      %p63 = por %p61, %p62
      %p64 = scmp.ne.s32.totalorder %s53, %s54
      %p65 = scmp.eq.s32.totalorder %s45, 0
      %p66 = por %p64, %p65
      %p67 = scmp.ne.s32.totalorder %s53, %s54
      %p68 = scmp.eq.s32.totalorder %s46, 1
      %p69 = por %p67, %p68
      %p71 = scmp.ne.s32.totalorder %s54, %s70
      %p72 = scmp.eq.s32.totalorder %s46, 0
      %p73 = por %p71, %p72
      %s75 = sadd.s32 %s74, 1
      %p78 = scmp.eq.s32.totalorder %s40, 1
      %p79 = scmp.ne.s32.totalorder %s74, %s76
      %p80 = scmp.eq.s32.totalorder %s40, 0
      %p81 = por %p79, %p80
      %p82 = scmp.ne.s32.totalorder %s74, %s76
      %p83 = scmp.eq.s32.totalorder %s45, 1
      %p84 = por %p82, %p83
      %p85 = scmp.ne.s32.totalorder %s76, %s77
      %p86 = scmp.eq.s32.totalorder %s45, 0
      %p87 = por %p85, %p86
      %p88 = scmp.ne.s32.totalorder %s76, %s77
      %p89 = scmp.eq.s32.totalorder %s46, 1
      %p90 = por %p88, %p89
      %p92 = scmp.ne.s32.totalorder %s77, %s91
      %p93 = scmp.eq.s32.totalorder %s46, 0
      %p94 = por %p92, %p93
      %s96 = sadd.s32 %s95, 1
      %p99 = scmp.eq.s32.totalorder %s40, 1
      %p100 = scmp.ne.s32.totalorder %s95, %s97
      %p101 = scmp.eq.s32.totalorder %s40, 0
      %p102 = por %p100, %p101
      %p103 = scmp.ne.s32.totalorder %s95, %s97
      %p104 = scmp.eq.s32.totalorder %s45, 1
      %p105 = por %p103, %p104
      %p106 = scmp.ne.s32.totalorder %s97, %s98
      %p107 = scmp.eq.s32.totalorder %s45, 0
      %p108 = por %p106, %p107
      %p109 = scmp.ne.s32.totalorder %s97, %s98
      %p110 = scmp.eq.s32.totalorder %s46, 1
      %p111 = por %p109, %p110
      %p113 = scmp.ne.s32.totalorder %s98, %s112
      %p114 = scmp.eq.s32.totalorder %s46, 0
      %p115 = por %p113, %p114
      %s117 = sadd.s32 %s116, 1
      %p120 = scmp.eq.s32.totalorder %s40, 1
      %p121 = scmp.ne.s32.totalorder %s116, %s118
      %p122 = scmp.eq.s32.totalorder %s40, 0
      %p123 = por %p121, %p122
      %p124 = scmp.ne.s32.totalorder %s116, %s118
      %p125 = scmp.eq.s32.totalorder %s45, 1
      %p126 = por %p124, %p125
      %p127 = scmp.ne.s32.totalorder %s118, %s119
      %p128 = scmp.eq.s32.totalorder %s45, 0
      %p129 = por %p127, %p128
      %p130 = scmp.ne.s32.totalorder %s118, %s119
      %p131 = scmp.eq.s32.totalorder %s46, 1
      %p132 = por %p130, %p131
      %p134 = scmp.ne.s32.totalorder %s119, %s133
      %p135 = scmp.eq.s32.totalorder %s46, 0
      %p136 = por %p134, %p135
      %s138 = sadd.s32 %s137, 1
      %p141 = scmp.eq.s32.totalorder %s40, 1
      %p142 = scmp.ne.s32.totalorder %s137, %s139
      %p143 = scmp.eq.s32.totalorder %s40, 0
      %p144 = por %p142, %p143
      %p145 = scmp.ne.s32.totalorder %s137, %s139
      %p146 = scmp.eq.s32.totalorder %s45, 1
      %p147 = por %p145, %p146
      %p148 = scmp.ne.s32.totalorder %s139, %s140
      %p149 = scmp.eq.s32.totalorder %s45, 0
      %p150 = por %p148, %p149
      %p151 = scmp.ne.s32.totalorder %s139, %s140
      %p152 = scmp.eq.s32.totalorder %s46, 1
      %p153 = por %p151, %p152
      %p155 = scmp.ne.s32.totalorder %s140, %s154
      %p156 = scmp.eq.s32.totalorder %s46, 0
      %p157 = por %p155, %p156
      %s159 = sadd.s32 %s158, 1
      %p162 = scmp.eq.s32.totalorder %s40, 1
      %p163 = scmp.ne.s32.totalorder %s158, %s160
      %p164 = scmp.eq.s32.totalorder %s40, 0
      %p165 = por %p163, %p164
      %p166 = scmp.ne.s32.totalorder %s158, %s160
      %p167 = scmp.eq.s32.totalorder %s45, 1
      %p168 = por %p166, %p167
      %p169 = scmp.ne.s32.totalorder %s160, %s161
      %p170 = scmp.eq.s32.totalorder %s45, 0
      %p171 = por %p169, %p170
      %p172 = scmp.ne.s32.totalorder %s160, %s161
      %p173 = scmp.eq.s32.totalorder %s46, 1
      %p174 = por %p172, %p173
      %p176 = scmp.ne.s32.totalorder %s161, %s175
      %p177 = scmp.eq.s32.totalorder %s46, 0
      %p178 = por %p176, %p177
      %s180 = sadd.s32 %s179, 1
      %p183 = scmp.eq.s32.totalorder %s40, 1
      %p184 = scmp.ne.s32.totalorder %s179, %s181
      %p185 = scmp.eq.s32.totalorder %s40, 0
      %p186 = por %p184, %p185
      %p187 = scmp.ne.s32.totalorder %s179, %s181
      %p188 = scmp.eq.s32.totalorder %s45, 1
      %p189 = por %p187, %p188
      %p190 = scmp.ne.s32.totalorder %s181, %s182
      %p191 = scmp.eq.s32.totalorder %s45, 0
      %p192 = por %p190, %p191
      %p193 = scmp.ne.s32.totalorder %s181, %s182
      %p194 = scmp.eq.s32.totalorder %s46, 1
      %p195 = por %p193, %p194
      %p197 = scmp.ne.s32.totalorder %s182, %s196
      %p198 = scmp.eq.s32.totalorder %s46, 0
      %p199 = por %p197, %p198
      %s201 = sadd.s32 %s200, 1
      %p204 = scmp.eq.s32.totalorder %s40, 1
      %p205 = scmp.ne.s32.totalorder %s200, %s202
      %p206 = scmp.eq.s32.totalorder %s40, 0
      %p207 = por %p205, %p206
      %p208 = scmp.ne.s32.totalorder %s200, %s202
      %p209 = scmp.eq.s32.totalorder %s45, 1
      %p210 = por %p208, %p209
      %p211 = scmp.ne.s32.totalorder %s202, %s203
      %p212 = scmp.eq.s32.totalorder %s45, 0
      %p213 = por %p211, %p212
      %p214 = scmp.ne.s32.totalorder %s202, %s203
      %p215 = scmp.eq.s32.totalorder %s46, 1
      %p216 = por %p214, %p215
      %p218 = scmp.ne.s32.totalorder %s203, %s217
      %p219 = scmp.eq.s32.totalorder %s46, 0
      %p220 = por %p218, %p219
      %s222 = sadd.s32 %s221, 1
      %p225 = scmp.eq.s32.totalorder %s40, 1
      %p226 = scmp.ne.s32.totalorder %s221, %s223
      %p227 = scmp.eq.s32.totalorder %s40, 0
      %p228 = por %p226, %p227
      %p229 = scmp.ne.s32.totalorder %s221, %s223
      %p230 = scmp.eq.s32.totalorder %s45, 1
      %p231 = por %p229, %p230
      %p232 = scmp.ne.s32.totalorder %s223, %s224
      %p233 = scmp.eq.s32.totalorder %s45, 0
      %p234 = por %p232, %p233
      %p235 = scmp.ne.s32.totalorder %s223, %s224
      %p236 = scmp.eq.s32.totalorder %s46, 1
      %p237 = por %p235, %p236
      %p239 = scmp.ne.s32.totalorder %s224, %s238
      %p240 = scmp.eq.s32.totalorder %s46, 0
      %p241 = por %p239, %p240
      %s243 = sadd.s32 %s242, 1
      %p246 = scmp.eq.s32.totalorder %s40, 1
      %p247 = scmp.ne.s32.totalorder %s242, %s244
      %p248 = scmp.eq.s32.totalorder %s40, 0
      %p249 = por %p247, %p248
      %p250 = scmp.ne.s32.totalorder %s242, %s244
      %p251 = scmp.eq.s32.totalorder %s45, 1
      %p252 = por %p250, %p251
      %p253 = scmp.ne.s32.totalorder %s244, %s245
      %p254 = scmp.eq.s32.totalorder %s45, 0
      %p255 = por %p253, %p254
      %p256 = scmp.ne.s32.totalorder %s244, %s245
      %p257 = scmp.eq.s32.totalorder %s46, 1
      %p258 = por %p256, %p257
      %p260 = scmp.ne.s32.totalorder %s245, %s259
      %p261 = scmp.eq.s32.totalorder %s46, 0
      %p262 = por %p260, %p261
      %s264 = sadd.s32 %s263, 1
      %p267 = scmp.eq.s32.totalorder %s40, 1
      %p268 = scmp.ne.s32.totalorder %s263, %s265
      %p269 = scmp.eq.s32.totalorder %s40, 0
      %p270 = por %p268, %p269
      %p271 = scmp.ne.s32.totalorder %s263, %s265
      %p272 = scmp.eq.s32.totalorder %s45, 1
      %p273 = por %p271, %p272
      %p274 = scmp.ne.s32.totalorder %s265, %s266
      %p275 = scmp.eq.s32.totalorder %s45, 0
      %p276 = por %p274, %p275
      %p277 = scmp.ne.s32.totalorder %s265, %s266
      %p278 = scmp.eq.s32.totalorder %s46, 1
      %p279 = por %p277, %p278
      %p281 = scmp.ne.s32.totalorder %s266, %s280
      %p282 = scmp.eq.s32.totalorder %s46, 0
      %p283 = por %p281, %p282
      %s285 = sadd.s32 %s284, 1
      %p288 = scmp.eq.s32.totalorder %s40, 1
      %p289 = scmp.ne.s32.totalorder %s284, %s286
      %p290 = scmp.eq.s32.totalorder %s40, 0
      %p291 = por %p289, %p290
      %p292 = scmp.ne.s32.totalorder %s284, %s286
      %p293 = scmp.eq.s32.totalorder %s45, 1
      %p294 = por %p292, %p293
      %p295 = scmp.ne.s32.totalorder %s286, %s287
      %p296 = scmp.eq.s32.totalorder %s45, 0
      %p297 = por %p295, %p296
      %p298 = scmp.ne.s32.totalorder %s286, %s287
      %p299 = scmp.eq.s32.totalorder %s46, 1
      %p300 = por %p298, %p299
      %p302 = scmp.ne.s32.totalorder %s287, %s301
      %p303 = scmp.eq.s32.totalorder %s46, 0
      %p304 = por %p302, %p303
      %s306 = sadd.s32 %s305, 1
      %p309 = scmp.eq.s32.totalorder %s40, 1
      %p310 = scmp.ne.s32.totalorder %s305, %s307
      %p311 = scmp.eq.s32.totalorder %s40, 0
      %p312 = por %p310, %p311
      %p313 = scmp.ne.s32.totalorder %s305, %s307
      %p314 = scmp.eq.s32.totalorder %s45, 1
      %p315 = por %p313, %p314
      %p316 = scmp.ne.s32.totalorder %s307, %s308
      %p317 = scmp.eq.s32.totalorder %s45, 0
      %p318 = por %p316, %p317
      %p319 = scmp.ne.s32.totalorder %s307, %s308
      %p320 = scmp.eq.s32.totalorder %s46, 1
      %p321 = por %p319, %p320
      %p323 = scmp.ne.s32.totalorder %s308, %s322
      %p324 = scmp.eq.s32.totalorder %s46, 0
      %p325 = por %p323, %p324
      %s326 = ssub.s32 %s40, %s47
      %p327 = scmp.eq.s32.totalorder %s326, 0
      %s329 = sadd.s32 %s328, 1
      %s330 = scalar_select %p327, %s328, %s329
      %p333 = pneg %p327
      %p334 = scmp.eq.s32.totalorder %s40, 1
      %p335 = por %p333, %p334
      %p336 = scmp.ne.s32.totalorder %s328, %s331
      %p337 = scmp.eq.s32.totalorder %s40, 0
      %p338 = por %p336, %p337
      %p339 = scmp.ne.s32.totalorder %s328, %s331
      %p340 = scmp.eq.s32.totalorder %s45, 1
      %p341 = por %p339, %p340
      %p342 = scmp.ne.s32.totalorder %s331, %s332
      %p343 = scmp.eq.s32.totalorder %s45, 0
      %p344 = por %p342, %p343
      %p345 = scmp.ne.s32.totalorder %s331, %s332
      %p346 = scmp.eq.s32.totalorder %s46, 1
      %p347 = por %p345, %p346
      %p349 = scmp.ne.s32.totalorder %s332, %s348
      %p350 = scmp.eq.s32.totalorder %s46, 0
      %p351 = por %p349, %p350
      %p352 = scmp.le.s32.totalorder 1, %s40
      %p353 = scmp.lt.s32.totalorder %s40, 3
      %p354 = pnand %p352, %p353
      %p355 = pneg %p354
      // Predicated region
      $region9: #{_forward_padded.1} parent=5 // pred_check
        _
      $region10: #{_forward_padded.1} parent=5 // pred_check_branch
        %357 = sbr.rel (%p354) target = $region12
      $region11: #{_forward_padded.1} parent=5 // pred_region
        %s358 = ssub.s32 %s40, 1
        // Predicated region
        $region13: #{_forward_padded.1} parent=11 // pred_check
          %p359 = pneg %p87
        $region14: #{_forward_padded.1} parent=11 // pred_check_branch
          %361 = sbr.rel (%p359) target = $region16
        $region15: #{_forward_padded.1} parent=11 // pred_region
          %s363 = ssub.s32 2048, 2048
          %364 = vsyncadd [#allocation9], %s363
          %s365 = sshll.u32 [#allocation8], 4
          %s366 = int_to_ptr.vmem [resolvable:$true] %s365
          %371 = dma.hbm_to_vmem [thread:$0]  %s3, 2048, %s366, [#allocation9], 64, 64, 4
        $region16: #{_forward_padded.1} parent=11 // pred_fallthru
          _
        // Predicated region
        $region17: #{_forward_padded.1} parent=11 // pred_check
          %p372 = pneg %p108
        $region18: #{_forward_padded.1} parent=11 // pred_check_branch
          %374 = sbr.rel (%p372) target = $region20
        $region19: #{_forward_padded.1} parent=11 // pred_region
          _
        $region20: #{_forward_padded.1} parent=11 // pred_fallthru
          _
        // Predicated region
        $region21: #{_forward_padded.1} parent=11 // pred_check
          %p375 = pneg %p129
        $region22: #{_forward_padded.1} parent=11 // pred_check_branch
          %377 = sbr.rel (%p375) target = $region24
        $region23: #{_forward_padded.1} parent=11 // pred_region
          %s379 = ssub.s32 1024, 1024
          %380 = vsyncadd [#allocation9], %s379
          %s381 = sshll.u32 [#allocation10], 4
          %s382 = int_to_ptr.vmem [resolvable:$true] %s381
          %387 = dma.hbm_to_vmem [thread:$0]  %s5, 1024, %s382, [#allocation9], 64, 64, 4
        $region24: #{_forward_padded.1} parent=11 // pred_fallthru
          _
        // Predicated region
        $region25: #{_forward_padded.1} parent=11 // pred_check
          %p388 = pneg %p150
        $region26: #{_forward_padded.1} parent=11 // pred_check_branch
          %390 = sbr.rel (%p388) target = $region28
        $region27: #{_forward_padded.1} parent=11 // pred_region
          _
        $region28: #{_forward_padded.1} parent=11 // pred_fallthru
          _
        // Predicated region
        $region29: #{_forward_padded.1} parent=11 // pred_check
          %p391 = pneg %p171
        $region30: #{_forward_padded.1} parent=11 // pred_check_branch
          %393 = sbr.rel (%p391) target = $region32
        $region31: #{_forward_padded.1} parent=11 // pred_region
          %s395 = ssub.s32 1024, 1024
          %396 = vsyncadd [#allocation12], %s395
          %s397 = sshll.u32 [#allocation11], 4
          %s398 = int_to_ptr.vmem [resolvable:$true] %s397
          %403 = dma.hbm_to_vmem [thread:$0]  %s7, 1024, %s398, [#allocation12], 64, 64, 4
        $region32: #{_forward_padded.1} parent=11 // pred_fallthru
          _
        // Predicated region
        $region33: #{_forward_padded.1} parent=11 // pred_check
          %p404 = pneg %p192
        $region34: #{_forward_padded.1} parent=11 // pred_check_branch
          %406 = sbr.rel (%p404) target = $region36
        $region35: #{_forward_padded.1} parent=11 // pred_region
          _
        $region36: #{_forward_padded.1} parent=11 // pred_fallthru
          _
        // Predicated region
        $region37: #{_forward_padded.1} parent=11 // pred_check
          %p407 = pneg %p213
        $region38: #{_forward_padded.1} parent=11 // pred_check_branch
          %409 = sbr.rel (%p407) target = $region40
        $region39: #{_forward_padded.1} parent=11 // pred_region
          %s411 = ssub.s32 1024, 1024
          %412 = vsyncadd [#allocation12], %s411
          %s413 = sshll.u32 [#allocation13], 4
          %s414 = int_to_ptr.vmem [resolvable:$true] %s413
          %419 = dma.hbm_to_vmem [thread:$0]  %s9, 1024, %s414, [#allocation12], 64, 64, 4
        $region40: #{_forward_padded.1} parent=11 // pred_fallthru
          _
        // Predicated region
        $region41: #{_forward_padded.1} parent=11 // pred_check
          %p420 = pneg %p234
        $region42: #{_forward_padded.1} parent=11 // pred_check_branch
          %422 = sbr.rel (%p420) target = $region44
        $region43: #{_forward_padded.1} parent=11 // pred_region
          _
        $region44: #{_forward_padded.1} parent=11 // pred_fallthru
          _
        // Predicated region
        $region45: #{_forward_padded.1} parent=11 // pred_check
          %p423 = pneg %p255
        $region46: #{_forward_padded.1} parent=11 // pred_check_branch
          %425 = sbr.rel (%p423) target = $region48
        $region47: #{_forward_padded.1} parent=11 // pred_region
          %s427 = ssub.s32 1024, 1024
          %428 = vsyncadd [#allocation15], %s427
          %s429 = sshll.u32 [#allocation14], 4
          %s430 = int_to_ptr.vmem [resolvable:$true] %s429
          %435 = dma.hbm_to_vmem [thread:$0]  %s11, 1024, %s430, [#allocation15], 64, 64, 4
        $region48: #{_forward_padded.1} parent=11 // pred_fallthru
          _
        // Predicated region
        $region49: #{_forward_padded.1} parent=11 // pred_check
          %p436 = pneg %p276
        $region50: #{_forward_padded.1} parent=11 // pred_check_branch
          %438 = sbr.rel (%p436) target = $region52
        $region51: #{_forward_padded.1} parent=11 // pred_region
          _
        $region52: #{_forward_padded.1} parent=11 // pred_fallthru
          _
        // Predicated region
        $region53: #{_forward_padded.1} parent=11 // pred_check
          %p439 = pneg %p297
        $region54: #{_forward_padded.1} parent=11 // pred_check_branch
          %441 = sbr.rel (%p439) target = $region56
        $region55: #{_forward_padded.1} parent=11 // pred_region
          %s443 = ssub.s32 2048, 2048
          %444 = vsyncadd [#allocation15], %s443
          %s445 = sshll.u32 [#allocation16], 4
          %s446 = int_to_ptr.vmem [resolvable:$true] %s445
          %451 = dma.hbm_to_vmem [thread:$0]  %s13, 2048, %s446, [#allocation15], 128, 128, 8
        $region56: #{_forward_padded.1} parent=11 // pred_fallthru
          _
        // Predicated region
        $region57: #{_forward_padded.1} parent=11 // pred_check
          %p452 = pneg %p318
        $region58: #{_forward_padded.1} parent=11 // pred_check_branch
          %454 = sbr.rel (%p452) target = $region60
        $region59: #{_forward_padded.1} parent=11 // pred_region
          _
        $region60: #{_forward_padded.1} parent=11 // pred_fallthru
          _
      $region12: #{_forward_padded.1} parent=5 // pred_fallthru
        _
      %p455 = scmp.lt.s32.totalorder %s40, 2
      // Predicated region
      $region61: #{_forward_padded.1} parent=5 // pred_check
        %p456 = pneg %p455
      $region62: #{_forward_padded.1} parent=5 // pred_check_branch
        %458 = sbr.rel (%p456) target = $region64
      $region63: #{_forward_padded.1} parent=5 // pred_region
        // Predicated region
        $region65: #{_forward_padded.1} parent=63 // pred_check
          %p459 = pneg %p60
        $region66: #{_forward_padded.1} parent=63 // pred_check_branch
          %461 = sbr.rel (%p459) target = $region68
        $region67: #{_forward_padded.1} parent=63 // pred_region
          %s462 = sand.u32 %s50, 1
          %s463 = scalar_lea.sflag [#allocation6], %s462
          %s464 = sand.u32 %s50, 1
          %s465 = smul.addr %s464, 256
          %s466 = scalar_lea.vmem [#allocation5], %s465
          %s467 = smul.u32 16, %s40
          %s469 = ssub.s32 4096, 4096
          %470 = vsyncadd %s463, %s469
          %s471 = smul.addr %s467, 2
          %s472 = smul.addr %s471, 128
          %s473 = scalar_lea.hbm %s2, %s472
          %s474 = sshll.u32 %s466, 4
          %s475 = int_to_ptr.vmem [resolvable:$true] %s474
          %480 = dma.hbm_to_vmem [thread:$0]  %s473, 4096, %s475, %s463, 256, 256, 16
        $region68: #{_forward_padded.1} parent=63 // pred_fallthru
          _
      $region64: #{_forward_padded.1} parent=5 // pred_fallthru
        _
      %p481 = scmp.le.s32.totalorder 1, %s40
      %p482 = scmp.lt.s32.totalorder %s40, 3
      %p483 = pnand %p481, %p482
      %p484 = pneg %p483
      // Predicated region
      $region69: #{_forward_padded.1} parent=5 // pred_check
        _
      $region70: #{_forward_padded.1} parent=5 // pred_check_branch
        %486 = sbr.rel (%p483) target = $region72
      $region71: #{_forward_padded.1} parent=5 // pred_region
        %s487 = ssub.s32 %s40, 1
        %s488 = sand.u32 %s53, 1
        %s489 = scalar_lea.sflag [#allocation6], %s488
        %s490 = sand.u32 %s53, 1
        %s491 = smul.addr %s490, 256
        %s492 = scalar_lea.vmem [#allocation5], %s491
        // Predicated region
        $region73: #{_forward_padded.1} parent=71 // pred_check
          %p493 = pneg %p66
        $region74: #{_forward_padded.1} parent=71 // pred_check_branch
          %495 = sbr.rel (%p493) target = $region76
        $region75: #{_forward_padded.1} parent=71 // pred_region
          %496 = dma.done %s489, 4096
        $region76: #{_forward_padded.1} parent=71 // pred_fallthru
          _
        // Predicated region
        $region77: #{_forward_padded.1} parent=71 // pred_check
          %p497 = pneg %p87
        $region78: #{_forward_padded.1} parent=71 // pred_check_branch
          %499 = sbr.rel (%p497) target = $region80
        $region79: #{_forward_padded.1} parent=71 // pred_region
          %500 = dma.done [#allocation9], 2048
        $region80: #{_forward_padded.1} parent=71 // pred_fallthru
          _
        // Predicated region
        $region81: #{_forward_padded.1} parent=71 // pred_check
          %p501 = pneg %p129
        $region82: #{_forward_padded.1} parent=71 // pred_check_branch
          %503 = sbr.rel (%p501) target = $region84
        $region83: #{_forward_padded.1} parent=71 // pred_region
          %504 = dma.done [#allocation9], 1024
        $region84: #{_forward_padded.1} parent=71 // pred_fallthru
          _
        // Predicated region
        $region85: #{_forward_padded.1} parent=71 // pred_check
          %p505 = pneg %p171
        $region86: #{_forward_padded.1} parent=71 // pred_check_branch
          %507 = sbr.rel (%p505) target = $region88
        $region87: #{_forward_padded.1} parent=71 // pred_region
          %508 = dma.done [#allocation12], 1024
        $region88: #{_forward_padded.1} parent=71 // pred_fallthru
          _
        // Predicated region
        $region89: #{_forward_padded.1} parent=71 // pred_check
          %p509 = pneg %p213
        $region90: #{_forward_padded.1} parent=71 // pred_check_branch
          %511 = sbr.rel (%p509) target = $region92
        $region91: #{_forward_padded.1} parent=71 // pred_region
          %512 = dma.done [#allocation12], 1024
        $region92: #{_forward_padded.1} parent=71 // pred_fallthru
          _
        // Predicated region
        $region93: #{_forward_padded.1} parent=71 // pred_check
          %p513 = pneg %p255
        $region94: #{_forward_padded.1} parent=71 // pred_check_branch
          %515 = sbr.rel (%p513) target = $region96
        $region95: #{_forward_padded.1} parent=71 // pred_region
          %516 = dma.done [#allocation15], 1024
        $region96: #{_forward_padded.1} parent=71 // pred_fallthru
          _
        // Predicated region
        $region97: #{_forward_padded.1} parent=71 // pred_check
          %p517 = pneg %p297
        $region98: #{_forward_padded.1} parent=71 // pred_check_branch
          %519 = sbr.rel (%p517) target = $region100
        $region99: #{_forward_padded.1} parent=71 // pred_region
          %520 = dma.done [#allocation15], 2048
        $region100: #{_forward_padded.1} parent=71 // pred_fallthru
          _
        %s521 = sand.u32 %s53, 1
        %s522 = scalar_lea.sflag [#allocation6], %s521
        %s523 = sand.u32 %s53, 1
        %s524 = smul.addr %s523, 256
        %s525 = scalar_lea.vmem [#allocation5], %s524
        %p526 = pneg %p66
        %p527 = pneg %p63
        %p528 = pneg %p87
        %p529 = pneg %p84
        %p530 = pneg %p108
        %p531 = pneg %p105
        %p532 = pneg %p129
        %p533 = pneg %p126
        %p534 = pneg %p150
        %p535 = pneg %p147
        %p536 = pneg %p171
        %p537 = pneg %p168
        %p538 = pneg %p192
        %p539 = pneg %p189
        %p540 = pneg %p213
        %p541 = pneg %p210
        %p542 = pneg %p234
        %p543 = pneg %p231
        %p544 = pneg %p255
        %p545 = pneg %p252
        %p546 = pneg %p276
        %p547 = pneg %p273
        %p548 = pneg %p297
        %p549 = pneg %p294
        %p550 = pneg %p318
        %p551 = pneg %p315
        %p552 = pneg %p344
        %p553 = pneg %p341
        %s554 = sand.u32 %s331, 1
        %s555 = scalar_lea.sflag [#allocation7], %s554
        %s556 = sand.u32 %s331, 1
        %s557 = smul.addr %s556, 256
        %s558 = scalar_lea.vmem [#allocation17], %s557
        %s559 = smul.u32 16, %s45
        %s560 = smul.u32 16, %s45
        %v562 = vld [vmem:[%s492] sm:$0xff]
        %v563 = vld [vmem:[%s492 + $0x8] sm:$0xff]
        %v564 = vld [vmem:[%s492 + $0x10] sm:$0xff]
        %v565 = vld [vmem:[%s492 + $0x18] sm:$0xff]
        %v566 = vld [vmem:[%s492 + $0x20] sm:$0xff]
        %v567 = vld [vmem:[%s492 + $0x28] sm:$0xff]
        %v568 = vld [vmem:[%s492 + $0x30] sm:$0xff]
        %v569 = vld [vmem:[%s492 + $0x38] sm:$0xff]
        %v570 = vld [vmem:[%s492 + $0x40] sm:$0xff]
        %v571 = vld [vmem:[%s492 + $0x48] sm:$0xff]
        %v572 = vld [vmem:[%s492 + $0x50] sm:$0xff]
        %v573 = vld [vmem:[%s492 + $0x58] sm:$0xff]
        %v574 = vld [vmem:[%s492 + $0x60] sm:$0xff]
        %v575 = vld [vmem:[%s492 + $0x68] sm:$0xff]
        %v576 = vld [vmem:[%s492 + $0x70] sm:$0xff]
        %v577 = vld [vmem:[%s492 + $0x78] sm:$0xff]
        %v578 = vld [vmem:[%s492 + $0x80] sm:$0xff]
        %v579 = vld [vmem:[%s492 + $0x88] sm:$0xff]
        %v580 = vld [vmem:[%s492 + $0x90] sm:$0xff]
        %v581 = vld [vmem:[%s492 + $0x98] sm:$0xff]
        %v582 = vld [vmem:[%s492 + $0xa0] sm:$0xff]
        %v583 = vld [vmem:[%s492 + $0xa8] sm:$0xff]
        %v584 = vld [vmem:[%s492 + $0xb0] sm:$0xff]
        %v585 = vld [vmem:[%s492 + $0xb8] sm:$0xff]
        %v586 = vld [vmem:[%s492 + $0xc0] sm:$0xff]
        %v587 = vld [vmem:[%s492 + $0xc8] sm:$0xff]
        %v588 = vld [vmem:[%s492 + $0xd0] sm:$0xff]
        %v589 = vld [vmem:[%s492 + $0xd8] sm:$0xff]
        %v590 = vld [vmem:[%s492 + $0xe0] sm:$0xff]
        %v591 = vld [vmem:[%s492 + $0xe8] sm:$0xff]
        %v592 = vld [vmem:[%s492 + $0xf0] sm:$0xff]
        %v593 = vld [vmem:[%s492 + $0xf8] sm:$0xff]
        %v594 = vld [vmem:[#allocation8] sm:$0xf]
        %v595 = vld [vmem:[#allocation8 + $0x4] sm:$0xf]
        %v596 = vld [vmem:[#allocation8 + $0x8] sm:$0xf]
        %v597 = vld [vmem:[#allocation8 + $0xc] sm:$0xf]
        %v598 = vld [vmem:[#allocation8 + $0x10] sm:$0xf]
        %v599 = vld [vmem:[#allocation8 + $0x14] sm:$0xf]
        %v600 = vld [vmem:[#allocation8 + $0x18] sm:$0xf]
        %v601 = vld [vmem:[#allocation8 + $0x1c] sm:$0xf]
        %v602 = vld [vmem:[#allocation8 + $0x20] sm:$0xf]
        %v603 = vld [vmem:[#allocation8 + $0x24] sm:$0xf]
        %v604 = vld [vmem:[#allocation8 + $0x28] sm:$0xf]
        %v605 = vld [vmem:[#allocation8 + $0x2c] sm:$0xf]
        %v606 = vld [vmem:[#allocation8 + $0x30] sm:$0xf]
        %v607 = vld [vmem:[#allocation8 + $0x34] sm:$0xf]
        %v608 = vld [vmem:[#allocation8 + $0x38] sm:$0xf]
        %v609 = vld [vmem:[#allocation8 + $0x3c] sm:$0xf]
        %v610 = vld [vmem:[#allocation8 + $0x40] sm:$0xf]
        %v611 = vld [vmem:[#allocation8 + $0x44] sm:$0xf]
        %v612 = vld [vmem:[#allocation8 + $0x48] sm:$0xf]
        %v613 = vld [vmem:[#allocation8 + $0x4c] sm:$0xf]
        %v614 = vld [vmem:[#allocation8 + $0x50] sm:$0xf]
        %v615 = vld [vmem:[#allocation8 + $0x54] sm:$0xf]
        %v616 = vld [vmem:[#allocation8 + $0x58] sm:$0xf]
        %v617 = vld [vmem:[#allocation8 + $0x5c] sm:$0xf]
        %v618 = vld [vmem:[#allocation8 + $0x60] sm:$0xf]
        %v619 = vld [vmem:[#allocation8 + $0x64] sm:$0xf]
        %v620 = vld [vmem:[#allocation8 + $0x68] sm:$0xf]
        %v621 = vld [vmem:[#allocation8 + $0x6c] sm:$0xf]
        %v622 = vld [vmem:[#allocation8 + $0x70] sm:$0xf]
        %v623 = vld [vmem:[#allocation8 + $0x74] sm:$0xf]
        %v624 = vld [vmem:[#allocation8 + $0x78] sm:$0xf]
        %v625 = vld [vmem:[#allocation8 + $0x7c] sm:$0xf]
        %v626 = vpack.c.bf16 %v564, %v562
        %v627 = vpack.c.bf16 %v565, %v563
        %v628 = vpack.c.bf16 %v568, %v566
        %v629 = vpack.c.bf16 %v569, %v567
        %v630 = vpack.c.bf16 %v572, %v570
        %v631 = vpack.c.bf16 %v573, %v571
        %v632 = vpack.c.bf16 %v576, %v574
        %v633 = vpack.c.bf16 %v577, %v575
        %v634 = vpack.c.bf16 %v580, %v578
        %v635 = vpack.c.bf16 %v581, %v579
        %v636 = vpack.c.bf16 %v584, %v582
        %v637 = vpack.c.bf16 %v585, %v583
        %v638 = vpack.c.bf16 %v588, %v586
        %v639 = vpack.c.bf16 %v589, %v587
        %v640 = vpack.c.bf16 %v592, %v590
        %v641 = vpack.c.bf16 %v593, %v591
        %v642 = vld [vmem:[%s4] sm:$0x1]
        %v644 = vlaneseq
        %v645 = vshrl.u32 %v644, 7
        %v646 = vsub.s32 0, %v645
        %v647 = vrot.slane %v642, %v646
        %v681 = vunpack.c.l.b16 %v594
        %v682 = vunpack.c.l.b16 %v595
        %v683 = vunpack.c.l.b16 %v596
        %v684 = vunpack.c.l.b16 %v597
        %v685 = vunpack.c.l.b16 %v598
        %v686 = vunpack.c.l.b16 %v599
        %v687 = vunpack.c.l.b16 %v600
        %v688 = vunpack.c.l.b16 %v601
        %v689 = vunpack.c.l.b16 %v602
        %v690 = vunpack.c.l.b16 %v603
        %v691 = vunpack.c.l.b16 %v604
        %v692 = vunpack.c.l.b16 %v605
        %v693 = vunpack.c.l.b16 %v606
        %v694 = vunpack.c.l.b16 %v607
        %v695 = vunpack.c.l.b16 %v608
        %v696 = vunpack.c.l.b16 %v609
        %v697 = vunpack.c.l.b16 %v610
        %v698 = vunpack.c.l.b16 %v611
        %v699 = vunpack.c.l.b16 %v612
        %v700 = vunpack.c.l.b16 %v613
        %v701 = vunpack.c.l.b16 %v614
        %v702 = vunpack.c.l.b16 %v615
        %v703 = vunpack.c.l.b16 %v616
        %v704 = vunpack.c.l.b16 %v617
        %v705 = vunpack.c.l.b16 %v618
        %v706 = vunpack.c.l.b16 %v619
        %v707 = vunpack.c.l.b16 %v620
        %v708 = vunpack.c.l.b16 %v621
        %v709 = vunpack.c.l.b16 %v622
        %v710 = vunpack.c.l.b16 %v623
        %v711 = vunpack.c.l.b16 %v624
        %v712 = vunpack.c.l.b16 %v625
        %v713 = vpack.c.b16 %v682, %v681
        %v714 = vpack.c.b16 %v684, %v683
        %v715 = vpack.c.b16 %v686, %v685
        %v716 = vpack.c.b16 %v688, %v687
        %v717 = vpack.c.b16 %v690, %v689
        %v718 = vpack.c.b16 %v692, %v691
        %v719 = vpack.c.b16 %v694, %v693
        %v720 = vpack.c.b16 %v696, %v695
        %v721 = vpack.c.b16 %v698, %v697
        %v722 = vpack.c.b16 %v700, %v699
        %v723 = vpack.c.b16 %v702, %v701
        %v724 = vpack.c.b16 %v704, %v703
        %v725 = vpack.c.b16 %v706, %v705
        %v726 = vpack.c.b16 %v708, %v707
        %v727 = vpack.c.b16 %v710, %v709
        %v728 = vpack.c.b16 %v712, %v711
        %745 = vmatprep.subr.bf16.mxu0 0
        %746 = vmatpush1.bf16.msra.mxu0 %v713
        %747 = vmatprep.subr.bf16.mxu0 0
        %748 = vmatpush1.bf16.msra.mxu0 %v714
        %749 = vmatprep.subr.bf16.mxu0 0
        %750 = vmatpush1.bf16.msra.mxu0 %v715
        %751 = vmatprep.subr.bf16.mxu0 0
        %752 = vmatpush1.bf16.msra.mxu0 %v716
        %753 = vmatprep.subr.bf16.mxu0 0
        %754 = vmatpush1.bf16.msra.mxu0 %v717
        %755 = vmatprep.subr.bf16.mxu0 0
        %756 = vmatpush1.bf16.msra.mxu0 %v718
        %757 = vmatprep.subr.bf16.mxu0 0
        %758 = vmatpush1.bf16.msra.mxu0 %v719
        %759 = vmatprep.subr.bf16.mxu0 0
        %760 = vmatpush1.bf16.msra.mxu0 %v720
        %761 = vmatprep.subr.bf16.mxu0 0
        %762 = vmatpush1.bf16.msra.mxu0 %v721
        %763 = vmatprep.subr.bf16.mxu0 0
        %764 = vmatpush1.bf16.msra.mxu0 %v722
        %765 = vmatprep.subr.bf16.mxu0 0
        %766 = vmatpush1.bf16.msra.mxu0 %v723
        %767 = vmatprep.subr.bf16.mxu0 0
        %768 = vmatpush1.bf16.msra.mxu0 %v724
        %769 = vmatprep.subr.bf16.mxu0 0
        %770 = vmatpush1.bf16.msra.mxu0 %v725
        %771 = vmatprep.subr.bf16.mxu0 0
        %772 = vmatpush1.bf16.msra.mxu0 %v726
        %773 = vmatprep.subr.bf16.mxu0 0
        %774 = vmatpush1.bf16.msra.mxu0 %v727
        %775 = vmatprep.subr.bf16.mxu0 0
        %776 = vmatpush1.bf16.msra.mxu0 %v728
        %777 = vmatprep.mubr.bf16.mxu0 %v627
        %778 = vmatmul.mubr.bf16.gmra.mrb[0].mxu0 %v626
        %v779 = vpop.f32.mrb[0].mxu0
        %v780 = vadd.f32 %v647, %v779
        %v781 = vpop.f32.mrb[0].mxu0
        %v782 = vpop.f32.mrb[0].mxu0
        %v783 = vadd.f32 %v647, %v782
        %v784 = vpop.f32.mrb[0].mxu0
        %785 = vmatprep.mubr.bf16.mxu0 %v629
        %786 = vmatmul.mubr.bf16.gmra.mrb[0].mxu0 %v628
        %v787 = vpop.f32.mrb[0].mxu0
        %v788 = vadd.f32 %v647, %v787
        %v789 = vpop.f32.mrb[0].mxu0
        %v790 = vpop.f32.mrb[0].mxu0
        %v791 = vadd.f32 %v647, %v790
        %v792 = vpop.f32.mrb[0].mxu0
        %793 = vmatprep.mubr.bf16.mxu0 %v631
        %794 = vmatmul.mubr.bf16.gmra.mrb[0].mxu0 %v630
        %v795 = vpop.f32.mrb[0].mxu0
        %v796 = vadd.f32 %v647, %v795
        %v797 = vpop.f32.mrb[0].mxu0
        %v798 = vpop.f32.mrb[0].mxu0
        %v799 = vadd.f32 %v647, %v798
        %v800 = vpop.f32.mrb[0].mxu0
        %801 = vmatprep.mubr.bf16.mxu0 %v633
        %802 = vmatmul.mubr.bf16.gmra.mrb[0].mxu0 %v632
        %v803 = vpop.f32.mrb[0].mxu0
        %v804 = vadd.f32 %v647, %v803
        %v805 = vpop.f32.mrb[0].mxu0
        %v806 = vpop.f32.mrb[0].mxu0
        %v807 = vadd.f32 %v647, %v806
        %v808 = vpop.f32.mrb[0].mxu0
        %809 = vmatprep.mubr.bf16.mxu0 %v635
        %810 = vmatmul.mubr.bf16.gmra.mrb[0].mxu0 %v634
        %v811 = vpop.f32.mrb[0].mxu0
        %v812 = vadd.f32 %v647, %v811
        %v813 = vpop.f32.mrb[0].mxu0
        %v814 = vpop.f32.mrb[0].mxu0
        %v815 = vadd.f32 %v647, %v814
        %v816 = vpop.f32.mrb[0].mxu0
        %817 = vmatprep.mubr.bf16.mxu0 %v637
        %818 = vmatmul.mubr.bf16.gmra.mrb[0].mxu0 %v636
        %v819 = vpop.f32.mrb[0].mxu0
        %v820 = vadd.f32 %v647, %v819
        %v821 = vpop.f32.mrb[0].mxu0
        %v822 = vpop.f32.mrb[0].mxu0
        %v823 = vadd.f32 %v647, %v822
        %v824 = vpop.f32.mrb[0].mxu0
        %825 = vmatprep.mubr.bf16.mxu0 %v639
        %826 = vmatmul.mubr.bf16.gmra.mrb[0].mxu0 %v638
        %v827 = vpop.f32.mrb[0].mxu0
        %v828 = vadd.f32 %v647, %v827
        %v829 = vpop.f32.mrb[0].mxu0
        %v830 = vpop.f32.mrb[0].mxu0
        %v831 = vadd.f32 %v647, %v830
        %v832 = vpop.f32.mrb[0].mxu0
        %833 = vmatprep.mubr.bf16.mxu0 %v641
        %834 = vmatmul.mubr.bf16.gmra.mrb[0].mxu0 %v640
        %v835 = vpop.f32.mrb[0].mxu0
        %v836 = vadd.f32 %v647, %v835
        %v837 = vpop.f32.mrb[0].mxu0
        %v838 = vpop.f32.mrb[0].mxu0
        %v839 = vadd.f32 %v647, %v838
        %v840 = vpop.f32.mrb[0].mxu0
        %841 = vdwg.mxu0
        %v842 = vtanh.pop %v780
        %v843 = vtanh.pop %v783
        %v844 = vtanh.pop %v788
        %v845 = vtanh.pop %v791
        %v846 = vtanh.pop %v796
        %v847 = vtanh.pop %v799
        %v848 = vtanh.pop %v804
        %v849 = vtanh.pop %v807
        %v850 = vtanh.pop %v812
        %v851 = vtanh.pop %v815
        %v852 = vtanh.pop %v820
        %v853 = vtanh.pop %v823
        %v854 = vtanh.pop %v828
        %v855 = vtanh.pop %v831
        %v856 = vtanh.pop %v836
        %v857 = vtanh.pop %v839
        %v858 = vld [vmem:[#allocation10] sm:$0xf]
        %v859 = vld [vmem:[#allocation10 + $0x4] sm:$0xf]
        %v860 = vld [vmem:[#allocation10 + $0x8] sm:$0xf]
        %v861 = vld [vmem:[#allocation10 + $0xc] sm:$0xf]
        %v862 = vld [vmem:[#allocation10 + $0x10] sm:$0xf]
        %v863 = vld [vmem:[#allocation10 + $0x14] sm:$0xf]
        %v864 = vld [vmem:[#allocation10 + $0x18] sm:$0xf]
        %v865 = vld [vmem:[#allocation10 + $0x1c] sm:$0xf]
        %v866 = vld [vmem:[#allocation10 + $0x20] sm:$0xf]
        %v867 = vld [vmem:[#allocation10 + $0x24] sm:$0xf]
        %v868 = vld [vmem:[#allocation10 + $0x28] sm:$0xf]
        %v869 = vld [vmem:[#allocation10 + $0x2c] sm:$0xf]
        %v870 = vld [vmem:[#allocation10 + $0x30] sm:$0xf]
        %v871 = vld [vmem:[#allocation10 + $0x34] sm:$0xf]
        %v872 = vld [vmem:[#allocation10 + $0x38] sm:$0xf]
        %v873 = vld [vmem:[#allocation10 + $0x3c] sm:$0xf]
        %v874 = vpack.c.bf16 %v843, %v842
        %v875 = vpack.c.bf16 %v845, %v844
        %v876 = vpack.c.bf16 %v847, %v846
        %v877 = vpack.c.bf16 %v849, %v848
        %v878 = vpack.c.bf16 %v851, %v850
        %v879 = vpack.c.bf16 %v853, %v852
        %v880 = vpack.c.bf16 %v855, %v854
        %v881 = vpack.c.bf16 %v857, %v856
        %v882 = vld [vmem:[%s6] sm:$0x1]
        %v884 = vlaneseq
        %v885 = vshrl.u32 %v884, 7
        %v886 = vsub.s32 0, %v885
        %v887 = vrot.slane %v882, %v886
        %v905 = vunpack.c.l.b16 %v858
        %v906 = vunpack.c.l.b16 %v859
        %v907 = vunpack.c.l.b16 %v860
        %v908 = vunpack.c.l.b16 %v861
        %v909 = vunpack.c.l.b16 %v862
        %v910 = vunpack.c.l.b16 %v863
        %v911 = vunpack.c.l.b16 %v864
        %v912 = vunpack.c.l.b16 %v865
        %v913 = vunpack.c.l.b16 %v866
        %v914 = vunpack.c.l.b16 %v867
        %v915 = vunpack.c.l.b16 %v868
        %v916 = vunpack.c.l.b16 %v869
        %v917 = vunpack.c.l.b16 %v870
        %v918 = vunpack.c.l.b16 %v871
        %v919 = vunpack.c.l.b16 %v872
        %v920 = vunpack.c.l.b16 %v873
        %v921 = vpack.c.b16 %v906, %v905
        %v922 = vpack.c.b16 %v908, %v907
        %v923 = vpack.c.b16 %v910, %v909
        %v924 = vpack.c.b16 %v912, %v911
        %v925 = vpack.c.b16 %v914, %v913
        %v926 = vpack.c.b16 %v916, %v915
        %v927 = vpack.c.b16 %v918, %v917
        %v928 = vpack.c.b16 %v920, %v919
        %937 = vmatprep.subr.bf16.mxu0 0
        %938 = vmatpush1.bf16.msra.mxu0 %v921
        %939 = vmatprep.subr.bf16.mxu0 0
        %940 = vmatpush1.bf16.msra.mxu0 %v922
        %941 = vmatprep.subr.bf16.mxu0 0
        %942 = vmatpush1.bf16.msra.mxu0 %v923
        %943 = vmatprep.subr.bf16.mxu0 0
        %944 = vmatpush1.bf16.msra.mxu0 %v924
        %945 = vmatprep.subr.bf16.mxu0 0
        %946 = vmatpush1.bf16.msra.mxu0 %v925
        %947 = vmatprep.subr.bf16.mxu0 0
        %948 = vmatpush1.bf16.msra.mxu0 %v926
        %949 = vmatprep.subr.bf16.mxu0 0
        %950 = vmatpush1.bf16.msra.mxu0 %v927
        %951 = vmatprep.subr.bf16.mxu0 0
        %952 = vmatpush1.bf16.msra.mxu0 %v928
        %953 = vmatprep.subr.bf16.mxu0 0
        %954 = vmatpush1.bf16.msra.mxu0 0
        %955 = vmatprep.subr.bf16.mxu0 0
        %956 = vmatpush1.bf16.msra.mxu0 0
        %957 = vmatprep.subr.bf16.mxu0 0
        %958 = vmatpush1.bf16.msra.mxu0 0
        %959 = vmatprep.subr.bf16.mxu0 0
        %960 = vmatpush1.bf16.msra.mxu0 0
        %961 = vmatprep.subr.bf16.mxu0 0
        %962 = vmatpush1.bf16.msra.mxu0 0
        %963 = vmatprep.subr.bf16.mxu0 0
        %964 = vmatpush1.bf16.msra.mxu0 0
        %965 = vmatprep.subr.bf16.mxu0 0
        %966 = vmatpush1.bf16.msra.mxu0 0
        %967 = vmatprep.subr.bf16.mxu0 0
        %968 = vmatpush1.bf16.msra.mxu0 0
        %969 = vmatprep.mubr.bf16.mxu0 0
        %970 = vmatmul.mubr.bf16.gmra.mrb[0].mxu0 %v874
        %v971 = vpop.f32.mrb[0].mxu0
        %v972 = vadd.f32 %v887, %v971
        %v973 = vpop.f32.mrb[0].mxu0
        %v974 = vpop.f32.mrb[0].mxu0
        %v975 = vadd.f32 %v887, %v974
        %v976 = vpop.f32.mrb[0].mxu0
        %977 = vmatprep.mubr.bf16.mxu0 0
        %978 = vmatmul.mubr.bf16.gmra.mrb[0].mxu0 %v875
        %v979 = vpop.f32.mrb[0].mxu0
        %v980 = vadd.f32 %v887, %v979
        %v981 = vpop.f32.mrb[0].mxu0
        %v982 = vpop.f32.mrb[0].mxu0
        %v983 = vadd.f32 %v887, %v982
        %v984 = vpop.f32.mrb[0].mxu0
        %985 = vmatprep.mubr.bf16.mxu0 0
        %986 = vmatmul.mubr.bf16.gmra.mrb[0].mxu0 %v876
        %v987 = vpop.f32.mrb[0].mxu0
        %v988 = vadd.f32 %v887, %v987
        %v989 = vpop.f32.mrb[0].mxu0
        %v990 = vpop.f32.mrb[0].mxu0
        %v991 = vadd.f32 %v887, %v990
        %v992 = vpop.f32.mrb[0].mxu0
        %993 = vmatprep.mubr.bf16.mxu0 0
        %994 = vmatmul.mubr.bf16.gmra.mrb[0].mxu0 %v877
        %v995 = vpop.f32.mrb[0].mxu0
        %v996 = vadd.f32 %v887, %v995
        %v997 = vpop.f32.mrb[0].mxu0
        %v998 = vpop.f32.mrb[0].mxu0
        %v999 = vadd.f32 %v887, %v998
        %v1000 = vpop.f32.mrb[0].mxu0
        %1001 = vmatprep.mubr.bf16.mxu0 0
        %1002 = vmatmul.mubr.bf16.gmra.mrb[0].mxu0 %v878
        %v1003 = vpop.f32.mrb[0].mxu0
        %v1004 = vadd.f32 %v887, %v1003
        %v1005 = vpop.f32.mrb[0].mxu0
        %v1006 = vpop.f32.mrb[0].mxu0
        %v1007 = vadd.f32 %v887, %v1006
        %v1008 = vpop.f32.mrb[0].mxu0
        %1009 = vmatprep.mubr.bf16.mxu0 0
        %1010 = vmatmul.mubr.bf16.gmra.mrb[0].mxu0 %v879
        %v1011 = vpop.f32.mrb[0].mxu0
        %v1012 = vadd.f32 %v887, %v1011
        %v1013 = vpop.f32.mrb[0].mxu0
        %v1014 = vpop.f32.mrb[0].mxu0
        %v1015 = vadd.f32 %v887, %v1014
        %v1016 = vpop.f32.mrb[0].mxu0
        %1017 = vmatprep.mubr.bf16.mxu0 0
        %1018 = vmatmul.mubr.bf16.gmra.mrb[0].mxu0 %v880
        %v1019 = vpop.f32.mrb[0].mxu0
        %v1020 = vadd.f32 %v887, %v1019
        %v1021 = vpop.f32.mrb[0].mxu0
        %v1022 = vpop.f32.mrb[0].mxu0
        %v1023 = vadd.f32 %v887, %v1022
        %v1024 = vpop.f32.mrb[0].mxu0
        %1025 = vmatprep.mubr.bf16.mxu0 0
        %1026 = vmatmul.mubr.bf16.gmra.mrb[0].mxu0 %v881
        %v1027 = vpop.f32.mrb[0].mxu0
        %v1028 = vadd.f32 %v887, %v1027
        %v1029 = vpop.f32.mrb[0].mxu0
        %v1030 = vpop.f32.mrb[0].mxu0
        %v1031 = vadd.f32 %v887, %v1030
        %v1032 = vpop.f32.mrb[0].mxu0
        %1033 = vdwg.mxu0
        %v1034 = vtanh.pop %v972
        %v1035 = vtanh.pop %v975
        %v1036 = vtanh.pop %v980
        %v1037 = vtanh.pop %v983
        %v1038 = vtanh.pop %v988
        %v1039 = vtanh.pop %v991
        %v1040 = vtanh.pop %v996
        %v1041 = vtanh.pop %v999
        %v1042 = vtanh.pop %v1004
        %v1043 = vtanh.pop %v1007
        %v1044 = vtanh.pop %v1012
        %v1045 = vtanh.pop %v1015
        %v1046 = vtanh.pop %v1020
        %v1047 = vtanh.pop %v1023
        %v1048 = vtanh.pop %v1028
        %v1049 = vtanh.pop %v1031
        %v1050 = vld [vmem:[#allocation11] sm:$0xf]
        %v1051 = vld [vmem:[#allocation11 + $0x4] sm:$0xf]
        %v1052 = vld [vmem:[#allocation11 + $0x8] sm:$0xf]
        %v1053 = vld [vmem:[#allocation11 + $0xc] sm:$0xf]
        %v1054 = vld [vmem:[#allocation11 + $0x10] sm:$0xf]
        %v1055 = vld [vmem:[#allocation11 + $0x14] sm:$0xf]
        %v1056 = vld [vmem:[#allocation11 + $0x18] sm:$0xf]
        %v1057 = vld [vmem:[#allocation11 + $0x1c] sm:$0xf]
        %v1058 = vld [vmem:[#allocation11 + $0x20] sm:$0xf]
        %v1059 = vld [vmem:[#allocation11 + $0x24] sm:$0xf]
        %v1060 = vld [vmem:[#allocation11 + $0x28] sm:$0xf]
        %v1061 = vld [vmem:[#allocation11 + $0x2c] sm:$0xf]
        %v1062 = vld [vmem:[#allocation11 + $0x30] sm:$0xf]
        %v1063 = vld [vmem:[#allocation11 + $0x34] sm:$0xf]
        %v1064 = vld [vmem:[#allocation11 + $0x38] sm:$0xf]
        %v1065 = vld [vmem:[#allocation11 + $0x3c] sm:$0xf]
        %v1066 = vpack.c.bf16 %v1035, %v1034
        %v1067 = vpack.c.bf16 %v1037, %v1036
        %v1068 = vpack.c.bf16 %v1039, %v1038
        %v1069 = vpack.c.bf16 %v1041, %v1040
        %v1070 = vpack.c.bf16 %v1043, %v1042
        %v1071 = vpack.c.bf16 %v1045, %v1044
        %v1072 = vpack.c.bf16 %v1047, %v1046
        %v1073 = vpack.c.bf16 %v1049, %v1048
        %v1074 = vld [vmem:[%s8] sm:$0x1]
        %v1076 = vlaneseq
        %v1077 = vshrl.u32 %v1076, 7
        %v1078 = vsub.s32 0, %v1077
        %v1079 = vrot.slane %v1074, %v1078
        %v1097 = vunpack.c.l.b16 %v1050
        %v1098 = vunpack.c.l.b16 %v1051
        %v1099 = vunpack.c.l.b16 %v1052
        %v1100 = vunpack.c.l.b16 %v1053
        %v1101 = vunpack.c.l.b16 %v1054
        %v1102 = vunpack.c.l.b16 %v1055
        %v1103 = vunpack.c.l.b16 %v1056
        %v1104 = vunpack.c.l.b16 %v1057
        %v1105 = vunpack.c.l.b16 %v1058
        %v1106 = vunpack.c.l.b16 %v1059
        %v1107 = vunpack.c.l.b16 %v1060
        %v1108 = vunpack.c.l.b16 %v1061
        %v1109 = vunpack.c.l.b16 %v1062
        %v1110 = vunpack.c.l.b16 %v1063
        %v1111 = vunpack.c.l.b16 %v1064
        %v1112 = vunpack.c.l.b16 %v1065
        %v1113 = vpack.c.b16 %v1098, %v1097
        %v1114 = vpack.c.b16 %v1100, %v1099
        %v1115 = vpack.c.b16 %v1102, %v1101
        %v1116 = vpack.c.b16 %v1104, %v1103
        %v1117 = vpack.c.b16 %v1106, %v1105
        %v1118 = vpack.c.b16 %v1108, %v1107
        %v1119 = vpack.c.b16 %v1110, %v1109
        %v1120 = vpack.c.b16 %v1112, %v1111
        %1129 = vmatprep.subr.bf16.mxu0 0
        %1130 = vmatpush1.bf16.msra.mxu0 %v1113
        %1131 = vmatprep.subr.bf16.mxu0 0
        %1132 = vmatpush1.bf16.msra.mxu0 %v1114
        %1133 = vmatprep.subr.bf16.mxu0 0
        %1134 = vmatpush1.bf16.msra.mxu0 %v1115
        %1135 = vmatprep.subr.bf16.mxu0 0
        %1136 = vmatpush1.bf16.msra.mxu0 %v1116
        %1137 = vmatprep.subr.bf16.mxu0 0
        %1138 = vmatpush1.bf16.msra.mxu0 %v1117
        %1139 = vmatprep.subr.bf16.mxu0 0
        %1140 = vmatpush1.bf16.msra.mxu0 %v1118
        %1141 = vmatprep.subr.bf16.mxu0 0
        %1142 = vmatpush1.bf16.msra.mxu0 %v1119
        %1143 = vmatprep.subr.bf16.mxu0 0
        %1144 = vmatpush1.bf16.msra.mxu0 %v1120
        %1145 = vmatprep.subr.bf16.mxu0 0
        %1146 = vmatpush1.bf16.msra.mxu0 0
        %1147 = vmatprep.subr.bf16.mxu0 0
        %1148 = vmatpush1.bf16.msra.mxu0 0
        %1149 = vmatprep.subr.bf16.mxu0 0
        %1150 = vmatpush1.bf16.msra.mxu0 0
        %1151 = vmatprep.subr.bf16.mxu0 0
        %1152 = vmatpush1.bf16.msra.mxu0 0
        %1153 = vmatprep.subr.bf16.mxu0 0
        %1154 = vmatpush1.bf16.msra.mxu0 0
        %1155 = vmatprep.subr.bf16.mxu0 0
        %1156 = vmatpush1.bf16.msra.mxu0 0
        %1157 = vmatprep.subr.bf16.mxu0 0
        %1158 = vmatpush1.bf16.msra.mxu0 0
        %1159 = vmatprep.subr.bf16.mxu0 0
        %1160 = vmatpush1.bf16.msra.mxu0 0
        %1161 = vmatprep.mubr.bf16.mxu0 0
        %1162 = vmatmul.mubr.bf16.gmra.mrb[0].mxu0 %v1066
        %v1163 = vpop.f32.mrb[0].mxu0
        %v1164 = vadd.f32 %v1079, %v1163
        %v1165 = vpop.f32.mrb[0].mxu0
        %v1166 = vpop.f32.mrb[0].mxu0
        %v1167 = vadd.f32 %v1079, %v1166
        %v1168 = vpop.f32.mrb[0].mxu0
        %1169 = vmatprep.mubr.bf16.mxu0 0
        %1170 = vmatmul.mubr.bf16.gmra.mrb[0].mxu0 %v1067
        %v1171 = vpop.f32.mrb[0].mxu0
        %v1172 = vadd.f32 %v1079, %v1171
        %v1173 = vpop.f32.mrb[0].mxu0
        %v1174 = vpop.f32.mrb[0].mxu0
        %v1175 = vadd.f32 %v1079, %v1174
        %v1176 = vpop.f32.mrb[0].mxu0
        %1177 = vmatprep.mubr.bf16.mxu0 0
        %1178 = vmatmul.mubr.bf16.gmra.mrb[0].mxu0 %v1068
        %v1179 = vpop.f32.mrb[0].mxu0
        %v1180 = vadd.f32 %v1079, %v1179
        %v1181 = vpop.f32.mrb[0].mxu0
        %v1182 = vpop.f32.mrb[0].mxu0
        %v1183 = vadd.f32 %v1079, %v1182
        %v1184 = vpop.f32.mrb[0].mxu0
        %1185 = vmatprep.mubr.bf16.mxu0 0
        %1186 = vmatmul.mubr.bf16.gmra.mrb[0].mxu0 %v1069
        %v1187 = vpop.f32.mrb[0].mxu0
        %v1188 = vadd.f32 %v1079, %v1187
        %v1189 = vpop.f32.mrb[0].mxu0
        %v1190 = vpop.f32.mrb[0].mxu0
        %v1191 = vadd.f32 %v1079, %v1190
        %v1192 = vpop.f32.mrb[0].mxu0
        %1193 = vmatprep.mubr.bf16.mxu0 0
        %1194 = vmatmul.mubr.bf16.gmra.mrb[0].mxu0 %v1070
        %v1195 = vpop.f32.mrb[0].mxu0
        %v1196 = vadd.f32 %v1079, %v1195
        %v1197 = vpop.f32.mrb[0].mxu0
        %v1198 = vpop.f32.mrb[0].mxu0
        %v1199 = vadd.f32 %v1079, %v1198
        %v1200 = vpop.f32.mrb[0].mxu0
        %1201 = vmatprep.mubr.bf16.mxu0 0
        %1202 = vmatmul.mubr.bf16.gmra.mrb[0].mxu0 %v1071
        %v1203 = vpop.f32.mrb[0].mxu0
        %v1204 = vadd.f32 %v1079, %v1203
        %v1205 = vpop.f32.mrb[0].mxu0
        %v1206 = vpop.f32.mrb[0].mxu0
        %v1207 = vadd.f32 %v1079, %v1206
        %v1208 = vpop.f32.mrb[0].mxu0
        %1209 = vmatprep.mubr.bf16.mxu0 0
        %1210 = vmatmul.mubr.bf16.gmra.mrb[0].mxu0 %v1072
        %v1211 = vpop.f32.mrb[0].mxu0
        %v1212 = vadd.f32 %v1079, %v1211
        %v1213 = vpop.f32.mrb[0].mxu0
        %v1214 = vpop.f32.mrb[0].mxu0
        %v1215 = vadd.f32 %v1079, %v1214
        %v1216 = vpop.f32.mrb[0].mxu0
        %1217 = vmatprep.mubr.bf16.mxu0 0
        %1218 = vmatmul.mubr.bf16.gmra.mrb[0].mxu0 %v1073
        %v1219 = vpop.f32.mrb[0].mxu0
        %v1220 = vadd.f32 %v1079, %v1219
        %v1221 = vpop.f32.mrb[0].mxu0
        %v1222 = vpop.f32.mrb[0].mxu0
        %v1223 = vadd.f32 %v1079, %v1222
        %v1224 = vpop.f32.mrb[0].mxu0
        %1225 = vdwg.mxu0
        %v1226 = vld [vmem:[#allocation13] sm:$0xf]
        %v1227 = vld [vmem:[#allocation13 + $0x4] sm:$0xf]
        %v1228 = vld [vmem:[#allocation13 + $0x8] sm:$0xf]
        %v1229 = vld [vmem:[#allocation13 + $0xc] sm:$0xf]
        %v1230 = vld [vmem:[#allocation13 + $0x10] sm:$0xf]
        %v1231 = vld [vmem:[#allocation13 + $0x14] sm:$0xf]
        %v1232 = vld [vmem:[#allocation13 + $0x18] sm:$0xf]
        %v1233 = vld [vmem:[#allocation13 + $0x1c] sm:$0xf]
        %v1234 = vld [vmem:[#allocation13 + $0x20] sm:$0xf]
        %v1235 = vld [vmem:[#allocation13 + $0x24] sm:$0xf]
        %v1236 = vld [vmem:[#allocation13 + $0x28] sm:$0xf]
        %v1237 = vld [vmem:[#allocation13 + $0x2c] sm:$0xf]
        %v1238 = vld [vmem:[#allocation13 + $0x30] sm:$0xf]
        %v1239 = vld [vmem:[#allocation13 + $0x34] sm:$0xf]
        %v1240 = vld [vmem:[#allocation13 + $0x38] sm:$0xf]
        %v1241 = vld [vmem:[#allocation13 + $0x3c] sm:$0xf]
        %v1242 = vpack.c.bf16 %v1167, %v1164
        %v1243 = vpack.c.bf16 %v1175, %v1172
        %v1244 = vpack.c.bf16 %v1183, %v1180
        %v1245 = vpack.c.bf16 %v1191, %v1188
        %v1246 = vpack.c.bf16 %v1199, %v1196
        %v1247 = vpack.c.bf16 %v1207, %v1204
        %v1248 = vpack.c.bf16 %v1215, %v1212
        %v1249 = vpack.c.bf16 %v1223, %v1220
        %v1250 = vld [vmem:[%s10] sm:$0x1]
        %v1252 = vlaneseq
        %v1253 = vshrl.u32 %v1252, 7
        %v1254 = vsub.s32 0, %v1253
        %v1255 = vrot.slane %v1250, %v1254
        %v1273 = vunpack.c.l.b16 %v1226
        %v1274 = vunpack.c.l.b16 %v1227
        %v1275 = vunpack.c.l.b16 %v1228
        %v1276 = vunpack.c.l.b16 %v1229
        %v1277 = vunpack.c.l.b16 %v1230
        %v1278 = vunpack.c.l.b16 %v1231
        %v1279 = vunpack.c.l.b16 %v1232
        %v1280 = vunpack.c.l.b16 %v1233
        %v1281 = vunpack.c.l.b16 %v1234
        %v1282 = vunpack.c.l.b16 %v1235
        %v1283 = vunpack.c.l.b16 %v1236
        %v1284 = vunpack.c.l.b16 %v1237
        %v1285 = vunpack.c.l.b16 %v1238
        %v1286 = vunpack.c.l.b16 %v1239
        %v1287 = vunpack.c.l.b16 %v1240
        %v1288 = vunpack.c.l.b16 %v1241
        %v1289 = vpack.c.b16 %v1274, %v1273
        %v1290 = vpack.c.b16 %v1276, %v1275
        %v1291 = vpack.c.b16 %v1278, %v1277
        %v1292 = vpack.c.b16 %v1280, %v1279
        %v1293 = vpack.c.b16 %v1282, %v1281
        %v1294 = vpack.c.b16 %v1284, %v1283
        %v1295 = vpack.c.b16 %v1286, %v1285
        %v1296 = vpack.c.b16 %v1288, %v1287
        %1305 = vmatprep.subr.bf16.mxu0 0
        %1306 = vmatpush1.bf16.msra.mxu0 %v1289
        %1307 = vmatprep.subr.bf16.mxu0 0
        %1308 = vmatpush1.bf16.msra.mxu0 %v1290
        %1309 = vmatprep.subr.bf16.mxu0 0
        %1310 = vmatpush1.bf16.msra.mxu0 %v1291
        %1311 = vmatprep.subr.bf16.mxu0 0
        %1312 = vmatpush1.bf16.msra.mxu0 %v1292
        %1313 = vmatprep.subr.bf16.mxu0 0
        %1314 = vmatpush1.bf16.msra.mxu0 %v1293
        %1315 = vmatprep.subr.bf16.mxu0 0
        %1316 = vmatpush1.bf16.msra.mxu0 %v1294
        %1317 = vmatprep.subr.bf16.mxu0 0
        %1318 = vmatpush1.bf16.msra.mxu0 %v1295
        %1319 = vmatprep.subr.bf16.mxu0 0
        %1320 = vmatpush1.bf16.msra.mxu0 %v1296
        %1321 = vmatprep.subr.bf16.mxu0 0
        %1322 = vmatpush1.bf16.msra.mxu0 0
        %1323 = vmatprep.subr.bf16.mxu0 0
        %1324 = vmatpush1.bf16.msra.mxu0 0
        %1325 = vmatprep.subr.bf16.mxu0 0
        %1326 = vmatpush1.bf16.msra.mxu0 0
        %1327 = vmatprep.subr.bf16.mxu0 0
        %1328 = vmatpush1.bf16.msra.mxu0 0
        %1329 = vmatprep.subr.bf16.mxu0 0
        %1330 = vmatpush1.bf16.msra.mxu0 0
        %1331 = vmatprep.subr.bf16.mxu0 0
        %1332 = vmatpush1.bf16.msra.mxu0 0
        %1333 = vmatprep.subr.bf16.mxu0 0
        %1334 = vmatpush1.bf16.msra.mxu0 0
        %1335 = vmatprep.subr.bf16.mxu0 0
        %1336 = vmatpush1.bf16.msra.mxu0 0
        %1337 = vmatprep.mubr.bf16.mxu0 0
        %1338 = vmatmul.mubr.bf16.gmra.mrb[0].mxu0 %v1242
        %v1339 = vpop.f32.mrb[0].mxu0
        %v1340 = vadd.f32 %v1255, %v1339
        %v1341 = vpop.f32.mrb[0].mxu0
        %v1342 = vpop.f32.mrb[0].mxu0
        %v1343 = vadd.f32 %v1255, %v1342
        %v1344 = vpop.f32.mrb[0].mxu0
        %1345 = vmatprep.mubr.bf16.mxu0 0
        %1346 = vmatmul.mubr.bf16.gmra.mrb[0].mxu0 %v1243
        %v1347 = vpop.f32.mrb[0].mxu0
        %v1348 = vadd.f32 %v1255, %v1347
        %v1349 = vpop.f32.mrb[0].mxu0
        %v1350 = vpop.f32.mrb[0].mxu0
        %v1351 = vadd.f32 %v1255, %v1350
        %v1352 = vpop.f32.mrb[0].mxu0
        %1353 = vmatprep.mubr.bf16.mxu0 0
        %1354 = vmatmul.mubr.bf16.gmra.mrb[0].mxu0 %v1244
        %v1355 = vpop.f32.mrb[0].mxu0
        %v1356 = vadd.f32 %v1255, %v1355
        %v1357 = vpop.f32.mrb[0].mxu0
        %v1358 = vpop.f32.mrb[0].mxu0
        %v1359 = vadd.f32 %v1255, %v1358
        %v1360 = vpop.f32.mrb[0].mxu0
        %1361 = vmatprep.mubr.bf16.mxu0 0
        %1362 = vmatmul.mubr.bf16.gmra.mrb[0].mxu0 %v1245
        %v1363 = vpop.f32.mrb[0].mxu0
        %v1364 = vadd.f32 %v1255, %v1363
        %v1365 = vpop.f32.mrb[0].mxu0
        %v1366 = vpop.f32.mrb[0].mxu0
        %v1367 = vadd.f32 %v1255, %v1366
        %v1368 = vpop.f32.mrb[0].mxu0
        %1369 = vmatprep.mubr.bf16.mxu0 0
        %1370 = vmatmul.mubr.bf16.gmra.mrb[0].mxu0 %v1246
        %v1371 = vpop.f32.mrb[0].mxu0
        %v1372 = vadd.f32 %v1255, %v1371
        %v1373 = vpop.f32.mrb[0].mxu0
        %v1374 = vpop.f32.mrb[0].mxu0
        %v1375 = vadd.f32 %v1255, %v1374
        %v1376 = vpop.f32.mrb[0].mxu0
        %1377 = vmatprep.mubr.bf16.mxu0 0
        %1378 = vmatmul.mubr.bf16.gmra.mrb[0].mxu0 %v1247
        %v1379 = vpop.f32.mrb[0].mxu0
        %v1380 = vadd.f32 %v1255, %v1379
        %v1381 = vpop.f32.mrb[0].mxu0
        %v1382 = vpop.f32.mrb[0].mxu0
        %v1383 = vadd.f32 %v1255, %v1382
        %v1384 = vpop.f32.mrb[0].mxu0
        %1385 = vmatprep.mubr.bf16.mxu0 0
        %1386 = vmatmul.mubr.bf16.gmra.mrb[0].mxu0 %v1248
        %v1387 = vpop.f32.mrb[0].mxu0
        %v1388 = vadd.f32 %v1255, %v1387
        %v1389 = vpop.f32.mrb[0].mxu0
        %v1390 = vpop.f32.mrb[0].mxu0
        %v1391 = vadd.f32 %v1255, %v1390
        %v1392 = vpop.f32.mrb[0].mxu0
        %1393 = vmatprep.mubr.bf16.mxu0 0
        %1394 = vmatmul.mubr.bf16.gmra.mrb[0].mxu0 %v1249
        %v1395 = vpop.f32.mrb[0].mxu0
        %v1396 = vadd.f32 %v1255, %v1395
        %v1397 = vpop.f32.mrb[0].mxu0
        %v1398 = vpop.f32.mrb[0].mxu0
        %v1399 = vadd.f32 %v1255, %v1398
        %v1400 = vpop.f32.mrb[0].mxu0
        %1401 = vdwg.mxu0
        %v1402 = vtanh.pop %v1340
        %v1403 = vtanh.pop %v1343
        %v1404 = vtanh.pop %v1348
        %v1405 = vtanh.pop %v1351
        %v1406 = vtanh.pop %v1356
        %v1407 = vtanh.pop %v1359
        %v1408 = vtanh.pop %v1364
        %v1409 = vtanh.pop %v1367
        %v1410 = vtanh.pop %v1372
        %v1411 = vtanh.pop %v1375
        %v1412 = vtanh.pop %v1380
        %v1413 = vtanh.pop %v1383
        %v1414 = vtanh.pop %v1388
        %v1415 = vtanh.pop %v1391
        %v1416 = vtanh.pop %v1396
        %v1417 = vtanh.pop %v1399
        %v1418 = vld [vmem:[#allocation14] sm:$0xf]
        %v1419 = vld [vmem:[#allocation14 + $0x4] sm:$0xf]
        %v1420 = vld [vmem:[#allocation14 + $0x8] sm:$0xf]
        %v1421 = vld [vmem:[#allocation14 + $0xc] sm:$0xf]
        %v1422 = vld [vmem:[#allocation14 + $0x10] sm:$0xf]
        %v1423 = vld [vmem:[#allocation14 + $0x14] sm:$0xf]
        %v1424 = vld [vmem:[#allocation14 + $0x18] sm:$0xf]
        %v1425 = vld [vmem:[#allocation14 + $0x1c] sm:$0xf]
        %v1426 = vld [vmem:[#allocation14 + $0x20] sm:$0xf]
        %v1427 = vld [vmem:[#allocation14 + $0x24] sm:$0xf]
        %v1428 = vld [vmem:[#allocation14 + $0x28] sm:$0xf]
        %v1429 = vld [vmem:[#allocation14 + $0x2c] sm:$0xf]
        %v1430 = vld [vmem:[#allocation14 + $0x30] sm:$0xf]
        %v1431 = vld [vmem:[#allocation14 + $0x34] sm:$0xf]
        %v1432 = vld [vmem:[#allocation14 + $0x38] sm:$0xf]
        %v1433 = vld [vmem:[#allocation14 + $0x3c] sm:$0xf]
        %v1434 = vpack.c.bf16 %v1403, %v1402
        %v1435 = vpack.c.bf16 %v1405, %v1404
        %v1436 = vpack.c.bf16 %v1407, %v1406
        %v1437 = vpack.c.bf16 %v1409, %v1408
        %v1438 = vpack.c.bf16 %v1411, %v1410
        %v1439 = vpack.c.bf16 %v1413, %v1412
        %v1440 = vpack.c.bf16 %v1415, %v1414
        %v1441 = vpack.c.bf16 %v1417, %v1416
        %v1442 = vld [vmem:[%s12] sm:$0x1]
        %v1444 = vlaneseq
        %v1445 = vshrl.u32 %v1444, 7
        %v1446 = vsub.s32 0, %v1445
        %v1447 = vrot.slane %v1442, %v1446
        %v1465 = vunpack.c.l.b16 %v1418
        %v1466 = vunpack.c.l.b16 %v1419
        %v1467 = vunpack.c.l.b16 %v1420
        %v1468 = vunpack.c.l.b16 %v1421
        %v1469 = vunpack.c.l.b16 %v1422
        %v1470 = vunpack.c.l.b16 %v1423
        %v1471 = vunpack.c.l.b16 %v1424
        %v1472 = vunpack.c.l.b16 %v1425
        %v1473 = vunpack.c.l.b16 %v1426
        %v1474 = vunpack.c.l.b16 %v1427
        %v1475 = vunpack.c.l.b16 %v1428
        %v1476 = vunpack.c.l.b16 %v1429
        %v1477 = vunpack.c.l.b16 %v1430
        %v1478 = vunpack.c.l.b16 %v1431
        %v1479 = vunpack.c.l.b16 %v1432
        %v1480 = vunpack.c.l.b16 %v1433
        %v1481 = vpack.c.b16 %v1466, %v1465
        %v1482 = vpack.c.b16 %v1468, %v1467
        %v1483 = vpack.c.b16 %v1470, %v1469
        %v1484 = vpack.c.b16 %v1472, %v1471
        %v1485 = vpack.c.b16 %v1474, %v1473
        %v1486 = vpack.c.b16 %v1476, %v1475
        %v1487 = vpack.c.b16 %v1478, %v1477
        %v1488 = vpack.c.b16 %v1480, %v1479
        %1497 = vmatprep.subr.bf16.mxu0 0
        %1498 = vmatpush1.bf16.msra.mxu0 %v1481
        %1499 = vmatprep.subr.bf16.mxu0 0
        %1500 = vmatpush1.bf16.msra.mxu0 %v1482
        %1501 = vmatprep.subr.bf16.mxu0 0
        %1502 = vmatpush1.bf16.msra.mxu0 %v1483
        %1503 = vmatprep.subr.bf16.mxu0 0
        %1504 = vmatpush1.bf16.msra.mxu0 %v1484
        %1505 = vmatprep.subr.bf16.mxu0 0
        %1506 = vmatpush1.bf16.msra.mxu0 %v1485
        %1507 = vmatprep.subr.bf16.mxu0 0
        %1508 = vmatpush1.bf16.msra.mxu0 %v1486
        %1509 = vmatprep.subr.bf16.mxu0 0
        %1510 = vmatpush1.bf16.msra.mxu0 %v1487
        %1511 = vmatprep.subr.bf16.mxu0 0
        %1512 = vmatpush1.bf16.msra.mxu0 %v1488
        %1513 = vmatprep.subr.bf16.mxu0 0
        %1514 = vmatpush1.bf16.msra.mxu0 0
        %1515 = vmatprep.subr.bf16.mxu0 0
        %1516 = vmatpush1.bf16.msra.mxu0 0
        %1517 = vmatprep.subr.bf16.mxu0 0
        %1518 = vmatpush1.bf16.msra.mxu0 0
        %1519 = vmatprep.subr.bf16.mxu0 0
        %1520 = vmatpush1.bf16.msra.mxu0 0
        %1521 = vmatprep.subr.bf16.mxu0 0
        %1522 = vmatpush1.bf16.msra.mxu0 0
        %1523 = vmatprep.subr.bf16.mxu0 0
        %1524 = vmatpush1.bf16.msra.mxu0 0
        %1525 = vmatprep.subr.bf16.mxu0 0
        %1526 = vmatpush1.bf16.msra.mxu0 0
        %1527 = vmatprep.subr.bf16.mxu0 0
        %1528 = vmatpush1.bf16.msra.mxu0 0
        %1529 = vmatprep.mubr.bf16.mxu0 0
        %1530 = vmatmul.mubr.bf16.gmra.mrb[0].mxu0 %v1434
        %v1531 = vpop.f32.mrb[0].mxu0
        %v1532 = vadd.f32 %v1447, %v1531
        %v1533 = vpop.f32.mrb[0].mxu0
        %v1534 = vpop.f32.mrb[0].mxu0
        %v1535 = vadd.f32 %v1447, %v1534
        %v1536 = vpop.f32.mrb[0].mxu0
        %1537 = vmatprep.mubr.bf16.mxu0 0
        %1538 = vmatmul.mubr.bf16.gmra.mrb[0].mxu0 %v1435
        %v1539 = vpop.f32.mrb[0].mxu0
        %v1540 = vadd.f32 %v1447, %v1539
        %v1541 = vpop.f32.mrb[0].mxu0
        %v1542 = vpop.f32.mrb[0].mxu0
        %v1543 = vadd.f32 %v1447, %v1542
        %v1544 = vpop.f32.mrb[0].mxu0
        %1545 = vmatprep.mubr.bf16.mxu0 0
        %1546 = vmatmul.mubr.bf16.gmra.mrb[0].mxu0 %v1436
        %v1547 = vpop.f32.mrb[0].mxu0
        %v1548 = vadd.f32 %v1447, %v1547
        %v1549 = vpop.f32.mrb[0].mxu0
        %v1550 = vpop.f32.mrb[0].mxu0
        %v1551 = vadd.f32 %v1447, %v1550
        %v1552 = vpop.f32.mrb[0].mxu0
        %1553 = vmatprep.mubr.bf16.mxu0 0
        %1554 = vmatmul.mubr.bf16.gmra.mrb[0].mxu0 %v1437
        %v1555 = vpop.f32.mrb[0].mxu0
        %v1556 = vadd.f32 %v1447, %v1555
        %v1557 = vpop.f32.mrb[0].mxu0
        %v1558 = vpop.f32.mrb[0].mxu0
        %v1559 = vadd.f32 %v1447, %v1558
        %v1560 = vpop.f32.mrb[0].mxu0
        %1561 = vmatprep.mubr.bf16.mxu0 0
        %1562 = vmatmul.mubr.bf16.gmra.mrb[0].mxu0 %v1438
        %v1563 = vpop.f32.mrb[0].mxu0
        %v1564 = vadd.f32 %v1447, %v1563
        %v1565 = vpop.f32.mrb[0].mxu0
        %v1566 = vpop.f32.mrb[0].mxu0
        %v1567 = vadd.f32 %v1447, %v1566
        %v1568 = vpop.f32.mrb[0].mxu0
        %1569 = vmatprep.mubr.bf16.mxu0 0
        %1570 = vmatmul.mubr.bf16.gmra.mrb[0].mxu0 %v1439
        %v1571 = vpop.f32.mrb[0].mxu0
        %v1572 = vadd.f32 %v1447, %v1571
        %v1573 = vpop.f32.mrb[0].mxu0
        %v1574 = vpop.f32.mrb[0].mxu0
        %v1575 = vadd.f32 %v1447, %v1574
        %v1576 = vpop.f32.mrb[0].mxu0
        %1577 = vmatprep.mubr.bf16.mxu0 0
        %1578 = vmatmul.mubr.bf16.gmra.mrb[0].mxu0 %v1440
        %v1579 = vpop.f32.mrb[0].mxu0
        %v1580 = vadd.f32 %v1447, %v1579
        %v1581 = vpop.f32.mrb[0].mxu0
        %v1582 = vpop.f32.mrb[0].mxu0
        %v1583 = vadd.f32 %v1447, %v1582
        %v1584 = vpop.f32.mrb[0].mxu0
        %1585 = vmatprep.mubr.bf16.mxu0 0
        %1586 = vmatmul.mubr.bf16.gmra.mrb[0].mxu0 %v1441
        %v1587 = vpop.f32.mrb[0].mxu0
        %v1588 = vadd.f32 %v1447, %v1587
        %v1589 = vpop.f32.mrb[0].mxu0
        %v1590 = vpop.f32.mrb[0].mxu0
        %v1591 = vadd.f32 %v1447, %v1590
        %v1592 = vpop.f32.mrb[0].mxu0
        %1593 = vdwg.mxu0
        %v1594 = vtanh.pop %v1532
        %v1595 = vtanh.pop %v1535
        %v1596 = vtanh.pop %v1540
        %v1597 = vtanh.pop %v1543
        %v1598 = vtanh.pop %v1548
        %v1599 = vtanh.pop %v1551
        %v1600 = vtanh.pop %v1556
        %v1601 = vtanh.pop %v1559
        %v1602 = vtanh.pop %v1564
        %v1603 = vtanh.pop %v1567
        %v1604 = vtanh.pop %v1572
        %v1605 = vtanh.pop %v1575
        %v1606 = vtanh.pop %v1580
        %v1607 = vtanh.pop %v1583
        %v1608 = vtanh.pop %v1588
        %v1609 = vtanh.pop %v1591
        %v1610 = vld [vmem:[#allocation16] sm:$0xff]
        %v1611 = vld [vmem:[#allocation16 + $0x8] sm:$0xff]
        %v1612 = vld [vmem:[#allocation16 + $0x10] sm:$0xff]
        %v1613 = vld [vmem:[#allocation16 + $0x18] sm:$0xff]
        %v1614 = vld [vmem:[#allocation16 + $0x20] sm:$0xff]
        %v1615 = vld [vmem:[#allocation16 + $0x28] sm:$0xff]
        %v1616 = vld [vmem:[#allocation16 + $0x30] sm:$0xff]
        %v1617 = vld [vmem:[#allocation16 + $0x38] sm:$0xff]
        %v1618 = vld [vmem:[#allocation16 + $0x40] sm:$0xff]
        %v1619 = vld [vmem:[#allocation16 + $0x48] sm:$0xff]
        %v1620 = vld [vmem:[#allocation16 + $0x50] sm:$0xff]
        %v1621 = vld [vmem:[#allocation16 + $0x58] sm:$0xff]
        %v1622 = vld [vmem:[#allocation16 + $0x60] sm:$0xff]
        %v1623 = vld [vmem:[#allocation16 + $0x68] sm:$0xff]
        %v1624 = vld [vmem:[#allocation16 + $0x70] sm:$0xff]
        %v1625 = vld [vmem:[#allocation16 + $0x78] sm:$0xff]
        %v1626 = vpack.c.bf16 %v1595, %v1594
        %v1627 = vpack.c.bf16 %v1597, %v1596
        %v1628 = vpack.c.bf16 %v1599, %v1598
        %v1629 = vpack.c.bf16 %v1601, %v1600
        %v1630 = vpack.c.bf16 %v1603, %v1602
        %v1631 = vpack.c.bf16 %v1605, %v1604
        %v1632 = vpack.c.bf16 %v1607, %v1606
        %v1633 = vpack.c.bf16 %v1609, %v1608
        %v1634 = vld [vmem:[%s14] sm:$0x3]
        %v1636 = vlaneseq
        %v1637 = vshrl.u32 %v1636, 7
        %v1638 = vsub.s32 0, %v1637
        %v1639 = vrot.slane %v1634, %v1638
        %v1640 = vlaneseq
        %v1641 = vshrl.u32 %v1640, 7
        %v1642 = vsub.s32 1, %v1641
        %v1643 = vrot.slane %v1634, %v1642
        %v1662 = vunpack.c.l.b16 %v1610
        %v1663 = vunpack.c.h.b16 %v1610
        %v1664 = vunpack.c.l.b16 %v1611
        %v1665 = vunpack.c.h.b16 %v1611
        %v1666 = vunpack.c.l.b16 %v1612
        %v1667 = vunpack.c.h.b16 %v1612
        %v1668 = vunpack.c.l.b16 %v1613
        %v1669 = vunpack.c.h.b16 %v1613
        %v1670 = vunpack.c.l.b16 %v1614
        %v1671 = vunpack.c.h.b16 %v1614
        %v1672 = vunpack.c.l.b16 %v1615
        %v1673 = vunpack.c.h.b16 %v1615
        %v1674 = vunpack.c.l.b16 %v1616
        %v1675 = vunpack.c.h.b16 %v1616
        %v1676 = vunpack.c.l.b16 %v1617
        %v1677 = vunpack.c.h.b16 %v1617
        %v1678 = vunpack.c.l.b16 %v1618
        %v1679 = vunpack.c.h.b16 %v1618
        %v1680 = vunpack.c.l.b16 %v1619
        %v1681 = vunpack.c.h.b16 %v1619
        %v1682 = vunpack.c.l.b16 %v1620
        %v1683 = vunpack.c.h.b16 %v1620
        %v1684 = vunpack.c.l.b16 %v1621
        %v1685 = vunpack.c.h.b16 %v1621
        %v1686 = vunpack.c.l.b16 %v1622
        %v1687 = vunpack.c.h.b16 %v1622
        %v1688 = vunpack.c.l.b16 %v1623
        %v1689 = vunpack.c.h.b16 %v1623
        %v1690 = vunpack.c.l.b16 %v1624
        %v1691 = vunpack.c.h.b16 %v1624
        %v1692 = vunpack.c.l.b16 %v1625
        %v1693 = vunpack.c.h.b16 %v1625
        %v1694 = vpack.c.b16 %v1664, %v1662
        %v1695 = vpack.c.b16 %v1665, %v1663
        %v1696 = vpack.c.b16 %v1668, %v1666
        %v1697 = vpack.c.b16 %v1669, %v1667
        %v1698 = vpack.c.b16 %v1672, %v1670
        %v1699 = vpack.c.b16 %v1673, %v1671
        %v1700 = vpack.c.b16 %v1676, %v1674
        %v1701 = vpack.c.b16 %v1677, %v1675
        %v1702 = vpack.c.b16 %v1680, %v1678
        %v1703 = vpack.c.b16 %v1681, %v1679
        %v1704 = vpack.c.b16 %v1684, %v1682
        %v1705 = vpack.c.b16 %v1685, %v1683
        %v1706 = vpack.c.b16 %v1688, %v1686
        %v1707 = vpack.c.b16 %v1689, %v1687
        %v1708 = vpack.c.b16 %v1692, %v1690
        %v1709 = vpack.c.b16 %v1693, %v1691
        %1726 = vmatprep.subr.bf16.mxu0 %v1695
        %1727 = vmatpush1.bf16.msra.mxu0 %v1694
        %1728 = vmatprep.subr.bf16.mxu0 %v1697
        %1729 = vmatpush1.bf16.msra.mxu0 %v1696
        %1730 = vmatprep.subr.bf16.mxu0 %v1699
        %1731 = vmatpush1.bf16.msra.mxu0 %v1698
        %1732 = vmatprep.subr.bf16.mxu0 %v1701
        %1733 = vmatpush1.bf16.msra.mxu0 %v1700
        %1734 = vmatprep.subr.bf16.mxu0 %v1703
        %1735 = vmatpush1.bf16.msra.mxu0 %v1702
        %1736 = vmatprep.subr.bf16.mxu0 %v1705
        %1737 = vmatpush1.bf16.msra.mxu0 %v1704
        %1738 = vmatprep.subr.bf16.mxu0 %v1707
        %1739 = vmatpush1.bf16.msra.mxu0 %v1706
        %1740 = vmatprep.subr.bf16.mxu0 %v1709
        %1741 = vmatpush1.bf16.msra.mxu0 %v1708
        %1742 = vmatprep.subr.bf16.mxu0 0
        %1743 = vmatpush1.bf16.msra.mxu0 0
        %1744 = vmatprep.subr.bf16.mxu0 0
        %1745 = vmatpush1.bf16.msra.mxu0 0
        %1746 = vmatprep.subr.bf16.mxu0 0
        %1747 = vmatpush1.bf16.msra.mxu0 0
        %1748 = vmatprep.subr.bf16.mxu0 0
        %1749 = vmatpush1.bf16.msra.mxu0 0
        %1750 = vmatprep.subr.bf16.mxu0 0
        %1751 = vmatpush1.bf16.msra.mxu0 0
        %1752 = vmatprep.subr.bf16.mxu0 0
        %1753 = vmatpush1.bf16.msra.mxu0 0
        %1754 = vmatprep.subr.bf16.mxu0 0
        %1755 = vmatpush1.bf16.msra.mxu0 0
        %1756 = vmatprep.subr.bf16.mxu0 0
        %1757 = vmatpush1.bf16.msra.mxu0 0
        %1758 = vmatprep.mubr.bf16.mxu0 0
        %1759 = vmatmul.mubr.bf16.gmra.mrb[0].mxu0 %v1626
        %v1760 = vpop.f32.mrb[0].mxu0
        %v1761 = vadd.f32 %v1639, %v1760
        %v1762 = vpop.f32.mrb[0].mxu0
        %v1763 = vadd.f32 %v1643, %v1762
        %v1764 = vpop.f32.mrb[0].mxu0
        %v1765 = vadd.f32 %v1639, %v1764
        %v1766 = vpop.f32.mrb[0].mxu0
        %v1767 = vadd.f32 %v1643, %v1766
        %1768 = vmatprep.mubr.bf16.mxu0 0
        %1769 = vmatmul.mubr.bf16.gmra.mrb[0].mxu0 %v1627
        %v1770 = vpop.f32.mrb[0].mxu0
        %v1771 = vadd.f32 %v1639, %v1770
        %v1772 = vpop.f32.mrb[0].mxu0
        %v1773 = vadd.f32 %v1643, %v1772
        %v1774 = vpop.f32.mrb[0].mxu0
        %v1775 = vadd.f32 %v1639, %v1774
        %v1776 = vpop.f32.mrb[0].mxu0
        %v1777 = vadd.f32 %v1643, %v1776
        %1778 = vmatprep.mubr.bf16.mxu0 0
        %1779 = vmatmul.mubr.bf16.gmra.mrb[0].mxu0 %v1628
        %v1780 = vpop.f32.mrb[0].mxu0
        %v1781 = vadd.f32 %v1639, %v1780
        %v1782 = vpop.f32.mrb[0].mxu0
        %v1783 = vadd.f32 %v1643, %v1782
        %v1784 = vpop.f32.mrb[0].mxu0
        %v1785 = vadd.f32 %v1639, %v1784
        %v1786 = vpop.f32.mrb[0].mxu0
        %v1787 = vadd.f32 %v1643, %v1786
        %1788 = vmatprep.mubr.bf16.mxu0 0
        %1789 = vmatmul.mubr.bf16.gmra.mrb[0].mxu0 %v1629
        %v1790 = vpop.f32.mrb[0].mxu0
        %v1791 = vadd.f32 %v1639, %v1790
        %v1792 = vpop.f32.mrb[0].mxu0
        %v1793 = vadd.f32 %v1643, %v1792
        %v1794 = vpop.f32.mrb[0].mxu0
        %v1795 = vadd.f32 %v1639, %v1794
        %v1796 = vpop.f32.mrb[0].mxu0
        %v1797 = vadd.f32 %v1643, %v1796
        %1798 = vmatprep.mubr.bf16.mxu0 0
        %1799 = vmatmul.mubr.bf16.gmra.mrb[0].mxu0 %v1630
        %v1800 = vpop.f32.mrb[0].mxu0
        %v1801 = vadd.f32 %v1639, %v1800
        %v1802 = vpop.f32.mrb[0].mxu0
        %v1803 = vadd.f32 %v1643, %v1802
        %v1804 = vpop.f32.mrb[0].mxu0
        %v1805 = vadd.f32 %v1639, %v1804
        %v1806 = vpop.f32.mrb[0].mxu0
        %v1807 = vadd.f32 %v1643, %v1806
        %1808 = vmatprep.mubr.bf16.mxu0 0
        %1809 = vmatmul.mubr.bf16.gmra.mrb[0].mxu0 %v1631
        %v1810 = vpop.f32.mrb[0].mxu0
        %v1811 = vadd.f32 %v1639, %v1810
        %v1812 = vpop.f32.mrb[0].mxu0
        %v1813 = vadd.f32 %v1643, %v1812
        %v1814 = vpop.f32.mrb[0].mxu0
        %v1815 = vadd.f32 %v1639, %v1814
        %v1816 = vpop.f32.mrb[0].mxu0
        %v1817 = vadd.f32 %v1643, %v1816
        %1818 = vmatprep.mubr.bf16.mxu0 0
        %1819 = vmatmul.mubr.bf16.gmra.mrb[0].mxu0 %v1632
        %v1820 = vpop.f32.mrb[0].mxu0
        %v1821 = vadd.f32 %v1639, %v1820
        %v1822 = vpop.f32.mrb[0].mxu0
        %v1823 = vadd.f32 %v1643, %v1822
        %v1824 = vpop.f32.mrb[0].mxu0
        %v1825 = vadd.f32 %v1639, %v1824
        %v1826 = vpop.f32.mrb[0].mxu0
        %v1827 = vadd.f32 %v1643, %v1826
        %1828 = vmatprep.mubr.bf16.mxu0 0
        %1829 = vmatmul.mubr.bf16.gmra.mrb[0].mxu0 %v1633
        %v1830 = vpop.f32.mrb[0].mxu0
        %v1831 = vadd.f32 %v1639, %v1830
        %v1832 = vpop.f32.mrb[0].mxu0
        %v1833 = vadd.f32 %v1643, %v1832
        %v1834 = vpop.f32.mrb[0].mxu0
        %v1835 = vadd.f32 %v1639, %v1834
        %v1836 = vpop.f32.mrb[0].mxu0
        %v1837 = vadd.f32 %v1643, %v1836
        %1838 = vdwg.mxu0
        %v1839 = vlaneseq
        %v1840 = vand.u32 %v1839, 127
        %v1841 = vadd.s32 %v1840, 128
        %s1842 = sld [smem:[#allocation3]]
        %s1843 = sld [smem:[#allocation4]]
        %v1844 = vstv %s1842
        %vm1845 = vcmp.ge.s32.totalorder %v1840, %v1844
        %vm1846 = vcmp.ge.s32.totalorder %v1841, %v1844
        %v1847 = vstv %s1843
        %vm1848 = vcmp.lt.s32.totalorder %v1840, %v1847
        %vm1849 = vcmp.lt.s32.totalorder %v1841, %v1847
        %vm1850 = vmand %vm1845, %vm1848
        %vm1851 = vmand %vm1846, %vm1849
        %v1852 = vsel %vm1850, 1, 0
        %v1853 = vsel %vm1851, 1, 0
        %vm1854 = vcmp.eq.s32.totalorder %v1852, 1
        %vm1855 = vcmp.eq.s32.totalorder %v1853, 1
        %v1856 = vsel %vm1854, %v1761, -inf
        %v1857 = vsel %vm1855, %v1763, -inf
        %v1858 = vsel %vm1854, %v1765, -inf
        %v1859 = vsel %vm1855, %v1767, -inf
        %v1860 = vsel %vm1854, %v1771, -inf
        %v1861 = vsel %vm1855, %v1773, -inf
        %v1862 = vsel %vm1854, %v1775, -inf
        %v1863 = vsel %vm1855, %v1777, -inf
        %v1864 = vsel %vm1854, %v1781, -inf
        %v1865 = vsel %vm1855, %v1783, -inf
        %v1866 = vsel %vm1854, %v1785, -inf
        %v1867 = vsel %vm1855, %v1787, -inf
        %v1868 = vsel %vm1854, %v1791, -inf
        %v1869 = vsel %vm1855, %v1793, -inf
        %v1870 = vsel %vm1854, %v1795, -inf
        %v1871 = vsel %vm1855, %v1797, -inf
        %v1872 = vsel %vm1854, %v1801, -inf
        %v1873 = vsel %vm1855, %v1803, -inf
        %v1874 = vsel %vm1854, %v1805, -inf
        %v1875 = vsel %vm1855, %v1807, -inf
        %v1876 = vsel %vm1854, %v1811, -inf
        %v1877 = vsel %vm1855, %v1813, -inf
        %v1878 = vsel %vm1854, %v1815, -inf
        %v1879 = vsel %vm1855, %v1817, -inf
        %v1880 = vsel %vm1854, %v1821, -inf
        %v1881 = vsel %vm1855, %v1823, -inf
        %v1882 = vsel %vm1854, %v1825, -inf
        %v1883 = vsel %vm1855, %v1827, -inf
        %v1884 = vsel %vm1854, %v1831, -inf
        %v1885 = vsel %vm1855, %v1833, -inf
        %v1886 = vsel %vm1854, %v1835, -inf
        %v1887 = vsel %vm1855, %v1837, -inf
        %v1888 = vmax.f32 %v1856, %v1857
        %1889 = vmax.xlane.f32.xlu0 %v1888
        %v1890 = vpop.xlane.xlu0 %1889
        %v1891 = vmax.f32 %v1858, %v1859
        %1892 = vmax.xlane.f32.xlu0 %v1891
        %v1893 = vpop.xlane.xlu0 %1892
        %v1894 = vmax.f32 %v1860, %v1861
        %1895 = vmax.xlane.f32.xlu0 %v1894
        %v1896 = vpop.xlane.xlu0 %1895
        %v1897 = vmax.f32 %v1862, %v1863
        %1898 = vmax.xlane.f32.xlu0 %v1897
        %v1899 = vpop.xlane.xlu0 %1898
        %v1900 = vmax.f32 %v1864, %v1865
        %1901 = vmax.xlane.f32.xlu0 %v1900
        %v1902 = vpop.xlane.xlu0 %1901
        %v1903 = vmax.f32 %v1866, %v1867
        %1904 = vmax.xlane.f32.xlu0 %v1903
        %v1905 = vpop.xlane.xlu0 %1904
        %v1906 = vmax.f32 %v1868, %v1869
        %1907 = vmax.xlane.f32.xlu0 %v1906
        %v1908 = vpop.xlane.xlu0 %1907
        %v1909 = vmax.f32 %v1870, %v1871
        %1910 = vmax.xlane.f32.xlu0 %v1909
        %v1911 = vpop.xlane.xlu0 %1910
        %v1912 = vmax.f32 %v1872, %v1873
        %1913 = vmax.xlane.f32.xlu0 %v1912
        %v1914 = vpop.xlane.xlu0 %1913
        %v1915 = vmax.f32 %v1874, %v1875
        %1916 = vmax.xlane.f32.xlu0 %v1915
        %v1917 = vpop.xlane.xlu0 %1916
        %v1918 = vmax.f32 %v1876, %v1877
        %1919 = vmax.xlane.f32.xlu0 %v1918
        %v1920 = vpop.xlane.xlu0 %1919
        %v1921 = vmax.f32 %v1878, %v1879
        %1922 = vmax.xlane.f32.xlu0 %v1921
        %v1923 = vpop.xlane.xlu0 %1922
        %v1924 = vmax.f32 %v1880, %v1881
        %1925 = vmax.xlane.f32.xlu0 %v1924
        %v1926 = vpop.xlane.xlu0 %1925
        %v1927 = vmax.f32 %v1882, %v1883
        %1928 = vmax.xlane.f32.xlu0 %v1927
        %v1929 = vpop.xlane.xlu0 %1928
        %v1930 = vmax.f32 %v1884, %v1885
        %1931 = vmax.xlane.f32.xlu0 %v1930
        %v1932 = vpop.xlane.xlu0 %1931
        %v1933 = vmax.f32 %v1886, %v1887
        %1934 = vmax.xlane.f32.xlu0 %v1933
        %v1935 = vpop.xlane.xlu0 %1934
        %v1936 = vmax.f32 %v1890, -1e+30
        %v1937 = vmax.f32 %v1893, -1e+30
        %v1938 = vmax.f32 %v1896, -1e+30
        %v1939 = vmax.f32 %v1899, -1e+30
        %v1940 = vmax.f32 %v1902, -1e+30
        %v1941 = vmax.f32 %v1905, -1e+30
        %v1942 = vmax.f32 %v1908, -1e+30
        %v1943 = vmax.f32 %v1911, -1e+30
        %v1944 = vmax.f32 %v1914, -1e+30
        %v1945 = vmax.f32 %v1917, -1e+30
        %v1946 = vmax.f32 %v1920, -1e+30
        %v1947 = vmax.f32 %v1923, -1e+30
        %v1948 = vmax.f32 %v1926, -1e+30
        %v1949 = vmax.f32 %v1929, -1e+30
        %v1950 = vmax.f32 %v1932, -1e+30
        %v1951 = vmax.f32 %v1935, -1e+30
        %v1952 = vsub.f32 %v1761, %v1936
        %v1953 = vsub.f32 %v1763, %v1936
        %v1954 = vsub.f32 %v1765, %v1937
        %v1955 = vsub.f32 %v1767, %v1937
        %v1956 = vsub.f32 %v1771, %v1938
        %v1957 = vsub.f32 %v1773, %v1938
        %v1958 = vsub.f32 %v1775, %v1939
        %v1959 = vsub.f32 %v1777, %v1939
        %v1960 = vsub.f32 %v1781, %v1940
        %v1961 = vsub.f32 %v1783, %v1940
        %v1962 = vsub.f32 %v1785, %v1941
        %v1963 = vsub.f32 %v1787, %v1941
        %v1964 = vsub.f32 %v1791, %v1942
        %v1965 = vsub.f32 %v1793, %v1942
        %v1966 = vsub.f32 %v1795, %v1943
        %v1967 = vsub.f32 %v1797, %v1943
        %v1968 = vsub.f32 %v1801, %v1944
        %v1969 = vsub.f32 %v1803, %v1944
        %v1970 = vsub.f32 %v1805, %v1945
        %v1971 = vsub.f32 %v1807, %v1945
        %v1972 = vsub.f32 %v1811, %v1946
        %v1973 = vsub.f32 %v1813, %v1946
        %v1974 = vsub.f32 %v1815, %v1947
        %v1975 = vsub.f32 %v1817, %v1947
        %v1976 = vsub.f32 %v1821, %v1948
        %v1977 = vsub.f32 %v1823, %v1948
        %v1978 = vsub.f32 %v1825, %v1949
        %v1979 = vsub.f32 %v1827, %v1949
        %v1980 = vsub.f32 %v1831, %v1950
        %v1981 = vsub.f32 %v1833, %v1950
        %v1982 = vsub.f32 %v1835, %v1951
        %v1983 = vsub.f32 %v1837, %v1951
        %v1984 = vmul.f32 %v1952, 1.442695
        %v1985 = vpow.pop %v1984
        %v1986 = vmul.f32 %v1953, 1.442695
        %v1987 = vpow.pop %v1986
        %v1988 = vmul.f32 %v1954, 1.442695
        %v1989 = vpow.pop %v1988
        %v1990 = vmul.f32 %v1955, 1.442695
        %v1991 = vpow.pop %v1990
        %v1992 = vmul.f32 %v1956, 1.442695
        %v1993 = vpow.pop %v1992
        %v1994 = vmul.f32 %v1957, 1.442695
        %v1995 = vpow.pop %v1994
        %v1996 = vmul.f32 %v1958, 1.442695
        %v1997 = vpow.pop %v1996
        %v1998 = vmul.f32 %v1959, 1.442695
        %v1999 = vpow.pop %v1998
        %v2000 = vmul.f32 %v1960, 1.442695
        %v2001 = vpow.pop %v2000
        %v2002 = vmul.f32 %v1961, 1.442695
        %v2003 = vpow.pop %v2002
        %v2004 = vmul.f32 %v1962, 1.442695
        %v2005 = vpow.pop %v2004
        %v2006 = vmul.f32 %v1963, 1.442695
        %v2007 = vpow.pop %v2006
        %v2008 = vmul.f32 %v1964, 1.442695
        %v2009 = vpow.pop %v2008
        %v2010 = vmul.f32 %v1965, 1.442695
        %v2011 = vpow.pop %v2010
        %v2012 = vmul.f32 %v1966, 1.442695
        %v2013 = vpow.pop %v2012
        %v2014 = vmul.f32 %v1967, 1.442695
        %v2015 = vpow.pop %v2014
        %v2016 = vmul.f32 %v1968, 1.442695
        %v2017 = vpow.pop %v2016
        %v2018 = vmul.f32 %v1969, 1.442695
        %v2019 = vpow.pop %v2018
        %v2020 = vmul.f32 %v1970, 1.442695
        %v2021 = vpow.pop %v2020
        %v2022 = vmul.f32 %v1971, 1.442695
        %v2023 = vpow.pop %v2022
        %v2024 = vmul.f32 %v1972, 1.442695
        %v2025 = vpow.pop %v2024
        %v2026 = vmul.f32 %v1973, 1.442695
        %v2027 = vpow.pop %v2026
        %v2028 = vmul.f32 %v1974, 1.442695
        %v2029 = vpow.pop %v2028
        %v2030 = vmul.f32 %v1975, 1.442695
        %v2031 = vpow.pop %v2030
        %v2032 = vmul.f32 %v1976, 1.442695
        %v2033 = vpow.pop %v2032
        %v2034 = vmul.f32 %v1977, 1.442695
        %v2035 = vpow.pop %v2034
        %v2036 = vmul.f32 %v1978, 1.442695
        %v2037 = vpow.pop %v2036
        %v2038 = vmul.f32 %v1979, 1.442695
        %v2039 = vpow.pop %v2038
        %v2040 = vmul.f32 %v1980, 1.442695
        %v2041 = vpow.pop %v2040
        %v2042 = vmul.f32 %v1981, 1.442695
        %v2043 = vpow.pop %v2042
        %v2044 = vmul.f32 %v1982, 1.442695
        %v2045 = vpow.pop %v2044
        %v2046 = vmul.f32 %v1983, 1.442695
        %v2047 = vpow.pop %v2046
        %v2048 = vsel %vm1854, %v1985, 0.0
        %v2049 = vsel %vm1855, %v1987, 0.0
        %v2050 = vsel %vm1854, %v1989, 0.0
        %v2051 = vsel %vm1855, %v1991, 0.0
        %v2052 = vsel %vm1854, %v1993, 0.0
        %v2053 = vsel %vm1855, %v1995, 0.0
        %v2054 = vsel %vm1854, %v1997, 0.0
        %v2055 = vsel %vm1855, %v1999, 0.0
        %v2056 = vsel %vm1854, %v2001, 0.0
        %v2057 = vsel %vm1855, %v2003, 0.0
        %v2058 = vsel %vm1854, %v2005, 0.0
        %v2059 = vsel %vm1855, %v2007, 0.0
        %v2060 = vsel %vm1854, %v2009, 0.0
        %v2061 = vsel %vm1855, %v2011, 0.0
        %v2062 = vsel %vm1854, %v2013, 0.0
        %v2063 = vsel %vm1855, %v2015, 0.0
        %v2064 = vsel %vm1854, %v2017, 0.0
        %v2065 = vsel %vm1855, %v2019, 0.0
        %v2066 = vsel %vm1854, %v2021, 0.0
        %v2067 = vsel %vm1855, %v2023, 0.0
        %v2068 = vsel %vm1854, %v2025, 0.0
        %v2069 = vsel %vm1855, %v2027, 0.0
        %v2070 = vsel %vm1854, %v2029, 0.0
        %v2071 = vsel %vm1855, %v2031, 0.0
        %v2072 = vsel %vm1854, %v2033, 0.0
        %v2073 = vsel %vm1855, %v2035, 0.0
        %v2074 = vsel %vm1854, %v2037, 0.0
        %v2075 = vsel %vm1855, %v2039, 0.0
        %v2076 = vsel %vm1854, %v2041, 0.0
        %v2077 = vsel %vm1855, %v2043, 0.0
        %v2078 = vsel %vm1854, %v2045, 0.0
        %v2079 = vsel %vm1855, %v2047, 0.0
        %v2080 = vadd.f32 %v2048, %v2049
        %2081 = vadd.xlane.f32.xlu0 %v2080
        %v2082 = vpop.xlane.xlu0 %2081
        %v2083 = vadd.f32 %v2050, %v2051
        %2084 = vadd.xlane.f32.xlu0 %v2083
        %v2085 = vpop.xlane.xlu0 %2084
        %v2086 = vadd.f32 %v2052, %v2053
        %2087 = vadd.xlane.f32.xlu0 %v2086
        %v2088 = vpop.xlane.xlu0 %2087
        %v2089 = vadd.f32 %v2054, %v2055
        %2090 = vadd.xlane.f32.xlu0 %v2089
        %v2091 = vpop.xlane.xlu0 %2090
        %v2092 = vadd.f32 %v2056, %v2057
        %2093 = vadd.xlane.f32.xlu0 %v2092
        %v2094 = vpop.xlane.xlu0 %2093
        %v2095 = vadd.f32 %v2058, %v2059
        %2096 = vadd.xlane.f32.xlu0 %v2095
        %v2097 = vpop.xlane.xlu0 %2096
        %v2098 = vadd.f32 %v2060, %v2061
        %2099 = vadd.xlane.f32.xlu0 %v2098
        %v2100 = vpop.xlane.xlu0 %2099
        %v2101 = vadd.f32 %v2062, %v2063
        %2102 = vadd.xlane.f32.xlu0 %v2101
        %v2103 = vpop.xlane.xlu0 %2102
        %v2104 = vadd.f32 %v2064, %v2065
        %2105 = vadd.xlane.f32.xlu0 %v2104
        %v2106 = vpop.xlane.xlu0 %2105
        %v2107 = vadd.f32 %v2066, %v2067
        %2108 = vadd.xlane.f32.xlu0 %v2107
        %v2109 = vpop.xlane.xlu0 %2108
        %v2110 = vadd.f32 %v2068, %v2069
        %2111 = vadd.xlane.f32.xlu0 %v2110
        %v2112 = vpop.xlane.xlu0 %2111
        %v2113 = vadd.f32 %v2070, %v2071
        %2114 = vadd.xlane.f32.xlu0 %v2113
        %v2115 = vpop.xlane.xlu0 %2114
        %v2116 = vadd.f32 %v2072, %v2073
        %2117 = vadd.xlane.f32.xlu0 %v2116
        %v2118 = vpop.xlane.xlu0 %2117
        %v2119 = vadd.f32 %v2074, %v2075
        %2120 = vadd.xlane.f32.xlu0 %v2119
        %v2121 = vpop.xlane.xlu0 %2120
        %v2122 = vadd.f32 %v2076, %v2077
        %2123 = vadd.xlane.f32.xlu0 %v2122
        %v2124 = vpop.xlane.xlu0 %2123
        %v2125 = vadd.f32 %v2078, %v2079
        %2126 = vadd.xlane.f32.xlu0 %v2125
        %v2127 = vpop.xlane.xlu0 %2126
        %v2128 = vmax.f32 %v2082, 1e-30
        %v2129 = vmax.f32 %v2085, 1e-30
        %v2130 = vmax.f32 %v2088, 1e-30
        %v2131 = vmax.f32 %v2091, 1e-30
        %v2132 = vmax.f32 %v2094, 1e-30
        %v2133 = vmax.f32 %v2097, 1e-30
        %v2134 = vmax.f32 %v2100, 1e-30
        %v2135 = vmax.f32 %v2103, 1e-30
        %v2136 = vmax.f32 %v2106, 1e-30
        %v2137 = vmax.f32 %v2109, 1e-30
        %v2138 = vmax.f32 %v2112, 1e-30
        %v2139 = vmax.f32 %v2115, 1e-30
        %v2140 = vmax.f32 %v2118, 1e-30
        %v2141 = vmax.f32 %v2121, 1e-30
        %v2142 = vmax.f32 %v2124, 1e-30
        %v2143 = vmax.f32 %v2127, 1e-30
        %v2144 = vrcp.pop %v2128
        %v2145 = vrcp.pop %v2129
        %v2146 = vrcp.pop %v2130
        %v2147 = vrcp.pop %v2131
        %v2148 = vrcp.pop %v2132
        %v2149 = vrcp.pop %v2133
        %v2150 = vrcp.pop %v2134
        %v2151 = vrcp.pop %v2135
        %v2152 = vrcp.pop %v2136
        %v2153 = vrcp.pop %v2137
        %v2154 = vrcp.pop %v2138
        %v2155 = vrcp.pop %v2139
        %v2156 = vrcp.pop %v2140
        %v2157 = vrcp.pop %v2141
        %v2158 = vrcp.pop %v2142
        %v2159 = vrcp.pop %v2143
        %v2160 = vmul.f32 %v2048, %v2144
        %v2161 = vmul.f32 %v2049, %v2144
        %v2162 = vmul.f32 %v2050, %v2145
        %v2163 = vmul.f32 %v2051, %v2145
        %v2164 = vmul.f32 %v2052, %v2146
        %v2165 = vmul.f32 %v2053, %v2146
        %v2166 = vmul.f32 %v2054, %v2147
        %v2167 = vmul.f32 %v2055, %v2147
        %v2168 = vmul.f32 %v2056, %v2148
        %v2169 = vmul.f32 %v2057, %v2148
        %v2170 = vmul.f32 %v2058, %v2149
        %v2171 = vmul.f32 %v2059, %v2149
        %v2172 = vmul.f32 %v2060, %v2150
        %v2173 = vmul.f32 %v2061, %v2150
        %v2174 = vmul.f32 %v2062, %v2151
        %v2175 = vmul.f32 %v2063, %v2151
        %v2176 = vmul.f32 %v2064, %v2152
        %v2177 = vmul.f32 %v2065, %v2152
        %v2178 = vmul.f32 %v2066, %v2153
        %v2179 = vmul.f32 %v2067, %v2153
        %v2180 = vmul.f32 %v2068, %v2154
        %v2181 = vmul.f32 %v2069, %v2154
        %v2182 = vmul.f32 %v2070, %v2155
        %v2183 = vmul.f32 %v2071, %v2155
        %v2184 = vmul.f32 %v2072, %v2156
        %v2185 = vmul.f32 %v2073, %v2156
        %v2186 = vmul.f32 %v2074, %v2157
        %v2187 = vmul.f32 %v2075, %v2157
        %v2188 = vmul.f32 %v2076, %v2158
        %v2189 = vmul.f32 %v2077, %v2158
        %v2190 = vmul.f32 %v2078, %v2159
        %v2191 = vmul.f32 %v2079, %v2159
        %v2192 = vsel %vm1854, %v2160, %v1761
        %v2193 = vsel %vm1855, %v2161, %v1763
        %v2194 = vsel %vm1854, %v2162, %v1765
        %v2195 = vsel %vm1855, %v2163, %v1767
        %v2196 = vsel %vm1854, %v2164, %v1771
        %v2197 = vsel %vm1855, %v2165, %v1773
        %v2198 = vsel %vm1854, %v2166, %v1775
        %v2199 = vsel %vm1855, %v2167, %v1777
        %v2200 = vsel %vm1854, %v2168, %v1781
        %v2201 = vsel %vm1855, %v2169, %v1783
        %v2202 = vsel %vm1854, %v2170, %v1785
        %v2203 = vsel %vm1855, %v2171, %v1787
        %v2204 = vsel %vm1854, %v2172, %v1791
        %v2205 = vsel %vm1855, %v2173, %v1793
        %v2206 = vsel %vm1854, %v2174, %v1795
        %v2207 = vsel %vm1855, %v2175, %v1797
        %v2208 = vsel %vm1854, %v2176, %v1801
        %v2209 = vsel %vm1855, %v2177, %v1803
        %v2210 = vsel %vm1854, %v2178, %v1805
        %v2211 = vsel %vm1855, %v2179, %v1807
        %v2212 = vsel %vm1854, %v2180, %v1811
        %v2213 = vsel %vm1855, %v2181, %v1813
        %v2214 = vsel %vm1854, %v2182, %v1815
        %v2215 = vsel %vm1855, %v2183, %v1817
        %v2216 = vsel %vm1854, %v2184, %v1821
        %v2217 = vsel %vm1855, %v2185, %v1823
        %v2218 = vsel %vm1854, %v2186, %v1825
        %v2219 = vsel %vm1855, %v2187, %v1827
        %v2220 = vsel %vm1854, %v2188, %v1831
        %v2221 = vsel %vm1855, %v2189, %v1833
        %v2222 = vsel %vm1854, %v2190, %v1835
        %v2223 = vsel %vm1855, %v2191, %v1837
        %s2224 = sld [smem:[#allocation3 + $0x1]]
        %s2225 = sld [smem:[#allocation4 + $0x1]]
        %v2226 = vstv %s2224
        %vm2227 = vcmp.ge.s32.totalorder %v1840, %v2226
        %vm2228 = vcmp.ge.s32.totalorder %v1841, %v2226
        %v2229 = vstv %s2225
        %vm2230 = vcmp.lt.s32.totalorder %v1840, %v2229
        %vm2231 = vcmp.lt.s32.totalorder %v1841, %v2229
        %vm2232 = vmand %vm2227, %vm2230
        %vm2233 = vmand %vm2228, %vm2231
        %v2234 = vsel %vm2232, 1, 0
        %v2235 = vsel %vm2233, 1, 0
        %vm2236 = vcmp.eq.s32.totalorder %v2234, 1
        %vm2237 = vcmp.eq.s32.totalorder %v2235, 1
        %v2238 = vsel %vm2236, %v2192, -inf
        %v2239 = vsel %vm2237, %v2193, -inf
        %v2240 = vsel %vm2236, %v2194, -inf
        %v2241 = vsel %vm2237, %v2195, -inf
        %v2242 = vsel %vm2236, %v2196, -inf
        %v2243 = vsel %vm2237, %v2197, -inf
        %v2244 = vsel %vm2236, %v2198, -inf
        %v2245 = vsel %vm2237, %v2199, -inf
        %v2246 = vsel %vm2236, %v2200, -inf
        %v2247 = vsel %vm2237, %v2201, -inf
        %v2248 = vsel %vm2236, %v2202, -inf
        %v2249 = vsel %vm2237, %v2203, -inf
        %v2250 = vsel %vm2236, %v2204, -inf
        %v2251 = vsel %vm2237, %v2205, -inf
        %v2252 = vsel %vm2236, %v2206, -inf
        %v2253 = vsel %vm2237, %v2207, -inf
        %v2254 = vsel %vm2236, %v2208, -inf
        %v2255 = vsel %vm2237, %v2209, -inf
        %v2256 = vsel %vm2236, %v2210, -inf
        %v2257 = vsel %vm2237, %v2211, -inf
        %v2258 = vsel %vm2236, %v2212, -inf
        %v2259 = vsel %vm2237, %v2213, -inf
        %v2260 = vsel %vm2236, %v2214, -inf
        %v2261 = vsel %vm2237, %v2215, -inf
        %v2262 = vsel %vm2236, %v2216, -inf
        %v2263 = vsel %vm2237, %v2217, -inf
        %v2264 = vsel %vm2236, %v2218, -inf
        %v2265 = vsel %vm2237, %v2219, -inf
        %v2266 = vsel %vm2236, %v2220, -inf
        %v2267 = vsel %vm2237, %v2221, -inf
        %v2268 = vsel %vm2236, %v2222, -inf
        %v2269 = vsel %vm2237, %v2223, -inf
        %v2270 = vmax.f32 %v2238, %v2239
        %2271 = vmax.xlane.f32.xlu0 %v2270
        %v2272 = vpop.xlane.xlu0 %2271
        %v2273 = vmax.f32 %v2240, %v2241
        %2274 = vmax.xlane.f32.xlu0 %v2273
        %v2275 = vpop.xlane.xlu0 %2274
        %v2276 = vmax.f32 %v2242, %v2243
        %2277 = vmax.xlane.f32.xlu0 %v2276
        %v2278 = vpop.xlane.xlu0 %2277
        %v2279 = vmax.f32 %v2244, %v2245
        %2280 = vmax.xlane.f32.xlu0 %v2279
        %v2281 = vpop.xlane.xlu0 %2280
        %v2282 = vmax.f32 %v2246, %v2247
        %2283 = vmax.xlane.f32.xlu0 %v2282
        %v2284 = vpop.xlane.xlu0 %2283
        %v2285 = vmax.f32 %v2248, %v2249
        %2286 = vmax.xlane.f32.xlu0 %v2285
        %v2287 = vpop.xlane.xlu0 %2286
        %v2288 = vmax.f32 %v2250, %v2251
        %2289 = vmax.xlane.f32.xlu0 %v2288
        %v2290 = vpop.xlane.xlu0 %2289
        %v2291 = vmax.f32 %v2252, %v2253
        %2292 = vmax.xlane.f32.xlu0 %v2291
        %v2293 = vpop.xlane.xlu0 %2292
        %v2294 = vmax.f32 %v2254, %v2255
        %2295 = vmax.xlane.f32.xlu0 %v2294
        %v2296 = vpop.xlane.xlu0 %2295
        %v2297 = vmax.f32 %v2256, %v2257
        %2298 = vmax.xlane.f32.xlu0 %v2297
        %v2299 = vpop.xlane.xlu0 %2298
        %v2300 = vmax.f32 %v2258, %v2259
        %2301 = vmax.xlane.f32.xlu0 %v2300
        %v2302 = vpop.xlane.xlu0 %2301
        %v2303 = vmax.f32 %v2260, %v2261
        %2304 = vmax.xlane.f32.xlu0 %v2303
        %v2305 = vpop.xlane.xlu0 %2304
        %v2306 = vmax.f32 %v2262, %v2263
        %2307 = vmax.xlane.f32.xlu0 %v2306
        %v2308 = vpop.xlane.xlu0 %2307
        %v2309 = vmax.f32 %v2264, %v2265
        %2310 = vmax.xlane.f32.xlu0 %v2309
        %v2311 = vpop.xlane.xlu0 %2310
        %v2312 = vmax.f32 %v2266, %v2267
        %2313 = vmax.xlane.f32.xlu0 %v2312
        %v2314 = vpop.xlane.xlu0 %2313
        %v2315 = vmax.f32 %v2268, %v2269
        %2316 = vmax.xlane.f32.xlu0 %v2315
        %v2317 = vpop.xlane.xlu0 %2316
        %v2318 = vmax.f32 %v2272, -1e+30
        %v2319 = vmax.f32 %v2275, -1e+30
        %v2320 = vmax.f32 %v2278, -1e+30
        %v2321 = vmax.f32 %v2281, -1e+30
        %v2322 = vmax.f32 %v2284, -1e+30
        %v2323 = vmax.f32 %v2287, -1e+30
        %v2324 = vmax.f32 %v2290, -1e+30
        %v2325 = vmax.f32 %v2293, -1e+30
        %v2326 = vmax.f32 %v2296, -1e+30
        %v2327 = vmax.f32 %v2299, -1e+30
        %v2328 = vmax.f32 %v2302, -1e+30
        %v2329 = vmax.f32 %v2305, -1e+30
        %v2330 = vmax.f32 %v2308, -1e+30
        %v2331 = vmax.f32 %v2311, -1e+30
        %v2332 = vmax.f32 %v2314, -1e+30
        %v2333 = vmax.f32 %v2317, -1e+30
        %v2334 = vsub.f32 %v2192, %v2318
        %v2335 = vsub.f32 %v2193, %v2318
        %v2336 = vsub.f32 %v2194, %v2319
        %v2337 = vsub.f32 %v2195, %v2319
        %v2338 = vsub.f32 %v2196, %v2320
        %v2339 = vsub.f32 %v2197, %v2320
        %v2340 = vsub.f32 %v2198, %v2321
        %v2341 = vsub.f32 %v2199, %v2321
        %v2342 = vsub.f32 %v2200, %v2322
        %v2343 = vsub.f32 %v2201, %v2322
        %v2344 = vsub.f32 %v2202, %v2323
        %v2345 = vsub.f32 %v2203, %v2323
        %v2346 = vsub.f32 %v2204, %v2324
        %v2347 = vsub.f32 %v2205, %v2324
        %v2348 = vsub.f32 %v2206, %v2325
        %v2349 = vsub.f32 %v2207, %v2325
        %v2350 = vsub.f32 %v2208, %v2326
        %v2351 = vsub.f32 %v2209, %v2326
        %v2352 = vsub.f32 %v2210, %v2327
        %v2353 = vsub.f32 %v2211, %v2327
        %v2354 = vsub.f32 %v2212, %v2328
        %v2355 = vsub.f32 %v2213, %v2328
        %v2356 = vsub.f32 %v2214, %v2329
        %v2357 = vsub.f32 %v2215, %v2329
        %v2358 = vsub.f32 %v2216, %v2330
        %v2359 = vsub.f32 %v2217, %v2330
        %v2360 = vsub.f32 %v2218, %v2331
        %v2361 = vsub.f32 %v2219, %v2331
        %v2362 = vsub.f32 %v2220, %v2332
        %v2363 = vsub.f32 %v2221, %v2332
        %v2364 = vsub.f32 %v2222, %v2333
        %v2365 = vsub.f32 %v2223, %v2333
        %v2366 = vmul.f32 %v2334, 1.442695
        %v2367 = vpow.pop %v2366
        %v2368 = vmul.f32 %v2335, 1.442695
        %v2369 = vpow.pop %v2368
        %v2370 = vmul.f32 %v2336, 1.442695
        %v2371 = vpow.pop %v2370
        %v2372 = vmul.f32 %v2337, 1.442695
        %v2373 = vpow.pop %v2372
        %v2374 = vmul.f32 %v2338, 1.442695
        %v2375 = vpow.pop %v2374
        %v2376 = vmul.f32 %v2339, 1.442695
        %v2377 = vpow.pop %v2376
        %v2378 = vmul.f32 %v2340, 1.442695
        %v2379 = vpow.pop %v2378
        %v2380 = vmul.f32 %v2341, 1.442695
        %v2381 = vpow.pop %v2380
        %v2382 = vmul.f32 %v2342, 1.442695
        %v2383 = vpow.pop %v2382
        %v2384 = vmul.f32 %v2343, 1.442695
        %v2385 = vpow.pop %v2384
        %v2386 = vmul.f32 %v2344, 1.442695
        %v2387 = vpow.pop %v2386
        %v2388 = vmul.f32 %v2345, 1.442695
        %v2389 = vpow.pop %v2388
        %v2390 = vmul.f32 %v2346, 1.442695
        %v2391 = vpow.pop %v2390
        %v2392 = vmul.f32 %v2347, 1.442695
        %v2393 = vpow.pop %v2392
        %v2394 = vmul.f32 %v2348, 1.442695
        %v2395 = vpow.pop %v2394
        %v2396 = vmul.f32 %v2349, 1.442695
        %v2397 = vpow.pop %v2396
        %v2398 = vmul.f32 %v2350, 1.442695
        %v2399 = vpow.pop %v2398
        %v2400 = vmul.f32 %v2351, 1.442695
        %v2401 = vpow.pop %v2400
        %v2402 = vmul.f32 %v2352, 1.442695
        %v2403 = vpow.pop %v2402
        %v2404 = vmul.f32 %v2353, 1.442695
        %v2405 = vpow.pop %v2404
        %v2406 = vmul.f32 %v2354, 1.442695
        %v2407 = vpow.pop %v2406
        %v2408 = vmul.f32 %v2355, 1.442695
        %v2409 = vpow.pop %v2408
        %v2410 = vmul.f32 %v2356, 1.442695
        %v2411 = vpow.pop %v2410
        %v2412 = vmul.f32 %v2357, 1.442695
        %v2413 = vpow.pop %v2412
        %v2414 = vmul.f32 %v2358, 1.442695
        %v2415 = vpow.pop %v2414
        %v2416 = vmul.f32 %v2359, 1.442695
        %v2417 = vpow.pop %v2416
        %v2418 = vmul.f32 %v2360, 1.442695
        %v2419 = vpow.pop %v2418
        %v2420 = vmul.f32 %v2361, 1.442695
        %v2421 = vpow.pop %v2420
        %v2422 = vmul.f32 %v2362, 1.442695
        %v2423 = vpow.pop %v2422
        %v2424 = vmul.f32 %v2363, 1.442695
        %v2425 = vpow.pop %v2424
        %v2426 = vmul.f32 %v2364, 1.442695
        %v2427 = vpow.pop %v2426
        %v2428 = vmul.f32 %v2365, 1.442695
        %v2429 = vpow.pop %v2428
        %v2430 = vsel %vm2236, %v2367, 0.0
        %v2431 = vsel %vm2237, %v2369, 0.0
        %v2432 = vsel %vm2236, %v2371, 0.0
        %v2433 = vsel %vm2237, %v2373, 0.0
        %v2434 = vsel %vm2236, %v2375, 0.0
        %v2435 = vsel %vm2237, %v2377, 0.0
        %v2436 = vsel %vm2236, %v2379, 0.0
        %v2437 = vsel %vm2237, %v2381, 0.0
        %v2438 = vsel %vm2236, %v2383, 0.0
        %v2439 = vsel %vm2237, %v2385, 0.0
        %v2440 = vsel %vm2236, %v2387, 0.0
        %v2441 = vsel %vm2237, %v2389, 0.0
        %v2442 = vsel %vm2236, %v2391, 0.0
        %v2443 = vsel %vm2237, %v2393, 0.0
        %v2444 = vsel %vm2236, %v2395, 0.0
        %v2445 = vsel %vm2237, %v2397, 0.0
        %v2446 = vsel %vm2236, %v2399, 0.0
        %v2447 = vsel %vm2237, %v2401, 0.0
        %v2448 = vsel %vm2236, %v2403, 0.0
        %v2449 = vsel %vm2237, %v2405, 0.0
        %v2450 = vsel %vm2236, %v2407, 0.0
        %v2451 = vsel %vm2237, %v2409, 0.0
        %v2452 = vsel %vm2236, %v2411, 0.0
        %v2453 = vsel %vm2237, %v2413, 0.0
        %v2454 = vsel %vm2236, %v2415, 0.0
        %v2455 = vsel %vm2237, %v2417, 0.0
        %v2456 = vsel %vm2236, %v2419, 0.0
        %v2457 = vsel %vm2237, %v2421, 0.0
        %v2458 = vsel %vm2236, %v2423, 0.0
        %v2459 = vsel %vm2237, %v2425, 0.0
        %v2460 = vsel %vm2236, %v2427, 0.0
        %v2461 = vsel %vm2237, %v2429, 0.0
        %v2462 = vadd.f32 %v2430, %v2431
        %2463 = vadd.xlane.f32.xlu0 %v2462
        %v2464 = vpop.xlane.xlu0 %2463
        %v2465 = vadd.f32 %v2432, %v2433
        %2466 = vadd.xlane.f32.xlu0 %v2465
        %v2467 = vpop.xlane.xlu0 %2466
        %v2468 = vadd.f32 %v2434, %v2435
        %2469 = vadd.xlane.f32.xlu0 %v2468
        %v2470 = vpop.xlane.xlu0 %2469
        %v2471 = vadd.f32 %v2436, %v2437
        %2472 = vadd.xlane.f32.xlu0 %v2471
        %v2473 = vpop.xlane.xlu0 %2472
        %v2474 = vadd.f32 %v2438, %v2439
        %2475 = vadd.xlane.f32.xlu0 %v2474
        %v2476 = vpop.xlane.xlu0 %2475
        %v2477 = vadd.f32 %v2440, %v2441
        %2478 = vadd.xlane.f32.xlu0 %v2477
        %v2479 = vpop.xlane.xlu0 %2478
        %v2480 = vadd.f32 %v2442, %v2443
        %2481 = vadd.xlane.f32.xlu0 %v2480
        %v2482 = vpop.xlane.xlu0 %2481
        %v2483 = vadd.f32 %v2444, %v2445
        %2484 = vadd.xlane.f32.xlu0 %v2483
        %v2485 = vpop.xlane.xlu0 %2484
        %v2486 = vadd.f32 %v2446, %v2447
        %2487 = vadd.xlane.f32.xlu0 %v2486
        %v2488 = vpop.xlane.xlu0 %2487
        %v2489 = vadd.f32 %v2448, %v2449
        %2490 = vadd.xlane.f32.xlu0 %v2489
        %v2491 = vpop.xlane.xlu0 %2490
        %v2492 = vadd.f32 %v2450, %v2451
        %2493 = vadd.xlane.f32.xlu0 %v2492
        %v2494 = vpop.xlane.xlu0 %2493
        %v2495 = vadd.f32 %v2452, %v2453
        %2496 = vadd.xlane.f32.xlu0 %v2495
        %v2497 = vpop.xlane.xlu0 %2496
        %v2498 = vadd.f32 %v2454, %v2455
        %2499 = vadd.xlane.f32.xlu0 %v2498
        %v2500 = vpop.xlane.xlu0 %2499
        %v2501 = vadd.f32 %v2456, %v2457
        %2502 = vadd.xlane.f32.xlu0 %v2501
        %v2503 = vpop.xlane.xlu0 %2502
        %v2504 = vadd.f32 %v2458, %v2459
        %2505 = vadd.xlane.f32.xlu0 %v2504
        %v2506 = vpop.xlane.xlu0 %2505
        %v2507 = vadd.f32 %v2460, %v2461
        %2508 = vadd.xlane.f32.xlu0 %v2507
        %v2509 = vpop.xlane.xlu0 %2508
        %v2510 = vmax.f32 %v2464, 1e-30
        %v2511 = vmax.f32 %v2467, 1e-30
        %v2512 = vmax.f32 %v2470, 1e-30
        %v2513 = vmax.f32 %v2473, 1e-30
        %v2514 = vmax.f32 %v2476, 1e-30
        %v2515 = vmax.f32 %v2479, 1e-30
        %v2516 = vmax.f32 %v2482, 1e-30
        %v2517 = vmax.f32 %v2485, 1e-30
        %v2518 = vmax.f32 %v2488, 1e-30
        %v2519 = vmax.f32 %v2491, 1e-30
        %v2520 = vmax.f32 %v2494, 1e-30
        %v2521 = vmax.f32 %v2497, 1e-30
        %v2522 = vmax.f32 %v2500, 1e-30
        %v2523 = vmax.f32 %v2503, 1e-30
        %v2524 = vmax.f32 %v2506, 1e-30
        %v2525 = vmax.f32 %v2509, 1e-30
        %v2526 = vrcp.pop %v2510
        %v2527 = vrcp.pop %v2511
        %v2528 = vrcp.pop %v2512
        %v2529 = vrcp.pop %v2513
        %v2530 = vrcp.pop %v2514
        %v2531 = vrcp.pop %v2515
        %v2532 = vrcp.pop %v2516
        %v2533 = vrcp.pop %v2517
        %v2534 = vrcp.pop %v2518
        %v2535 = vrcp.pop %v2519
        %v2536 = vrcp.pop %v2520
        %v2537 = vrcp.pop %v2521
        %v2538 = vrcp.pop %v2522
        %v2539 = vrcp.pop %v2523
        %v2540 = vrcp.pop %v2524
        %v2541 = vrcp.pop %v2525
        %v2542 = vmul.f32 %v2430, %v2526
        %v2543 = vmul.f32 %v2431, %v2526
        %v2544 = vmul.f32 %v2432, %v2527
        %v2545 = vmul.f32 %v2433, %v2527
        %v2546 = vmul.f32 %v2434, %v2528
        %v2547 = vmul.f32 %v2435, %v2528
        %v2548 = vmul.f32 %v2436, %v2529
        %v2549 = vmul.f32 %v2437, %v2529
        %v2550 = vmul.f32 %v2438, %v2530
        %v2551 = vmul.f32 %v2439, %v2530
        %v2552 = vmul.f32 %v2440, %v2531
        %v2553 = vmul.f32 %v2441, %v2531
        %v2554 = vmul.f32 %v2442, %v2532
        %v2555 = vmul.f32 %v2443, %v2532
        %v2556 = vmul.f32 %v2444, %v2533
        %v2557 = vmul.f32 %v2445, %v2533
        %v2558 = vmul.f32 %v2446, %v2534
        %v2559 = vmul.f32 %v2447, %v2534
        %v2560 = vmul.f32 %v2448, %v2535
        %v2561 = vmul.f32 %v2449, %v2535
        %v2562 = vmul.f32 %v2450, %v2536
        %v2563 = vmul.f32 %v2451, %v2536
        %v2564 = vmul.f32 %v2452, %v2537
        %v2565 = vmul.f32 %v2453, %v2537
        %v2566 = vmul.f32 %v2454, %v2538
        %v2567 = vmul.f32 %v2455, %v2538
        %v2568 = vmul.f32 %v2456, %v2539
        %v2569 = vmul.f32 %v2457, %v2539
        %v2570 = vmul.f32 %v2458, %v2540
        %v2571 = vmul.f32 %v2459, %v2540
        %v2572 = vmul.f32 %v2460, %v2541
        %v2573 = vmul.f32 %v2461, %v2541
        %v2574 = vsel %vm2236, %v2542, %v2192
        %v2575 = vsel %vm2237, %v2543, %v2193
        %v2576 = vsel %vm2236, %v2544, %v2194
        %v2577 = vsel %vm2237, %v2545, %v2195
        %v2578 = vsel %vm2236, %v2546, %v2196
        %v2579 = vsel %vm2237, %v2547, %v2197
        %v2580 = vsel %vm2236, %v2548, %v2198
        %v2581 = vsel %vm2237, %v2549, %v2199
        %v2582 = vsel %vm2236, %v2550, %v2200
        %v2583 = vsel %vm2237, %v2551, %v2201
        %v2584 = vsel %vm2236, %v2552, %v2202
        %v2585 = vsel %vm2237, %v2553, %v2203
        %v2586 = vsel %vm2236, %v2554, %v2204
        %v2587 = vsel %vm2237, %v2555, %v2205
        %v2588 = vsel %vm2236, %v2556, %v2206
        %v2589 = vsel %vm2237, %v2557, %v2207
        %v2590 = vsel %vm2236, %v2558, %v2208
        %v2591 = vsel %vm2237, %v2559, %v2209
        %v2592 = vsel %vm2236, %v2560, %v2210
        %v2593 = vsel %vm2237, %v2561, %v2211
        %v2594 = vsel %vm2236, %v2562, %v2212
        %v2595 = vsel %vm2237, %v2563, %v2213
        %v2596 = vsel %vm2236, %v2564, %v2214
        %v2597 = vsel %vm2237, %v2565, %v2215
        %v2598 = vsel %vm2236, %v2566, %v2216
        %v2599 = vsel %vm2237, %v2567, %v2217
        %v2600 = vsel %vm2236, %v2568, %v2218
        %v2601 = vsel %vm2237, %v2569, %v2219
        %v2602 = vsel %vm2236, %v2570, %v2220
        %v2603 = vsel %vm2237, %v2571, %v2221
        %v2604 = vsel %vm2236, %v2572, %v2222
        %v2605 = vsel %vm2237, %v2573, %v2223
        %s2606 = sld [smem:[#allocation3 + $0x2]]
        %s2607 = sld [smem:[#allocation4 + $0x2]]
        %v2608 = vstv %s2606
        %vm2609 = vcmp.ge.s32.totalorder %v1840, %v2608
        %vm2610 = vcmp.ge.s32.totalorder %v1841, %v2608
        %v2611 = vstv %s2607
        %vm2612 = vcmp.lt.s32.totalorder %v1840, %v2611
        %vm2613 = vcmp.lt.s32.totalorder %v1841, %v2611
        %vm2614 = vmand %vm2609, %vm2612
        %vm2615 = vmand %vm2610, %vm2613
        %v2616 = vsel %vm2614, 1, 0
        %v2617 = vsel %vm2615, 1, 0
        %vm2618 = vcmp.eq.s32.totalorder %v2616, 1
        %vm2619 = vcmp.eq.s32.totalorder %v2617, 1
        %v2620 = vsel %vm2618, %v2574, -inf
        %v2621 = vsel %vm2619, %v2575, -inf
        %v2622 = vsel %vm2618, %v2576, -inf
        %v2623 = vsel %vm2619, %v2577, -inf
        %v2624 = vsel %vm2618, %v2578, -inf
        %v2625 = vsel %vm2619, %v2579, -inf
        %v2626 = vsel %vm2618, %v2580, -inf
        %v2627 = vsel %vm2619, %v2581, -inf
        %v2628 = vsel %vm2618, %v2582, -inf
        %v2629 = vsel %vm2619, %v2583, -inf
        %v2630 = vsel %vm2618, %v2584, -inf
        %v2631 = vsel %vm2619, %v2585, -inf
        %v2632 = vsel %vm2618, %v2586, -inf
        %v2633 = vsel %vm2619, %v2587, -inf
        %v2634 = vsel %vm2618, %v2588, -inf
        %v2635 = vsel %vm2619, %v2589, -inf
        %v2636 = vsel %vm2618, %v2590, -inf
        %v2637 = vsel %vm2619, %v2591, -inf
        %v2638 = vsel %vm2618, %v2592, -inf
        %v2639 = vsel %vm2619, %v2593, -inf
        %v2640 = vsel %vm2618, %v2594, -inf
        %v2641 = vsel %vm2619, %v2595, -inf
        %v2642 = vsel %vm2618, %v2596, -inf
        %v2643 = vsel %vm2619, %v2597, -inf
        %v2644 = vsel %vm2618, %v2598, -inf
        %v2645 = vsel %vm2619, %v2599, -inf
        %v2646 = vsel %vm2618, %v2600, -inf
        %v2647 = vsel %vm2619, %v2601, -inf
        %v2648 = vsel %vm2618, %v2602, -inf
        %v2649 = vsel %vm2619, %v2603, -inf
        %v2650 = vsel %vm2618, %v2604, -inf
        %v2651 = vsel %vm2619, %v2605, -inf
        %v2652 = vmax.f32 %v2620, %v2621
        %2653 = vmax.xlane.f32.xlu0 %v2652
        %v2654 = vpop.xlane.xlu0 %2653
        %v2655 = vmax.f32 %v2622, %v2623
        %2656 = vmax.xlane.f32.xlu0 %v2655
        %v2657 = vpop.xlane.xlu0 %2656
        %v2658 = vmax.f32 %v2624, %v2625
        %2659 = vmax.xlane.f32.xlu0 %v2658
        %v2660 = vpop.xlane.xlu0 %2659
        %v2661 = vmax.f32 %v2626, %v2627
        %2662 = vmax.xlane.f32.xlu0 %v2661
        %v2663 = vpop.xlane.xlu0 %2662
        %v2664 = vmax.f32 %v2628, %v2629
        %2665 = vmax.xlane.f32.xlu0 %v2664
        %v2666 = vpop.xlane.xlu0 %2665
        %v2667 = vmax.f32 %v2630, %v2631
        %2668 = vmax.xlane.f32.xlu0 %v2667
        %v2669 = vpop.xlane.xlu0 %2668
        %v2670 = vmax.f32 %v2632, %v2633
        %2671 = vmax.xlane.f32.xlu0 %v2670
        %v2672 = vpop.xlane.xlu0 %2671
        %v2673 = vmax.f32 %v2634, %v2635
        %2674 = vmax.xlane.f32.xlu0 %v2673
        %v2675 = vpop.xlane.xlu0 %2674
        %v2676 = vmax.f32 %v2636, %v2637
        %2677 = vmax.xlane.f32.xlu0 %v2676
        %v2678 = vpop.xlane.xlu0 %2677
        %v2679 = vmax.f32 %v2638, %v2639
        %2680 = vmax.xlane.f32.xlu0 %v2679
        %v2681 = vpop.xlane.xlu0 %2680
        %v2682 = vmax.f32 %v2640, %v2641
        %2683 = vmax.xlane.f32.xlu0 %v2682
        %v2684 = vpop.xlane.xlu0 %2683
        %v2685 = vmax.f32 %v2642, %v2643
        %2686 = vmax.xlane.f32.xlu0 %v2685
        %v2687 = vpop.xlane.xlu0 %2686
        %v2688 = vmax.f32 %v2644, %v2645
        %2689 = vmax.xlane.f32.xlu0 %v2688
        %v2690 = vpop.xlane.xlu0 %2689
        %v2691 = vmax.f32 %v2646, %v2647
        %2692 = vmax.xlane.f32.xlu0 %v2691
        %v2693 = vpop.xlane.xlu0 %2692
        %v2694 = vmax.f32 %v2648, %v2649
        %2695 = vmax.xlane.f32.xlu0 %v2694
        %v2696 = vpop.xlane.xlu0 %2695
        %v2697 = vmax.f32 %v2650, %v2651
        %2698 = vmax.xlane.f32.xlu0 %v2697
        %v2699 = vpop.xlane.xlu0 %2698
        %v2700 = vmax.f32 %v2654, -1e+30
        %v2701 = vmax.f32 %v2657, -1e+30
        %v2702 = vmax.f32 %v2660, -1e+30
        %v2703 = vmax.f32 %v2663, -1e+30
        %v2704 = vmax.f32 %v2666, -1e+30
        %v2705 = vmax.f32 %v2669, -1e+30
        %v2706 = vmax.f32 %v2672, -1e+30
        %v2707 = vmax.f32 %v2675, -1e+30
        %v2708 = vmax.f32 %v2678, -1e+30
        %v2709 = vmax.f32 %v2681, -1e+30
        %v2710 = vmax.f32 %v2684, -1e+30
        %v2711 = vmax.f32 %v2687, -1e+30
        %v2712 = vmax.f32 %v2690, -1e+30
        %v2713 = vmax.f32 %v2693, -1e+30
        %v2714 = vmax.f32 %v2696, -1e+30
        %v2715 = vmax.f32 %v2699, -1e+30
        %v2716 = vsub.f32 %v2574, %v2700
        %v2717 = vsub.f32 %v2575, %v2700
        %v2718 = vsub.f32 %v2576, %v2701
        %v2719 = vsub.f32 %v2577, %v2701
        %v2720 = vsub.f32 %v2578, %v2702
        %v2721 = vsub.f32 %v2579, %v2702
        %v2722 = vsub.f32 %v2580, %v2703
        %v2723 = vsub.f32 %v2581, %v2703
        %v2724 = vsub.f32 %v2582, %v2704
        %v2725 = vsub.f32 %v2583, %v2704
        %v2726 = vsub.f32 %v2584, %v2705
        %v2727 = vsub.f32 %v2585, %v2705
        %v2728 = vsub.f32 %v2586, %v2706
        %v2729 = vsub.f32 %v2587, %v2706
        %v2730 = vsub.f32 %v2588, %v2707
        %v2731 = vsub.f32 %v2589, %v2707
        %v2732 = vsub.f32 %v2590, %v2708
        %v2733 = vsub.f32 %v2591, %v2708
        %v2734 = vsub.f32 %v2592, %v2709
        %v2735 = vsub.f32 %v2593, %v2709
        %v2736 = vsub.f32 %v2594, %v2710
        %v2737 = vsub.f32 %v2595, %v2710
        %v2738 = vsub.f32 %v2596, %v2711
        %v2739 = vsub.f32 %v2597, %v2711
        %v2740 = vsub.f32 %v2598, %v2712
        %v2741 = vsub.f32 %v2599, %v2712
        %v2742 = vsub.f32 %v2600, %v2713
        %v2743 = vsub.f32 %v2601, %v2713
        %v2744 = vsub.f32 %v2602, %v2714
        %v2745 = vsub.f32 %v2603, %v2714
        %v2746 = vsub.f32 %v2604, %v2715
        %v2747 = vsub.f32 %v2605, %v2715
        %v2748 = vmul.f32 %v2716, 1.442695
        %v2749 = vpow.pop %v2748
        %v2750 = vmul.f32 %v2717, 1.442695
        %v2751 = vpow.pop %v2750
        %v2752 = vmul.f32 %v2718, 1.442695
        %v2753 = vpow.pop %v2752
        %v2754 = vmul.f32 %v2719, 1.442695
        %v2755 = vpow.pop %v2754
        %v2756 = vmul.f32 %v2720, 1.442695
        %v2757 = vpow.pop %v2756
        %v2758 = vmul.f32 %v2721, 1.442695
        %v2759 = vpow.pop %v2758
        %v2760 = vmul.f32 %v2722, 1.442695
        %v2761 = vpow.pop %v2760
        %v2762 = vmul.f32 %v2723, 1.442695
        %v2763 = vpow.pop %v2762
        %v2764 = vmul.f32 %v2724, 1.442695
        %v2765 = vpow.pop %v2764
        %v2766 = vmul.f32 %v2725, 1.442695
        %v2767 = vpow.pop %v2766
        %v2768 = vmul.f32 %v2726, 1.442695
        %v2769 = vpow.pop %v2768
        %v2770 = vmul.f32 %v2727, 1.442695
        %v2771 = vpow.pop %v2770
        %v2772 = vmul.f32 %v2728, 1.442695
        %v2773 = vpow.pop %v2772
        %v2774 = vmul.f32 %v2729, 1.442695
        %v2775 = vpow.pop %v2774
        %v2776 = vmul.f32 %v2730, 1.442695
        %v2777 = vpow.pop %v2776
        %v2778 = vmul.f32 %v2731, 1.442695
        %v2779 = vpow.pop %v2778
        %v2780 = vmul.f32 %v2732, 1.442695
        %v2781 = vpow.pop %v2780
        %v2782 = vmul.f32 %v2733, 1.442695
        %v2783 = vpow.pop %v2782
        %v2784 = vmul.f32 %v2734, 1.442695
        %v2785 = vpow.pop %v2784
        %v2786 = vmul.f32 %v2735, 1.442695
        %v2787 = vpow.pop %v2786
        %v2788 = vmul.f32 %v2736, 1.442695
        %v2789 = vpow.pop %v2788
        %v2790 = vmul.f32 %v2737, 1.442695
        %v2791 = vpow.pop %v2790
        %v2792 = vmul.f32 %v2738, 1.442695
        %v2793 = vpow.pop %v2792
        %v2794 = vmul.f32 %v2739, 1.442695
        %v2795 = vpow.pop %v2794
        %v2796 = vmul.f32 %v2740, 1.442695
        %v2797 = vpow.pop %v2796
        %v2798 = vmul.f32 %v2741, 1.442695
        %v2799 = vpow.pop %v2798
        %v2800 = vmul.f32 %v2742, 1.442695
        %v2801 = vpow.pop %v2800
        %v2802 = vmul.f32 %v2743, 1.442695
        %v2803 = vpow.pop %v2802
        %v2804 = vmul.f32 %v2744, 1.442695
        %v2805 = vpow.pop %v2804
        %v2806 = vmul.f32 %v2745, 1.442695
        %v2807 = vpow.pop %v2806
        %v2808 = vmul.f32 %v2746, 1.442695
        %v2809 = vpow.pop %v2808
        %v2810 = vmul.f32 %v2747, 1.442695
        %v2811 = vpow.pop %v2810
        %v2812 = vsel %vm2618, %v2749, 0.0
        %v2813 = vsel %vm2619, %v2751, 0.0
        %v2814 = vsel %vm2618, %v2753, 0.0
        %v2815 = vsel %vm2619, %v2755, 0.0
        %v2816 = vsel %vm2618, %v2757, 0.0
        %v2817 = vsel %vm2619, %v2759, 0.0
        %v2818 = vsel %vm2618, %v2761, 0.0
        %v2819 = vsel %vm2619, %v2763, 0.0
        %v2820 = vsel %vm2618, %v2765, 0.0
        %v2821 = vsel %vm2619, %v2767, 0.0
        %v2822 = vsel %vm2618, %v2769, 0.0
        %v2823 = vsel %vm2619, %v2771, 0.0
        %v2824 = vsel %vm2618, %v2773, 0.0
        %v2825 = vsel %vm2619, %v2775, 0.0
        %v2826 = vsel %vm2618, %v2777, 0.0
        %v2827 = vsel %vm2619, %v2779, 0.0
        %v2828 = vsel %vm2618, %v2781, 0.0
        %v2829 = vsel %vm2619, %v2783, 0.0
        %v2830 = vsel %vm2618, %v2785, 0.0
        %v2831 = vsel %vm2619, %v2787, 0.0
        %v2832 = vsel %vm2618, %v2789, 0.0
        %v2833 = vsel %vm2619, %v2791, 0.0
        %v2834 = vsel %vm2618, %v2793, 0.0
        %v2835 = vsel %vm2619, %v2795, 0.0
        %v2836 = vsel %vm2618, %v2797, 0.0
        %v2837 = vsel %vm2619, %v2799, 0.0
        %v2838 = vsel %vm2618, %v2801, 0.0
        %v2839 = vsel %vm2619, %v2803, 0.0
        %v2840 = vsel %vm2618, %v2805, 0.0
        %v2841 = vsel %vm2619, %v2807, 0.0
        %v2842 = vsel %vm2618, %v2809, 0.0
        %v2843 = vsel %vm2619, %v2811, 0.0
        %v2844 = vadd.f32 %v2812, %v2813
        %2845 = vadd.xlane.f32.xlu0 %v2844
        %v2846 = vpop.xlane.xlu0 %2845
        %v2847 = vadd.f32 %v2814, %v2815
        %2848 = vadd.xlane.f32.xlu0 %v2847
        %v2849 = vpop.xlane.xlu0 %2848
        %v2850 = vadd.f32 %v2816, %v2817
        %2851 = vadd.xlane.f32.xlu0 %v2850
        %v2852 = vpop.xlane.xlu0 %2851
        %v2853 = vadd.f32 %v2818, %v2819
        %2854 = vadd.xlane.f32.xlu0 %v2853
        %v2855 = vpop.xlane.xlu0 %2854
        %v2856 = vadd.f32 %v2820, %v2821
        %2857 = vadd.xlane.f32.xlu0 %v2856
        %v2858 = vpop.xlane.xlu0 %2857
        %v2859 = vadd.f32 %v2822, %v2823
        %2860 = vadd.xlane.f32.xlu0 %v2859
        %v2861 = vpop.xlane.xlu0 %2860
        %v2862 = vadd.f32 %v2824, %v2825
        %2863 = vadd.xlane.f32.xlu0 %v2862
        %v2864 = vpop.xlane.xlu0 %2863
        %v2865 = vadd.f32 %v2826, %v2827
        %2866 = vadd.xlane.f32.xlu0 %v2865
        %v2867 = vpop.xlane.xlu0 %2866
        %v2868 = vadd.f32 %v2828, %v2829
        %2869 = vadd.xlane.f32.xlu0 %v2868
        %v2870 = vpop.xlane.xlu0 %2869
        %v2871 = vadd.f32 %v2830, %v2831
        %2872 = vadd.xlane.f32.xlu0 %v2871
        %v2873 = vpop.xlane.xlu0 %2872
        %v2874 = vadd.f32 %v2832, %v2833
        %2875 = vadd.xlane.f32.xlu0 %v2874
        %v2876 = vpop.xlane.xlu0 %2875
        %v2877 = vadd.f32 %v2834, %v2835
        %2878 = vadd.xlane.f32.xlu0 %v2877
        %v2879 = vpop.xlane.xlu0 %2878
        %v2880 = vadd.f32 %v2836, %v2837
        %2881 = vadd.xlane.f32.xlu0 %v2880
        %v2882 = vpop.xlane.xlu0 %2881
        %v2883 = vadd.f32 %v2838, %v2839
        %2884 = vadd.xlane.f32.xlu0 %v2883
        %v2885 = vpop.xlane.xlu0 %2884
        %v2886 = vadd.f32 %v2840, %v2841
        %2887 = vadd.xlane.f32.xlu0 %v2886
        %v2888 = vpop.xlane.xlu0 %2887
        %v2889 = vadd.f32 %v2842, %v2843
        %2890 = vadd.xlane.f32.xlu0 %v2889
        %v2891 = vpop.xlane.xlu0 %2890
        %v2892 = vmax.f32 %v2846, 1e-30
        %v2893 = vmax.f32 %v2849, 1e-30
        %v2894 = vmax.f32 %v2852, 1e-30
        %v2895 = vmax.f32 %v2855, 1e-30
        %v2896 = vmax.f32 %v2858, 1e-30
        %v2897 = vmax.f32 %v2861, 1e-30
        %v2898 = vmax.f32 %v2864, 1e-30
        %v2899 = vmax.f32 %v2867, 1e-30
        %v2900 = vmax.f32 %v2870, 1e-30
        %v2901 = vmax.f32 %v2873, 1e-30
        %v2902 = vmax.f32 %v2876, 1e-30
        %v2903 = vmax.f32 %v2879, 1e-30
        %v2904 = vmax.f32 %v2882, 1e-30
        %v2905 = vmax.f32 %v2885, 1e-30
        %v2906 = vmax.f32 %v2888, 1e-30
        %v2907 = vmax.f32 %v2891, 1e-30
        %v2908 = vrcp.pop %v2892
        %v2909 = vrcp.pop %v2893
        %v2910 = vrcp.pop %v2894
        %v2911 = vrcp.pop %v2895
        %v2912 = vrcp.pop %v2896
        %v2913 = vrcp.pop %v2897
        %v2914 = vrcp.pop %v2898
        %v2915 = vrcp.pop %v2899
        %v2916 = vrcp.pop %v2900
        %v2917 = vrcp.pop %v2901
        %v2918 = vrcp.pop %v2902
        %v2919 = vrcp.pop %v2903
        %v2920 = vrcp.pop %v2904
        %v2921 = vrcp.pop %v2905
        %v2922 = vrcp.pop %v2906
        %v2923 = vrcp.pop %v2907
        %v2924 = vmul.f32 %v2812, %v2908
        %v2925 = vmul.f32 %v2813, %v2908
        %v2926 = vmul.f32 %v2814, %v2909
        %v2927 = vmul.f32 %v2815, %v2909
        %v2928 = vmul.f32 %v2816, %v2910
        %v2929 = vmul.f32 %v2817, %v2910
        %v2930 = vmul.f32 %v2818, %v2911
        %v2931 = vmul.f32 %v2819, %v2911
        %v2932 = vmul.f32 %v2820, %v2912
        %v2933 = vmul.f32 %v2821, %v2912
        %v2934 = vmul.f32 %v2822, %v2913
        %v2935 = vmul.f32 %v2823, %v2913
        %v2936 = vmul.f32 %v2824, %v2914
        %v2937 = vmul.f32 %v2825, %v2914
        %v2938 = vmul.f32 %v2826, %v2915
        %v2939 = vmul.f32 %v2827, %v2915
        %v2940 = vmul.f32 %v2828, %v2916
        %v2941 = vmul.f32 %v2829, %v2916
        %v2942 = vmul.f32 %v2830, %v2917
        %v2943 = vmul.f32 %v2831, %v2917
        %v2944 = vmul.f32 %v2832, %v2918
        %v2945 = vmul.f32 %v2833, %v2918
        %v2946 = vmul.f32 %v2834, %v2919
        %v2947 = vmul.f32 %v2835, %v2919
        %v2948 = vmul.f32 %v2836, %v2920
        %v2949 = vmul.f32 %v2837, %v2920
        %v2950 = vmul.f32 %v2838, %v2921
        %v2951 = vmul.f32 %v2839, %v2921
        %v2952 = vmul.f32 %v2840, %v2922
        %v2953 = vmul.f32 %v2841, %v2922
        %v2954 = vmul.f32 %v2842, %v2923
        %v2955 = vmul.f32 %v2843, %v2923
        %v2956 = vsel %vm2618, %v2924, %v2574
        %v2957 = vsel %vm2619, %v2925, %v2575
        %v2958 = vsel %vm2618, %v2926, %v2576
        %v2959 = vsel %vm2619, %v2927, %v2577
        %v2960 = vsel %vm2618, %v2928, %v2578
        %v2961 = vsel %vm2619, %v2929, %v2579
        %v2962 = vsel %vm2618, %v2930, %v2580
        %v2963 = vsel %vm2619, %v2931, %v2581
        %v2964 = vsel %vm2618, %v2932, %v2582
        %v2965 = vsel %vm2619, %v2933, %v2583
        %v2966 = vsel %vm2618, %v2934, %v2584
        %v2967 = vsel %vm2619, %v2935, %v2585
        %v2968 = vsel %vm2618, %v2936, %v2586
        %v2969 = vsel %vm2619, %v2937, %v2587
        %v2970 = vsel %vm2618, %v2938, %v2588
        %v2971 = vsel %vm2619, %v2939, %v2589
        %v2972 = vsel %vm2618, %v2940, %v2590
        %v2973 = vsel %vm2619, %v2941, %v2591
        %v2974 = vsel %vm2618, %v2942, %v2592
        %v2975 = vsel %vm2619, %v2943, %v2593
        %v2976 = vsel %vm2618, %v2944, %v2594
        %v2977 = vsel %vm2619, %v2945, %v2595
        %v2978 = vsel %vm2618, %v2946, %v2596
        %v2979 = vsel %vm2619, %v2947, %v2597
        %v2980 = vsel %vm2618, %v2948, %v2598
        %v2981 = vsel %vm2619, %v2949, %v2599
        %v2982 = vsel %vm2618, %v2950, %v2600
        %v2983 = vsel %vm2619, %v2951, %v2601
        %v2984 = vsel %vm2618, %v2952, %v2602
        %v2985 = vsel %vm2619, %v2953, %v2603
        %v2986 = vsel %vm2618, %v2954, %v2604
        %v2987 = vsel %vm2619, %v2955, %v2605
        %s2988 = sld [smem:[#allocation3 + $0x3]]
        %s2989 = sld [smem:[#allocation4 + $0x3]]
        %v2990 = vstv %s2988
        %vm2991 = vcmp.ge.s32.totalorder %v1840, %v2990
        %vm2992 = vcmp.ge.s32.totalorder %v1841, %v2990
        %v2993 = vstv %s2989
        %vm2994 = vcmp.lt.s32.totalorder %v1840, %v2993
        %vm2995 = vcmp.lt.s32.totalorder %v1841, %v2993
        %vm2996 = vmand %vm2991, %vm2994
        %vm2997 = vmand %vm2992, %vm2995
        %v2998 = vsel %vm2996, 1, 0
        %v2999 = vsel %vm2997, 1, 0
        %vm3000 = vcmp.eq.s32.totalorder %v2998, 1
        %vm3001 = vcmp.eq.s32.totalorder %v2999, 1
        %v3002 = vsel %vm3000, %v2956, -inf
        %v3003 = vsel %vm3001, %v2957, -inf
        %v3004 = vsel %vm3000, %v2958, -inf
        %v3005 = vsel %vm3001, %v2959, -inf
        %v3006 = vsel %vm3000, %v2960, -inf
        %v3007 = vsel %vm3001, %v2961, -inf
        %v3008 = vsel %vm3000, %v2962, -inf
        %v3009 = vsel %vm3001, %v2963, -inf
        %v3010 = vsel %vm3000, %v2964, -inf
        %v3011 = vsel %vm3001, %v2965, -inf
        %v3012 = vsel %vm3000, %v2966, -inf
        %v3013 = vsel %vm3001, %v2967, -inf
        %v3014 = vsel %vm3000, %v2968, -inf
        %v3015 = vsel %vm3001, %v2969, -inf
        %v3016 = vsel %vm3000, %v2970, -inf
        %v3017 = vsel %vm3001, %v2971, -inf
        %v3018 = vsel %vm3000, %v2972, -inf
        %v3019 = vsel %vm3001, %v2973, -inf
        %v3020 = vsel %vm3000, %v2974, -inf
        %v3021 = vsel %vm3001, %v2975, -inf
        %v3022 = vsel %vm3000, %v2976, -inf
        %v3023 = vsel %vm3001, %v2977, -inf
        %v3024 = vsel %vm3000, %v2978, -inf
        %v3025 = vsel %vm3001, %v2979, -inf
        %v3026 = vsel %vm3000, %v2980, -inf
        %v3027 = vsel %vm3001, %v2981, -inf
        %v3028 = vsel %vm3000, %v2982, -inf
        %v3029 = vsel %vm3001, %v2983, -inf
        %v3030 = vsel %vm3000, %v2984, -inf
        %v3031 = vsel %vm3001, %v2985, -inf
        %v3032 = vsel %vm3000, %v2986, -inf
        %v3033 = vsel %vm3001, %v2987, -inf
        %v3034 = vmax.f32 %v3002, %v3003
        %3035 = vmax.xlane.f32.xlu0 %v3034
        %v3036 = vpop.xlane.xlu0 %3035
        %v3037 = vmax.f32 %v3004, %v3005
        %3038 = vmax.xlane.f32.xlu0 %v3037
        %v3039 = vpop.xlane.xlu0 %3038
        %v3040 = vmax.f32 %v3006, %v3007
        %3041 = vmax.xlane.f32.xlu0 %v3040
        %v3042 = vpop.xlane.xlu0 %3041
        %v3043 = vmax.f32 %v3008, %v3009
        %3044 = vmax.xlane.f32.xlu0 %v3043
        %v3045 = vpop.xlane.xlu0 %3044
        %v3046 = vmax.f32 %v3010, %v3011
        %3047 = vmax.xlane.f32.xlu0 %v3046
        %v3048 = vpop.xlane.xlu0 %3047
        %v3049 = vmax.f32 %v3012, %v3013
        %3050 = vmax.xlane.f32.xlu0 %v3049
        %v3051 = vpop.xlane.xlu0 %3050
        %v3052 = vmax.f32 %v3014, %v3015
        %3053 = vmax.xlane.f32.xlu0 %v3052
        %v3054 = vpop.xlane.xlu0 %3053
        %v3055 = vmax.f32 %v3016, %v3017
        %3056 = vmax.xlane.f32.xlu0 %v3055
        %v3057 = vpop.xlane.xlu0 %3056
        %v3058 = vmax.f32 %v3018, %v3019
        %3059 = vmax.xlane.f32.xlu0 %v3058
        %v3060 = vpop.xlane.xlu0 %3059
        %v3061 = vmax.f32 %v3020, %v3021
        %3062 = vmax.xlane.f32.xlu0 %v3061
        %v3063 = vpop.xlane.xlu0 %3062
        %v3064 = vmax.f32 %v3022, %v3023
        %3065 = vmax.xlane.f32.xlu0 %v3064
        %v3066 = vpop.xlane.xlu0 %3065
        %v3067 = vmax.f32 %v3024, %v3025
        %3068 = vmax.xlane.f32.xlu0 %v3067
        %v3069 = vpop.xlane.xlu0 %3068
        %v3070 = vmax.f32 %v3026, %v3027
        %3071 = vmax.xlane.f32.xlu0 %v3070
        %v3072 = vpop.xlane.xlu0 %3071
        %v3073 = vmax.f32 %v3028, %v3029
        %3074 = vmax.xlane.f32.xlu0 %v3073
        %v3075 = vpop.xlane.xlu0 %3074
        %v3076 = vmax.f32 %v3030, %v3031
        %3077 = vmax.xlane.f32.xlu0 %v3076
        %v3078 = vpop.xlane.xlu0 %3077
        %v3079 = vmax.f32 %v3032, %v3033
        %3080 = vmax.xlane.f32.xlu0 %v3079
        %v3081 = vpop.xlane.xlu0 %3080
        %v3082 = vmax.f32 %v3036, -1e+30
        %v3083 = vmax.f32 %v3039, -1e+30
        %v3084 = vmax.f32 %v3042, -1e+30
        %v3085 = vmax.f32 %v3045, -1e+30
        %v3086 = vmax.f32 %v3048, -1e+30
        %v3087 = vmax.f32 %v3051, -1e+30
        %v3088 = vmax.f32 %v3054, -1e+30
        %v3089 = vmax.f32 %v3057, -1e+30
        %v3090 = vmax.f32 %v3060, -1e+30
        %v3091 = vmax.f32 %v3063, -1e+30
        %v3092 = vmax.f32 %v3066, -1e+30
        %v3093 = vmax.f32 %v3069, -1e+30
        %v3094 = vmax.f32 %v3072, -1e+30
        %v3095 = vmax.f32 %v3075, -1e+30
        %v3096 = vmax.f32 %v3078, -1e+30
        %v3097 = vmax.f32 %v3081, -1e+30
        %v3098 = vsub.f32 %v2956, %v3082
        %v3099 = vsub.f32 %v2957, %v3082
        %v3100 = vsub.f32 %v2958, %v3083
        %v3101 = vsub.f32 %v2959, %v3083
        %v3102 = vsub.f32 %v2960, %v3084
        %v3103 = vsub.f32 %v2961, %v3084
        %v3104 = vsub.f32 %v2962, %v3085
        %v3105 = vsub.f32 %v2963, %v3085
        %v3106 = vsub.f32 %v2964, %v3086
        %v3107 = vsub.f32 %v2965, %v3086
        %v3108 = vsub.f32 %v2966, %v3087
        %v3109 = vsub.f32 %v2967, %v3087
        %v3110 = vsub.f32 %v2968, %v3088
        %v3111 = vsub.f32 %v2969, %v3088
        %v3112 = vsub.f32 %v2970, %v3089
        %v3113 = vsub.f32 %v2971, %v3089
        %v3114 = vsub.f32 %v2972, %v3090
        %v3115 = vsub.f32 %v2973, %v3090
        %v3116 = vsub.f32 %v2974, %v3091
        %v3117 = vsub.f32 %v2975, %v3091
        %v3118 = vsub.f32 %v2976, %v3092
        %v3119 = vsub.f32 %v2977, %v3092
        %v3120 = vsub.f32 %v2978, %v3093
        %v3121 = vsub.f32 %v2979, %v3093
        %v3122 = vsub.f32 %v2980, %v3094
        %v3123 = vsub.f32 %v2981, %v3094
        %v3124 = vsub.f32 %v2982, %v3095
        %v3125 = vsub.f32 %v2983, %v3095
        %v3126 = vsub.f32 %v2984, %v3096
        %v3127 = vsub.f32 %v2985, %v3096
        %v3128 = vsub.f32 %v2986, %v3097
        %v3129 = vsub.f32 %v2987, %v3097
        %v3130 = vmul.f32 %v3098, 1.442695
        %v3131 = vpow.pop %v3130
        %v3132 = vmul.f32 %v3099, 1.442695
        %v3133 = vpow.pop %v3132
        %v3134 = vmul.f32 %v3100, 1.442695
        %v3135 = vpow.pop %v3134
        %v3136 = vmul.f32 %v3101, 1.442695
        %v3137 = vpow.pop %v3136
        %v3138 = vmul.f32 %v3102, 1.442695
        %v3139 = vpow.pop %v3138
        %v3140 = vmul.f32 %v3103, 1.442695
        %v3141 = vpow.pop %v3140
        %v3142 = vmul.f32 %v3104, 1.442695
        %v3143 = vpow.pop %v3142
        %v3144 = vmul.f32 %v3105, 1.442695
        %v3145 = vpow.pop %v3144
        %v3146 = vmul.f32 %v3106, 1.442695
        %v3147 = vpow.pop %v3146
        %v3148 = vmul.f32 %v3107, 1.442695
        %v3149 = vpow.pop %v3148
        %v3150 = vmul.f32 %v3108, 1.442695
        %v3151 = vpow.pop %v3150
        %v3152 = vmul.f32 %v3109, 1.442695
        %v3153 = vpow.pop %v3152
        %v3154 = vmul.f32 %v3110, 1.442695
        %v3155 = vpow.pop %v3154
        %v3156 = vmul.f32 %v3111, 1.442695
        %v3157 = vpow.pop %v3156
        %v3158 = vmul.f32 %v3112, 1.442695
        %v3159 = vpow.pop %v3158
        %v3160 = vmul.f32 %v3113, 1.442695
        %v3161 = vpow.pop %v3160
        %v3162 = vmul.f32 %v3114, 1.442695
        %v3163 = vpow.pop %v3162
        %v3164 = vmul.f32 %v3115, 1.442695
        %v3165 = vpow.pop %v3164
        %v3166 = vmul.f32 %v3116, 1.442695
        %v3167 = vpow.pop %v3166
        %v3168 = vmul.f32 %v3117, 1.442695
        %v3169 = vpow.pop %v3168
        %v3170 = vmul.f32 %v3118, 1.442695
        %v3171 = vpow.pop %v3170
        %v3172 = vmul.f32 %v3119, 1.442695
        %v3173 = vpow.pop %v3172
        %v3174 = vmul.f32 %v3120, 1.442695
        %v3175 = vpow.pop %v3174
        %v3176 = vmul.f32 %v3121, 1.442695
        %v3177 = vpow.pop %v3176
        %v3178 = vmul.f32 %v3122, 1.442695
        %v3179 = vpow.pop %v3178
        %v3180 = vmul.f32 %v3123, 1.442695
        %v3181 = vpow.pop %v3180
        %v3182 = vmul.f32 %v3124, 1.442695
        %v3183 = vpow.pop %v3182
        %v3184 = vmul.f32 %v3125, 1.442695
        %v3185 = vpow.pop %v3184
        %v3186 = vmul.f32 %v3126, 1.442695
        %v3187 = vpow.pop %v3186
        %v3188 = vmul.f32 %v3127, 1.442695
        %v3189 = vpow.pop %v3188
        %v3190 = vmul.f32 %v3128, 1.442695
        %v3191 = vpow.pop %v3190
        %v3192 = vmul.f32 %v3129, 1.442695
        %v3193 = vpow.pop %v3192
        %v3194 = vsel %vm3000, %v3131, 0.0
        %v3195 = vsel %vm3001, %v3133, 0.0
        %v3196 = vsel %vm3000, %v3135, 0.0
        %v3197 = vsel %vm3001, %v3137, 0.0
        %v3198 = vsel %vm3000, %v3139, 0.0
        %v3199 = vsel %vm3001, %v3141, 0.0
        %v3200 = vsel %vm3000, %v3143, 0.0
        %v3201 = vsel %vm3001, %v3145, 0.0
        %v3202 = vsel %vm3000, %v3147, 0.0
        %v3203 = vsel %vm3001, %v3149, 0.0
        %v3204 = vsel %vm3000, %v3151, 0.0
        %v3205 = vsel %vm3001, %v3153, 0.0
        %v3206 = vsel %vm3000, %v3155, 0.0
        %v3207 = vsel %vm3001, %v3157, 0.0
        %v3208 = vsel %vm3000, %v3159, 0.0
        %v3209 = vsel %vm3001, %v3161, 0.0
        %v3210 = vsel %vm3000, %v3163, 0.0
        %v3211 = vsel %vm3001, %v3165, 0.0
        %v3212 = vsel %vm3000, %v3167, 0.0
        %v3213 = vsel %vm3001, %v3169, 0.0
        %v3214 = vsel %vm3000, %v3171, 0.0
        %v3215 = vsel %vm3001, %v3173, 0.0
        %v3216 = vsel %vm3000, %v3175, 0.0
        %v3217 = vsel %vm3001, %v3177, 0.0
        %v3218 = vsel %vm3000, %v3179, 0.0
        %v3219 = vsel %vm3001, %v3181, 0.0
        %v3220 = vsel %vm3000, %v3183, 0.0
        %v3221 = vsel %vm3001, %v3185, 0.0
        %v3222 = vsel %vm3000, %v3187, 0.0
        %v3223 = vsel %vm3001, %v3189, 0.0
        %v3224 = vsel %vm3000, %v3191, 0.0
        %v3225 = vsel %vm3001, %v3193, 0.0
        %v3226 = vadd.f32 %v3194, %v3195
        %3227 = vadd.xlane.f32.xlu0 %v3226
        %v3228 = vpop.xlane.xlu0 %3227
        %v3229 = vadd.f32 %v3196, %v3197
        %3230 = vadd.xlane.f32.xlu0 %v3229
        %v3231 = vpop.xlane.xlu0 %3230
        %v3232 = vadd.f32 %v3198, %v3199
        %3233 = vadd.xlane.f32.xlu0 %v3232
        %v3234 = vpop.xlane.xlu0 %3233
        %v3235 = vadd.f32 %v3200, %v3201
        %3236 = vadd.xlane.f32.xlu0 %v3235
        %v3237 = vpop.xlane.xlu0 %3236
        %v3238 = vadd.f32 %v3202, %v3203
        %3239 = vadd.xlane.f32.xlu0 %v3238
        %v3240 = vpop.xlane.xlu0 %3239
        %v3241 = vadd.f32 %v3204, %v3205
        %3242 = vadd.xlane.f32.xlu0 %v3241
        %v3243 = vpop.xlane.xlu0 %3242
        %v3244 = vadd.f32 %v3206, %v3207
        %3245 = vadd.xlane.f32.xlu0 %v3244
        %v3246 = vpop.xlane.xlu0 %3245
        %v3247 = vadd.f32 %v3208, %v3209
        %3248 = vadd.xlane.f32.xlu0 %v3247
        %v3249 = vpop.xlane.xlu0 %3248
        %v3250 = vadd.f32 %v3210, %v3211
        %3251 = vadd.xlane.f32.xlu0 %v3250
        %v3252 = vpop.xlane.xlu0 %3251
        %v3253 = vadd.f32 %v3212, %v3213
        %3254 = vadd.xlane.f32.xlu0 %v3253
        %v3255 = vpop.xlane.xlu0 %3254
        %v3256 = vadd.f32 %v3214, %v3215
        %3257 = vadd.xlane.f32.xlu0 %v3256
        %v3258 = vpop.xlane.xlu0 %3257
        %v3259 = vadd.f32 %v3216, %v3217
        %3260 = vadd.xlane.f32.xlu0 %v3259
        %v3261 = vpop.xlane.xlu0 %3260
        %v3262 = vadd.f32 %v3218, %v3219
        %3263 = vadd.xlane.f32.xlu0 %v3262
        %v3264 = vpop.xlane.xlu0 %3263
        %v3265 = vadd.f32 %v3220, %v3221
        %3266 = vadd.xlane.f32.xlu0 %v3265
        %v3267 = vpop.xlane.xlu0 %3266
        %v3268 = vadd.f32 %v3222, %v3223
        %3269 = vadd.xlane.f32.xlu0 %v3268
        %v3270 = vpop.xlane.xlu0 %3269
        %v3271 = vadd.f32 %v3224, %v3225
        %3272 = vadd.xlane.f32.xlu0 %v3271
        %v3273 = vpop.xlane.xlu0 %3272
        %v3274 = vmax.f32 %v3228, 1e-30
        %v3275 = vmax.f32 %v3231, 1e-30
        %v3276 = vmax.f32 %v3234, 1e-30
        %v3277 = vmax.f32 %v3237, 1e-30
        %v3278 = vmax.f32 %v3240, 1e-30
        %v3279 = vmax.f32 %v3243, 1e-30
        %v3280 = vmax.f32 %v3246, 1e-30
        %v3281 = vmax.f32 %v3249, 1e-30
        %v3282 = vmax.f32 %v3252, 1e-30
        %v3283 = vmax.f32 %v3255, 1e-30
        %v3284 = vmax.f32 %v3258, 1e-30
        %v3285 = vmax.f32 %v3261, 1e-30
        %v3286 = vmax.f32 %v3264, 1e-30
        %v3287 = vmax.f32 %v3267, 1e-30
        %v3288 = vmax.f32 %v3270, 1e-30
        %v3289 = vmax.f32 %v3273, 1e-30
        %v3290 = vrcp.pop %v3274
        %v3291 = vrcp.pop %v3275
        %v3292 = vrcp.pop %v3276
        %v3293 = vrcp.pop %v3277
        %v3294 = vrcp.pop %v3278
        %v3295 = vrcp.pop %v3279
        %v3296 = vrcp.pop %v3280
        %v3297 = vrcp.pop %v3281
        %v3298 = vrcp.pop %v3282
        %v3299 = vrcp.pop %v3283
        %v3300 = vrcp.pop %v3284
        %v3301 = vrcp.pop %v3285
        %v3302 = vrcp.pop %v3286
        %v3303 = vrcp.pop %v3287
        %v3304 = vrcp.pop %v3288
        %v3305 = vrcp.pop %v3289
        %v3306 = vmul.f32 %v3194, %v3290
        %v3307 = vmul.f32 %v3195, %v3290
        %v3308 = vmul.f32 %v3196, %v3291
        %v3309 = vmul.f32 %v3197, %v3291
        %v3310 = vmul.f32 %v3198, %v3292
        %v3311 = vmul.f32 %v3199, %v3292
        %v3312 = vmul.f32 %v3200, %v3293
        %v3313 = vmul.f32 %v3201, %v3293
        %v3314 = vmul.f32 %v3202, %v3294
        %v3315 = vmul.f32 %v3203, %v3294
        %v3316 = vmul.f32 %v3204, %v3295
        %v3317 = vmul.f32 %v3205, %v3295
        %v3318 = vmul.f32 %v3206, %v3296
        %v3319 = vmul.f32 %v3207, %v3296
        %v3320 = vmul.f32 %v3208, %v3297
        %v3321 = vmul.f32 %v3209, %v3297
        %v3322 = vmul.f32 %v3210, %v3298
        %v3323 = vmul.f32 %v3211, %v3298
        %v3324 = vmul.f32 %v3212, %v3299
        %v3325 = vmul.f32 %v3213, %v3299
        %v3326 = vmul.f32 %v3214, %v3300
        %v3327 = vmul.f32 %v3215, %v3300
        %v3328 = vmul.f32 %v3216, %v3301
        %v3329 = vmul.f32 %v3217, %v3301
        %v3330 = vmul.f32 %v3218, %v3302
        %v3331 = vmul.f32 %v3219, %v3302
        %v3332 = vmul.f32 %v3220, %v3303
        %v3333 = vmul.f32 %v3221, %v3303
        %v3334 = vmul.f32 %v3222, %v3304
        %v3335 = vmul.f32 %v3223, %v3304
        %v3336 = vmul.f32 %v3224, %v3305
        %v3337 = vmul.f32 %v3225, %v3305
        %v3338 = vsel %vm3000, %v3306, %v2956
        %v3339 = vsel %vm3001, %v3307, %v2957
        %v3340 = vsel %vm3000, %v3308, %v2958
        %v3341 = vsel %vm3001, %v3309, %v2959
        %v3342 = vsel %vm3000, %v3310, %v2960
        %v3343 = vsel %vm3001, %v3311, %v2961
        %v3344 = vsel %vm3000, %v3312, %v2962
        %v3345 = vsel %vm3001, %v3313, %v2963
        %v3346 = vsel %vm3000, %v3314, %v2964
        %v3347 = vsel %vm3001, %v3315, %v2965
        %v3348 = vsel %vm3000, %v3316, %v2966
        %v3349 = vsel %vm3001, %v3317, %v2967
        %v3350 = vsel %vm3000, %v3318, %v2968
        %v3351 = vsel %vm3001, %v3319, %v2969
        %v3352 = vsel %vm3000, %v3320, %v2970
        %v3353 = vsel %vm3001, %v3321, %v2971
        %v3354 = vsel %vm3000, %v3322, %v2972
        %v3355 = vsel %vm3001, %v3323, %v2973
        %v3356 = vsel %vm3000, %v3324, %v2974
        %v3357 = vsel %vm3001, %v3325, %v2975
        %v3358 = vsel %vm3000, %v3326, %v2976
        %v3359 = vsel %vm3001, %v3327, %v2977
        %v3360 = vsel %vm3000, %v3328, %v2978
        %v3361 = vsel %vm3001, %v3329, %v2979
        %v3362 = vsel %vm3000, %v3330, %v2980
        %v3363 = vsel %vm3001, %v3331, %v2981
        %v3364 = vsel %vm3000, %v3332, %v2982
        %v3365 = vsel %vm3001, %v3333, %v2983
        %v3366 = vsel %vm3000, %v3334, %v2984
        %v3367 = vsel %vm3001, %v3335, %v2985
        %v3368 = vsel %vm3000, %v3336, %v2986
        %v3369 = vsel %vm3001, %v3337, %v2987
        %3370 = vst [vmem:[%s558] sm:$0xff] %v3338
        %3371 = vst [vmem:[%s558 + $0x8] sm:$0xff] %v3339
        %3372 = vst [vmem:[%s558 + $0x10] sm:$0xff] %v3340
        %3373 = vst [vmem:[%s558 + $0x18] sm:$0xff] %v3341
        %3374 = vst [vmem:[%s558 + $0x20] sm:$0xff] %v3342
        %3375 = vst [vmem:[%s558 + $0x28] sm:$0xff] %v3343
        %3376 = vst [vmem:[%s558 + $0x30] sm:$0xff] %v3344
        %3377 = vst [vmem:[%s558 + $0x38] sm:$0xff] %v3345
        %3378 = vst [vmem:[%s558 + $0x40] sm:$0xff] %v3346
        %3379 = vst [vmem:[%s558 + $0x48] sm:$0xff] %v3347
        %3380 = vst [vmem:[%s558 + $0x50] sm:$0xff] %v3348
        %3381 = vst [vmem:[%s558 + $0x58] sm:$0xff] %v3349
        %3382 = vst [vmem:[%s558 + $0x60] sm:$0xff] %v3350
        %3383 = vst [vmem:[%s558 + $0x68] sm:$0xff] %v3351
        %3384 = vst [vmem:[%s558 + $0x70] sm:$0xff] %v3352
        %3385 = vst [vmem:[%s558 + $0x78] sm:$0xff] %v3353
        %3386 = vst [vmem:[%s558 + $0x80] sm:$0xff] %v3354
        %3387 = vst [vmem:[%s558 + $0x88] sm:$0xff] %v3355
        %3388 = vst [vmem:[%s558 + $0x90] sm:$0xff] %v3356
        %3389 = vst [vmem:[%s558 + $0x98] sm:$0xff] %v3357
        %3390 = vst [vmem:[%s558 + $0xa0] sm:$0xff] %v3358
        %3391 = vst [vmem:[%s558 + $0xa8] sm:$0xff] %v3359
        %3392 = vst [vmem:[%s558 + $0xb0] sm:$0xff] %v3360
        %3393 = vst [vmem:[%s558 + $0xb8] sm:$0xff] %v3361
        %3394 = vst [vmem:[%s558 + $0xc0] sm:$0xff] %v3362
        %3395 = vst [vmem:[%s558 + $0xc8] sm:$0xff] %v3363
        %3396 = vst [vmem:[%s558 + $0xd0] sm:$0xff] %v3364
        %3397 = vst [vmem:[%s558 + $0xd8] sm:$0xff] %v3365
        %3398 = vst [vmem:[%s558 + $0xe0] sm:$0xff] %v3366
        %3399 = vst [vmem:[%s558 + $0xe8] sm:$0xff] %v3367
        %3400 = vst [vmem:[%s558 + $0xf0] sm:$0xff] %v3368
        %3401 = vst [vmem:[%s558 + $0xf8] sm:$0xff] %v3369
        %s3402 = sand.u32 %s331, 1
        %s3403 = scalar_lea.sflag [#allocation7], %s3402
        %s3404 = sand.u32 %s331, 1
        %s3405 = smul.addr %s3404, 256
        %s3406 = scalar_lea.vmem [#allocation17], %s3405
        // Predicated region
        $region101: #{_forward_padded.1} parent=71 // pred_check
          %p3407 = pneg %p341
        $region102: #{_forward_padded.1} parent=71 // pred_check_branch
          %3409 = sbr.rel (%p3407) target = $region104
        $region103: #{_forward_padded.1} parent=71 // pred_region
          %s3410 = smul.u32 16, %s45
          %s3412 = ssub.s32 4096, 4096
          %3413 = vsyncadd %s3403, %s3412
          %s3414 = smul.addr %s3410, 2
          %s3415 = smul.addr %s3414, 128
          %s3416 = scalar_lea.hbm %s15, %s3415
          %s3417 = sshll.u32 %s3406, 4
          %s3418 = int_to_ptr.vmem [resolvable:$true] %s3417
          %3423 = dma.vmem_to_hbm [thread:$0]  %s3418, 4096, %s3416, %s3403, 256, 256, 16
        $region104: #{_forward_padded.1} parent=71 // pred_fallthru
          _
      $region72: #{_forward_padded.1} parent=5 // pred_fallthru
        _
      %p3424 = scmp.le.s32.totalorder 2, %s40
      // Predicated region
      $region105: #{_forward_padded.1} parent=5 // pred_check
        %p3425 = pneg %p3424
      $region106: #{_forward_padded.1} parent=5 // pred_check_branch
        %3427 = sbr.rel (%p3425) target = $region108
      $region107: #{_forward_padded.1} parent=5 // pred_region
        %s3428 = ssub.s32 %s40, 2
        // Predicated region
        $region109: #{_forward_padded.1} parent=107 // pred_check
          %p3429 = pneg %p347
        $region110: #{_forward_padded.1} parent=107 // pred_check_branch
          %3431 = sbr.rel (%p3429) target = $region112
        $region111: #{_forward_padded.1} parent=107 // pred_region
          %s3432 = sand.u32 %s332, 1
          %s3433 = scalar_lea.sflag [#allocation7], %s3432
          %s3434 = sand.u32 %s332, 1
          %s3435 = smul.addr %s3434, 256
          %s3436 = scalar_lea.vmem [#allocation17], %s3435
          %3437 = dma.done %s3433, 4096
        $region112: #{_forward_padded.1} parent=107 // pred_fallthru
          _
      $region108: #{_forward_padded.1} parent=5 // pred_fallthru
        _
    $region6: #{_forward_padded.1} parent=1 // loop_footer
      %s44 = sadd.s32 1, %s40
    $region7: #{_forward_padded.1} parent=1 // loop_footer_branch
      %39 = sbr.rel target = $region3
    $region8: #{_forward_padded.1} parent=1 // loop_exit
      _
    %3438 = vsyncpa [#allocation6], 1
    %s3439 = scalar_lea.sflag [#allocation6], 1
    %3440 = vsyncpa %s3439, 1
    %3441 = vsyncpa [#allocation9], 1
    %3442 = vsyncpa [#allocation12], 1
    %3443 = vsyncpa [#allocation15], 1
    %3444 = vsyncpa [#allocation7], 1
    %s3445 = scalar_lea.sflag [#allocation7], 1
    %3446 = vsyncpa %s3445, 1

</llo_original>
